<compile_context>
chip_gen: v7x
topology: tpu7x:2x2x1
jax: 0.10.0
libtpu: 0.0.40
codegen_flags: <defaults>
</compile_context>

<pallas_src>
import functools

import jax
import jax.numpy as jnp
from jax.experimental import pallas as pl
from jax.experimental.pallas import tpu as pltpu


# ---------------------------------------------------------------------------
# Kernel 1: stats-only pass (phase-decomposed transposed conv -> BN sums)
# ---------------------------------------------------------------------------
def _stats_kernel(x_ref, g_ref, st_ref):
    # x_ref : (1, 4*Cin, TPS)  lane-duplicated im2col patches
    # g_ref : (4*Cout, 4*Cin)  phase-decomposed ConvTranspose weights
    # st_ref: (1, 4*Cout, 2)   [..., 0] = sum(z), [..., 1] = sum(z*z)
    #                          (block resident across the pixel-tile axis)
    p = x_ref[0]
    z = jnp.dot(g_ref[...], p, preferred_element_type=jnp.float32)   # (4*Cout, TPS)
    s = jnp.sum(z, axis=1, keepdims=True)
    q = jnp.sum(z * z, axis=1, keepdims=True)
    partial = jnp.concatenate([s, q], axis=1)                        # (4*Cout, 2)

    @pl.when(pl.program_id(1) == 0)
    def _():
        st_ref[0] = partial

    @pl.when(pl.program_id(1) > 0)
    def _():
        st_ref[0] = st_ref[0] + partial


# ---------------------------------------------------------------------------
# Kernel 2: recompute conv, fused BN scale/shift + ReLU, de-interleaved store
# ---------------------------------------------------------------------------
def _convt_bn_relu_kernel(x_ref, g_ref, sc_ref, sh_ref, o_ref, *, cout, tr, ow):
    # x_ref : (1, 4*Cin, TPS)   TPS = TR*OW, lanes = (input row r, 2*j + dup)
    # g_ref : (4*Cout, 4*Cin)
    # sc_ref: (4*Cout, 1)       scale = gamma * rsqrt(var + eps)   (per phase row)
    # sh_ref: (4*Cout, 1)       shift = beta - mean * scale
    # o_ref : (1, Cout, TR, 2*OW)  -> free reshape to NCHW in the wrapper
    p = x_ref[0]
    z = jnp.dot(g_ref[...], p, preferred_element_type=jnp.float32)   # (4*Cout, TPS)
    y = jnp.maximum(z * sc_ref[...] + sh_ref[...], 0.0)              # f32 FMA + ReLU

    tps = y.shape[1]
    lane = jax.lax.broadcasted_iota(jnp.int32, (cout, tps), 1)
    even = (lane % 2) == 0                                           # lane parity == dc
    y00 = y[0:cout]            # (dr=0, dc=0)
    y01 = y[cout:2 * cout]     # (dr=0, dc=1)
    y10 = y[2 * cout:3 * cout]  # (dr=1, dc=0)
    y11 = y[3 * cout:4 * cout]  # (dr=1, dc=1)
    # Lane-parity select: patches are duplicated on even/odd lanes, so lane
    # r*OW + (2j+dc) already holds z(r, j) for either dc -> column interleave
    # is a pure select, no roll / reshape / transpose needed.
    row0 = jnp.where(even, y00, y01)   # dr=0 output rows, lanes = (r, ow)
    row1 = jnp.where(even, y10, y11)   # dr=1 output rows

    for r in range(tr):                # static unroll (tr kept small)
        o_ref[0, :, r, 0:ow] = row0[:, r * ow:(r + 1) * ow].astype(o_ref.dtype)
        o_ref[0, :, r, ow:2 * ow] = row1[:, r * ow:(r + 1) * ow].astype(o_ref.dtype)


# ---------------------------------------------------------------------------
# Wrapper-side helpers
# ---------------------------------------------------------------------------
def _phase_weight_matrix(weight):
    """(Cin, Cout, 3, 3) ConvTranspose2d weight -> (4*Cout, 4*Cin) phase matrix G.

    Row index = (dr*2 + dc)*Cout + co   with (dr, dc) = output sub-pixel phase.
    Col index = (di*2 + dj)*Cin + ci    with (di, dj) = input neighbour offset.
    y[n, co, 2i+dr, 2j+dc] = sum_{di,dj,ci} G[row, col] * x[n, ci, i+di, j+dj]
    (x zero-padded by one row/col at the bottom/right).
    """
    cin, cout, k, _ = weight.shape
    assert k == 3
    taps = {0: ((0, 1),), 1: ((0, 2), (1, 0))}
    g = jnp.zeros((4 * cout, 4 * cin), jnp.float32)
    for dr in (0, 1):
        for dc in (0, 1):
            r0 = (dr * 2 + dc) * cout
            for di, kh in taps[dr]:
                for dj, kw in taps[dc]:
                    c0 = (di * 2 + dj) * cin
                    g = g.at[r0:r0 + cout, c0:c0 + cin].set(weight[:, :, kh, kw].T)
    return g


def _pick_row_tile(h, w, cin, cout, n_batch, budget_bytes=8 * 1024 * 1024):
    """Largest layout-legal row tile TR (divides H) that fits the VMEM budget."""
    ow = 2 * w

    def block_bytes(tr):
        tps = tr * ow
        xb = 4 * cin * tps * 2           # bf16 patch block
        ob = cout * tr * 2 * ow * 4      # f32 output block
        return 2 * xb + 2 * ob           # double-buffered

    def legal(tr):
        if h % tr:
            return False
        if tr != h and (tr % 8 or (tr * ow) % 128):
            return False
        return True

    cands = [tr for tr in range(1, h + 1) if legal(tr) and block_bytes(tr) <= budget_bytes]
    if not cands:
        cands = [tr for tr in range(1, h + 1) if legal(tr)] or [h]
    small = [tr for tr in cands if tr <= 32] or cands
    if n_batch == 1:
        multi = [tr for tr in small if h // tr >= 2]   # keep both v7x cores busy
        if multi:
            small = multi
    return max(small)


def up_forward(x_nchw, weight, bias, gamma, beta, *,
               stride=2, padding=1, output_padding=1, eps=1e-5,
               matmul_dtype=jnp.bfloat16, row_tile=None):
    """Forward pass of Up (training-mode BatchNorm).  x_nchw: (N, Cin, H, W)."""
    assert (stride, padding, output_padding) == (2, 1, 1), \
        "phase decomposition is specialised to kernel=3, stride=2, pad=1, out_pad=1"
    N, Cin, H, W = x_nchw.shape
    Cin_w, Cout, K, _ = weight.shape
    assert Cin == Cin_w and K == 3
    del bias  # conv bias is exactly cancelled by training-mode BatchNorm
    HW = H * W
    OH, OW = 2 * H, 2 * W
    TR = row_tile if row_tile is not None else _pick_row_tile(H, W, Cin, Cout, N)
    assert H % TR == 0
    T = H // TR
    TPS = TR * OW                       # lanes per tile (2 lanes per input pixel)

    # One pad+gather+duplicate pass over the (small) input.  Channel-major
    # patches; every input pixel occupies an even/odd lane pair so the output
    # column interleave becomes a lane-parity select inside kernel 2.
    xp = jnp.pad(x_nchw, ((0, 0), (0, 0), (0, 1), (0, 1)))
    cols = jnp.concatenate(
        [xp[:, :, di:di + H, dj:dj + W] for di in (0, 1) for dj in (0, 1)],
        axis=1).reshape(N, 4 * Cin, HW, 1)
    x_spread = jnp.broadcast_to(cols, (N, 4 * Cin, HW, 2)).reshape(
        N, 4 * Cin, 2 * HW).astype(matmul_dtype)

    g = _phase_weight_matrix(weight).astype(matmul_dtype)

    xb = 4 * Cin * TPS * jnp.dtype(matmul_dtype).itemsize
    ob = Cout * TR * 2 * OW * 4
    vmem_limit = int(min(64 * 1024 * 1024, max(32 * 1024 * 1024, 4 * (2 * xb + 2 * ob))))

    grid = (N, T)
    x_spec = pl.BlockSpec((1, 4 * Cin, TPS), lambda n, t: (n, 0, t))
    g_spec = pl.BlockSpec((4 * Cout, 4 * Cin), lambda n, t: (0, 0))

    # ---- pass 1: BN statistics (no conv output materialised) ----------------
    stats = pl.pallas_call(
        _stats_kernel,
        out_shape=jax.ShapeDtypeStruct((N, 4 * Cout, 2), jnp.float32),
        grid=grid,
        in_specs=[x_spec, g_spec],
        out_specs=pl.BlockSpec((1, 4 * Cout, 2), lambda n, t: (n, 0, 0)),
        compiler_params=pltpu.CompilerParams(
            dimension_semantics=("parallel", "arbitrary"),
            vmem_limit_bytes=vmem_limit),
    )(x_spread, g)

    # Each input pixel is duplicated onto two lanes -> sums are exactly 2x.
    sum_c = stats[:, :, 0].sum(axis=0).reshape(4, Cout).sum(axis=0) * 0.5
    sq_c = stats[:, :, 1].sum(axis=0).reshape(4, Cout).sum(axis=0) * 0.5
    count = jnp.float32(N * OH * OW)
    mean = sum_c / count
    # TODO(synk): E[x^2]-E[x]^2 can cancel for large-mean activations (use
    # centered/Welford sums if that regime matters); running_mean/running_var
    # buffer updates (PyTorch training bookkeeping / eval-mode BN) not done.
    var = jnp.maximum(sq_c / count - mean * mean, 0.0)    # biased var
    scale = gamma.astype(jnp.float32) * jax.lax.rsqrt(var + eps)
    shift = beta.astype(jnp.float32) - mean * scale
    sc4 = jnp.tile(scale, 4).reshape(4 * Cout, 1)
    sh4 = jnp.tile(shift, 4).reshape(4 * Cout, 1)

    # ---- pass 2: recompute conv, fused BN+ReLU, de-interleaved store --------
    kernel2 = functools.partial(_convt_bn_relu_kernel, cout=Cout, tr=TR, ow=OW)
    y = pl.pallas_call(
        kernel2,
        out_shape=jax.ShapeDtypeStruct((N, Cout, H, 2 * OW), jnp.float32),
        grid=grid,
        in_specs=[x_spec, g_spec,
                  pl.BlockSpec((4 * Cout, 1), lambda n, t: (0, 0)),
                  pl.BlockSpec((4 * Cout, 1), lambda n, t: (0, 0))],
        out_specs=pl.BlockSpec((1, Cout, TR, 2 * OW), lambda n, t: (n, 0, t, 0)),
        compiler_params=pltpu.CompilerParams(
            dimension_semantics=("parallel", "parallel"),
            vmem_limit_bytes=vmem_limit),
    )(x_spread, g, sc4, sh4)

    # Free (row-major) reshape: (n, co, i, dr*OW + ow) -> (n, co, 2i+dr, ow).
    return y.reshape(N, Cout, OH, OW)


def up_reference(x_nchw, weight, bias, gamma, beta, *,
                 stride=2, padding=1, output_padding=1):
    """Pure-JAX reference for correctness checking."""
    Cin, Cout, K, _ = weight.shape
    w_oihw = jnp.transpose(weight, (1, 0, 2, 3))[:, :, ::-1, ::-1]
    lo = K - 1 - padding
    hi = K - 1 - padding + output_padding
    out = jax.lax.conv_general_dilated(
        x_nchw, w_oihw,
        window_strides=(1, 1),
        padding=[(lo, hi), (lo, hi)],
        lhs_dilation=(stride, stride),
        dimension_numbers=("NCHW", "OIHW", "NCHW"))
    out = out + bias[None, :, None, None]
    mean = out.mean(axis=(0, 2, 3), keepdims=True)
    var = ((out - mean) ** 2).mean(axis=(0, 2, 3), keepdims=True)
    yn = (out - mean) / jnp.sqrt(var + 1e-5)
    yn = yn * gamma[None, :, None, None] + beta[None, :, None, None]
    return jnp.maximum(yn, 0.0)


if __name__ == "__main__":
    # Small deterministic setup: in_channels=4, out_channels=8, 16x16 input.
    N, Cin, Cout, H, W, K = 2, 4, 8, 16, 16, 3
    key = jax.random.PRNGKey(0)
    kx, kw, kb = jax.random.split(key, 3)

    x = jax.random.normal(kx, (N, Cin, H, W), dtype=jnp.float32)
    # ConvTranspose2d weight has shape (in_channels, out_channels, kH, kW).
    weight = 0.1 * jax.random.normal(kw, (Cin, Cout, K, K), dtype=jnp.float32)
    bias = 0.1 * jax.random.normal(kb, (Cout,), dtype=jnp.float32)
    # BatchNorm2d default init: gamma=1, beta=0.
    gamma = jnp.ones((Cout,), dtype=jnp.float32)
    beta = jnp.zeros((Cout,), dtype=jnp.float32)

    ref = jax.block_until_ready(up_reference(x, weight, bias, gamma, beta))

    # Exact-algorithm check: f32 MXU operands, tight tolerance.
    fwd_f32 = jax.jit(functools.partial(up_forward, matmul_dtype=jnp.float32))
    out_f32 = jax.block_until_ready(fwd_f32(x, weight, bias, gamma, beta))
    assert out_f32.shape == (N, Cout, 2 * H, 2 * W), out_f32.shape
    assert jnp.allclose(out_f32, ref, atol=2e-3, rtol=2e-3), \
        float(jnp.max(jnp.abs(out_f32 - ref)))

    # Default perf path: bf16 MXU operands, f32 accumulation and f32 BN/ReLU.
    fwd = jax.jit(up_forward)
    out = jax.block_until_ready(fwd(x, weight, bias, gamma, beta))
    assert out.shape == (N, Cout, 2 * H, 2 * W), out.shape
    assert jnp.allclose(out, ref, atol=5e-2, rtol=5e-2), \
        float(jnp.max(jnp.abs(out - ref)))

    print("KERNEL_OK")
</pallas_src>

<mosaic_0001>
module attributes {stable_mosaic.version = 11 : i64} {
  func.func @_stats_kernel(%arg0: i32, %arg1: i32, %arg2: memref<1x16x512xf32, #tpu.memory_space<vmem>>, %arg3: memref<32x16xf32, #tpu.memory_space<vmem>>, %arg4: memref<1x32x2xf32, #tpu.memory_space<vmem>>) attributes {dimension_semantics = [#tpu.dimension_semantics<parallel>, #tpu.dimension_semantics<arbitrary>], iteration_bounds = array<i64: 2, 1>, scalar_prefetch = 0 : i64, scratch_operands = 0 : i64, tpu.core_type = #tpu.core_type<tc>, window_params = [{transform_indices = @transform_0, window_bounds = array<i64: 1, 16, 512>}, {pipeline_mode = #tpu.pipeline_mode<synchronous>, transform_indices = @transform_1, window_bounds = array<i64: 32, 16>}, {transform_indices = @transform_2, window_bounds = array<i64: 1, 32, 2>}]} {
    %c0 = arith.constant 0 : index
    %c0_0 = arith.constant 0 : index
    %c0_1 = arith.constant 0 : index
    %0 = vector.load %arg2[%c0, %c0_0, %c0_1] : memref<1x16x512xf32, #tpu.memory_space<vmem>>, vector<1x16x512xf32>
    %1 = vector.shape_cast %0 : vector<1x16x512xf32> to vector<16x512xf32>
    %c0_2 = arith.constant 0 : index
    %c0_3 = arith.constant 0 : index
    %2 = vector.load %arg3[%c0_2, %c0_3] : memref<32x16xf32, #tpu.memory_space<vmem>>, vector<32x16xf32>
    %cst = arith.constant dense<0.000000e+00> : vector<32x512xf32>
    %3 = tpu.matmul %2, %1, %cst {dimension_numbers = #tpu.dot_dimension_numbers<[1], [0], [0], [1], [0, 0, 1, 1], [], []>} : vector<32x16xf32>, vector<16x512xf32>, vector<32x512xf32> -> vector<32x512xf32>
    %cst_4 = arith.constant dense<0.000000e+00> : vector<32xf32>
    %4 = vector.multi_reduction <add>, %3, %cst_4 [1] : vector<32x512xf32> to vector<32xf32>
    %5 = vector.shape_cast %4 : vector<32xf32> to vector<32x1xf32>
    %6 = arith.mulf %3, %3 : vector<32x512xf32>
    %cst_5 = arith.constant dense<0.000000e+00> : vector<32xf32>
    %7 = vector.multi_reduction <add>, %6, %cst_5 [1] : vector<32x512xf32> to vector<32xf32>
    %8 = vector.shape_cast %7 : vector<32xf32> to vector<32x1xf32>
    %9 = tpu.concatenate %5, %8 in 1 : vector<32x1xf32>, vector<32x1xf32> -> vector<32x2xf32>
    %c0_i32 = arith.constant 0 : i32
    %10 = arith.cmpi eq, %arg1, %c0_i32 : i32
    %11 = arith.extui %10 : i1 to i32
    %c0_i32_6 = arith.constant 0 : i32
    %12 = arith.cmpi ne, %11, %c0_i32_6 : i32
    scf.if %12 {
      %c0_9 = arith.constant 0 : index
      %c0_10 = arith.constant 0 : index
      %c0_11 = arith.constant 0 : index
      %16 = vector.load %arg4[%c0_9, %c0_10, %c0_11] : memref<1x32x2xf32, #tpu.memory_space<vmem>>, vector<1x32x2xf32>
      %17 = vector.shape_cast %16 : vector<1x32x2xf32> to vector<32x2xf32>
      %18 = vector.shape_cast %9 : vector<32x2xf32> to vector<1x32x2xf32>
      tpu.vector_store %arg4[%c0_9, %c0_10, %c0_11], %18 {strides = array<i32>} : memref<1x32x2xf32, #tpu.memory_space<vmem>>, vector<1x32x2xf32>,
    } else {
    }
    %c0_i32_7 = arith.constant 0 : i32
    %13 = arith.cmpi sgt, %arg1, %c0_i32_7 : i32
    %14 = arith.extui %13 : i1 to i32
    %c0_i32_8 = arith.constant 0 : i32
    %15 = arith.cmpi ne, %14, %c0_i32_8 : i32
    scf.if %15 {
      %c0_9 = arith.constant 0 : index
      %c0_10 = arith.constant 0 : index
      %c0_11 = arith.constant 0 : index
      %16 = vector.load %arg4[%c0_9, %c0_10, %c0_11] : memref<1x32x2xf32, #tpu.memory_space<vmem>>, vector<1x32x2xf32>
      %17 = vector.shape_cast %16 : vector<1x32x2xf32> to vector<32x2xf32>
      %18 = arith.addf %17, %9 : vector<32x2xf32>
      %c0_12 = arith.constant 0 : index
      %c0_13 = arith.constant 0 : index
      %c0_14 = arith.constant 0 : index
      %19 = vector.load %arg4[%c0_12, %c0_13, %c0_14] : memref<1x32x2xf32, #tpu.memory_space<vmem>>, vector<1x32x2xf32>
      %20 = vector.shape_cast %19 : vector<1x32x2xf32> to vector<32x2xf32>
      %21 = vector.shape_cast %18 : vector<32x2xf32> to vector<1x32x2xf32>
      tpu.vector_store %arg4[%c0_12, %c0_13, %c0_14], %21 {strides = array<i32>} : memref<1x32x2xf32, #tpu.memory_space<vmem>>, vector<1x32x2xf32>,
    } else {
    }
    return
  }
  func.func @transform_0(%arg0: i32, %arg1: i32) -> (i32, i32, i32) {
    %c0_i32 = arith.constant 0 : i32
    %c0_i32_0 = arith.constant 0 : i32
    return %arg0, %c0_i32, %arg1 : i32, i32, i32
  }
  func.func @transform_1(%arg0: i32, %arg1: i32) -> (i32, i32) {
    %c0_i32 = arith.constant 0 : i32
    %c0_i32_0 = arith.constant 0 : i32
    %c0_i32_1 = arith.constant 0 : i32
    return %c0_i32, %c0_i32_0 : i32, i32
  }
  func.func @transform_2(%arg0: i32, %arg1: i32) -> (i32, i32, i32) {
    %c0_i32 = arith.constant 0 : i32
    %c0_i32_0 = arith.constant 0 : i32
    %c0_i32_1 = arith.constant 0 : i32
    return %arg0, %c0_i32, %c0_i32_0 : i32, i32, i32
  }
}

module attributes {stable_mosaic.version = 11 : i64} {
  func.func @_convt_bn_relu_kernel(%arg0: i32, %arg1: i32, %arg2: memref<1x16x512xf32, #tpu.memory_space<vmem>>, %arg3: memref<32x16xf32, #tpu.memory_space<vmem>>, %arg4: memref<32x1xf32, #tpu.memory_space<vmem>>, %arg5: memref<32x1xf32, #tpu.memory_space<vmem>>, %arg6: memref<1x8x16x64xf32, #tpu.memory_space<vmem>>) attributes {dimension_semantics = [#tpu.dimension_semantics<parallel>, #tpu.dimension_semantics<parallel>], iteration_bounds = array<i64: 2, 1>, scalar_prefetch = 0 : i64, scratch_operands = 0 : i64, tpu.core_type = #tpu.core_type<tc>, window_params = [{transform_indices = @transform_0, window_bounds = array<i64: 1, 16, 512>}, {pipeline_mode = #tpu.pipeline_mode<synchronous>, transform_indices = @transform_1, window_bounds = array<i64: 32, 16>}, {pipeline_mode = #tpu.pipeline_mode<synchronous>, transform_indices = @transform_2, window_bounds = array<i64: 32, 1>}, {pipeline_mode = #tpu.pipeline_mode<synchronous>, transform_indices = @transform_3, window_bounds = array<i64: 32, 1>}, {transform_indices = @transform_4, window_bounds = array<i64: 1, 8, 16, 64>}]} {
    %c0 = arith.constant 0 : index
    %c0_0 = arith.constant 0 : index
    %c0_1 = arith.constant 0 : index
    %0 = vector.load %arg2[%c0, %c0_0, %c0_1] : memref<1x16x512xf32, #tpu.memory_space<vmem>>, vector<1x16x512xf32>
    %1 = vector.shape_cast %0 : vector<1x16x512xf32> to vector<16x512xf32>
    %c0_2 = arith.constant 0 : index
    %c0_3 = arith.constant 0 : index
    %2 = vector.load %arg3[%c0_2, %c0_3] : memref<32x16xf32, #tpu.memory_space<vmem>>, vector<32x16xf32>
    %cst = arith.constant dense<0.000000e+00> : vector<32x512xf32>
    %3 = tpu.matmul %2, %1, %cst {dimension_numbers = #tpu.dot_dimension_numbers<[1], [0], [0], [1], [0, 0, 1, 1], [], []>} : vector<32x16xf32>, vector<16x512xf32>, vector<32x512xf32> -> vector<32x512xf32>
    %c0_4 = arith.constant 0 : index
    %c0_5 = arith.constant 0 : index
    %4 = vector.load %arg4[%c0_4, %c0_5] : memref<32x1xf32, #tpu.memory_space<vmem>>, vector<32x1xf32>
    %5 = vector.broadcast %4 : vector<32x1xf32> to vector<32x512xf32>
    %6 = arith.mulf %3, %5 : vector<32x512xf32>
    %c0_6 = arith.constant 0 : index
    %c0_7 = arith.constant 0 : index
    %7 = vector.load %arg5[%c0_6, %c0_7] : memref<32x1xf32, #tpu.memory_space<vmem>>, vector<32x1xf32>
    %8 = vector.broadcast %7 : vector<32x1xf32> to vector<32x512xf32>
    %9 = arith.addf %6, %8 : vector<32x512xf32>
    %cst_8 = arith.constant 0.000000e+00 : f32
    %10 = vector.broadcast %cst_8 : f32 to vector<32x512xf32>
    %11 = arith.maximumf %9, %10 : vector<32x512xf32>
    %12 = tpu.iota {dimensions = array<i32: 1>} : vector<8x512xi32>
    %c2_i32 = arith.constant 2 : i32
    %c0_i32 = arith.constant 0 : i32
    %13 = arith.cmpi eq, %c2_i32, %c0_i32 : i32
    %c1_i32 = arith.constant 1 : i32
    %14 = arith.select %13, %c1_i32, %c2_i32 : i32
    %15 = vector.broadcast %14 : i32 to vector<8x512xi32>
    %16 = arith.remsi %12, %15 : vector<8x512xi32>
    %c0_i32_9 = arith.constant 0 : i32
    %17 = vector.broadcast %c0_i32_9 : i32 to vector<8x512xi32>
    %18 = arith.cmpi ne, %16, %17 : vector<8x512xi32>
    %c0_i32_10 = arith.constant 0 : i32
    %19 = vector.broadcast %c0_i32_10 : i32 to vector<8x512xi32>
    %20 = arith.cmpi slt, %16, %19 : vector<8x512xi32>
    %c0_i32_11 = arith.constant 0 : i32
    %21 = arith.cmpi slt, %14, %c0_i32_11 : i32
    %22 = vector.broadcast %21 : i1 to vector<8x512xi1>
    %23 = vector.broadcast %22 : vector<8x512xi1> to vector<8x512xi1>
    %24 = arith.xori %20, %23 : vector<8x512xi1>
    %25 = arith.andi %24, %18 : vector<8x512xi1>
    %26 = vector.broadcast %14 : i32 to vector<8x512xi32>
    %27 = arith.addi %16, %26 : vector<8x512xi32>
    %28 = arith.select %25, %27, %16 : vector<8x512xi1>, vector<8x512xi32>
    %c0_i32_12 = arith.constant 0 : i32
    %29 = vector.broadcast %c0_i32_12 : i32 to vector<8x512xi32>
    %30 = arith.cmpi eq, %28, %29 : vector<8x512xi32>
    %31 = vector.extract_strided_slice %11 {offsets = [0, 0], sizes = [8, 512], strides = [1, 1]} : vector<32x512xf32> to vector<8x512xf32>
    %32 = vector.extract_strided_slice %11 {offsets = [8, 0], sizes = [8, 512], strides = [1, 1]} : vector<32x512xf32> to vector<8x512xf32>
    %33 = vector.extract_strided_slice %11 {offsets = [16, 0], sizes = [8, 512], strides = [1, 1]} : vector<32x512xf32> to vector<8x512xf32>
    %34 = vector.extract_strided_slice %11 {offsets = [24, 0], sizes = [8, 512], strides = [1, 1]} : vector<32x512xf32> to vector<8x512xf32>
    %35 = arith.select %30, %31, %32 : vector<8x512xi1>, vector<8x512xf32>
    %36 = arith.select %30, %33, %34 : vector<8x512xi1>, vector<8x512xf32>
    %37 = vector.extract_strided_slice %35 {offsets = [0, 0], sizes = [8, 32], strides = [1, 1]} : vector<8x512xf32> to vector<8x32xf32>
    %c0_13 = arith.constant 0 : index
    %c0_14 = arith.constant 0 : index
    %c0_15 = arith.constant 0 : index
    %c0_16 = arith.constant 0 : index
    %38 = vector.load %arg6[%c0_13, %c0_14, %c0_15, %c0_16] : memref<1x8x16x64xf32, #tpu.memory_space<vmem>>, vector<1x8x1x32xf32>
    %39 = vector.shape_cast %38 : vector<1x8x1x32xf32> to vector<8x32xf32>
    %40 = vector.shape_cast %37 : vector<8x32xf32> to vector<1x8x1x32xf32>
    tpu.vector_store %arg6[%c0_13, %c0_14, %c0_15, %c0_16], %40 {strides = array<i32>} : memref<1x8x16x64xf32, #tpu.memory_space<vmem>>, vector<1x8x1x32xf32>,
    %41 = vector.extract_strided_slice %36 {offsets = [0, 0], sizes = [8, 32], strides = [1, 1]} : vector<8x512xf32> to vector<8x32xf32>
    %c0_17 = arith.constant 0 : index
    %c0_18 = arith.constant 0 : index
    %c0_19 = arith.constant 0 : index
    %c32 = arith.constant 32 : index
    %42 = vector.load %arg6[%c0_17, %c0_18, %c0_19, %c32] : memref<1x8x16x64xf32, #tpu.memory_space<vmem>>, vector<1x8x1x32xf32>
    %43 = vector.shape_cast %42 : vector<1x8x1x32xf32> to vector<8x32xf32>
    %44 = vector.shape_cast %41 : vector<8x32xf32> to vector<1x8x1x32xf32>
    tpu.vector_store %arg6[%c0_17, %c0_18, %c0_19, %c32], %44 {strides = array<i32>} : memref<1x8x16x64xf32, #tpu.memory_space<vmem>>, vector<1x8x1x32xf32>,
    %45 = vector.extract_strided_slice %35 {offsets = [0, 32], sizes = [8, 32], strides = [1, 1]} : vector<8x512xf32> to vector<8x32xf32>
    %c0_20 = arith.constant 0 : index
    %c0_21 = arith.constant 0 : index
    %c1 = arith.constant 1 : index
    %c0_22 = arith.constant 0 : index
    %46 = vector.load %arg6[%c0_20, %c0_21, %c1, %c0_22] : memref<1x8x16x64xf32, #tpu.memory_space<vmem>>, vector<1x8x1x32xf32>
    %47 = vector.shape_cast %46 : vector<1x8x1x32xf32> to vector<8x32xf32>
    %48 = vector.shape_cast %45 : vector<8x32xf32> to vector<1x8x1x32xf32>
    tpu.vector_store %arg6[%c0_20, %c0_21, %c1, %c0_22], %48 {strides = array<i32>} : memref<1x8x16x64xf32, #tpu.memory_space<vmem>>, vector<1x8x1x32xf32>,
    %49 = vector.extract_strided_slice %36 {offsets = [0, 32], sizes = [8, 32], strides = [1, 1]} : vector<8x512xf32> to vector<8x32xf32>
    %c0_23 = arith.constant 0 : index
    %c0_24 = arith.constant 0 : index
    %c1_25 = arith.constant 1 : index
    %c32_26 = arith.constant 32 : index
    %50 = vector.load %arg6[%c0_23, %c0_24, %c1_25, %c32_26] : memref<1x8x16x64xf32, #tpu.memory_space<vmem>>, vector<1x8x1x32xf32>
    %51 = vector.shape_cast %50 : vector<1x8x1x32xf32> to vector<8x32xf32>
    %52 = vector.shape_cast %49 : vector<8x32xf32> to vector<1x8x1x32xf32>
    tpu.vector_store %arg6[%c0_23, %c0_24, %c1_25, %c32_26], %52 {strides = array<i32>} : memref<1x8x16x64xf32, #tpu.memory_space<vmem>>, vector<1x8x1x32xf32>,
    %53 = vector.extract_strided_slice %35 {offsets = [0, 64], sizes = [8, 32], strides = [1, 1]} : vector<8x512xf32> to vector<8x32xf32>
    %c0_27 = arith.constant 0 : index
    %c0_28 = arith.constant 0 : index
    %c2 = arith.constant 2 : index
    %c0_29 = arith.constant 0 : index
    %54 = vector.load %arg6[%c0_27, %c0_28, %c2, %c0_29] : memref<1x8x16x64xf32, #tpu.memory_space<vmem>>, vector<1x8x1x32xf32>
    %55 = vector.shape_cast %54 : vector<1x8x1x32xf32> to vector<8x32xf32>
    %56 = vector.shape_cast %53 : vector<8x32xf32> to vector<1x8x1x32xf32>
    tpu.vector_store %arg6[%c0_27, %c0_28, %c2, %c0_29], %56 {strides = array<i32>} : memref<1x8x16x64xf32, #tpu.memory_space<vmem>>, vector<1x8x1x32xf32>,
    %57 = vector.extract_strided_slice %36 {offsets = [0, 64], sizes = [8, 32], strides = [1, 1]} : vector<8x512xf32> to vector<8x32xf32>
    %c0_30 = arith.constant 0 : index
    %c0_31 = arith.constant 0 : index
    %c2_32 = arith.constant 2 : index
    %c32_33 = arith.constant 32 : index
    %58 = vector.load %arg6[%c0_30, %c0_31, %c2_32, %c32_33] : memref<1x8x16x64xf32, #tpu.memory_space<vmem>>, vector<1x8x1x32xf32>
    %59 = vector.shape_cast %58 : vector<1x8x1x32xf32> to vector<8x32xf32>
    %60 = vector.shape_cast %57 : vector<8x32xf32> to vector<1x8x1x32xf32>
    tpu.vector_store %arg6[%c0_30, %c0_31, %c2_32, %c32_33], %60 {strides = array<i32>} : memref<1x8x16x64xf32, #tpu.memory_space<vmem>>, vector<1x8x1x32xf32>,
    %61 = vector.extract_strided_slice %35 {offsets = [0, 96], sizes = [8, 32], strides = [1, 1]} : vector<8x512xf32> to vector<8x32xf32>
    %c0_34 = arith.constant 0 : index
    %c0_35 = arith.constant 0 : index
    %c3 = arith.constant 3 : index
    %c0_36 = arith.constant 0 : index
    %62 = vector.load %arg6[%c0_34, %c0_35, %c3, %c0_36] : memref<1x8x16x64xf32, #tpu.memory_space<vmem>>, vector<1x8x1x32xf32>
    %63 = vector.shape_cast %62 : vector<1x8x1x32xf32> to vector<8x32xf32>
    %64 = vector.shape_cast %61 : vector<8x32xf32> to vector<1x8x1x32xf32>
    tpu.vector_store %arg6[%c0_34, %c0_35, %c3, %c0_36], %64 {strides = array<i32>} : memref<1x8x16x64xf32, #tpu.memory_space<vmem>>, vector<1x8x1x32xf32>,
    %65 = vector.extract_strided_slice %36 {offsets = [0, 96], sizes = [8, 32], strides = [1, 1]} : vector<8x512xf32> to vector<8x32xf32>
    %c0_37 = arith.constant 0 : index
    %c0_38 = arith.constant 0 : index
    %c3_39 = arith.constant 3 : index
    %c32_40 = arith.constant 32 : index
    %66 = vector.load %arg6[%c0_37, %c0_38, %c3_39, %c32_40] : memref<1x8x16x64xf32, #tpu.memory_space<vmem>>, vector<1x8x1x32xf32>
    %67 = vector.shape_cast %66 : vector<1x8x1x32xf32> to vector<8x32xf32>
    %68 = vector.shape_cast %65 : vector<8x32xf32> to vector<1x8x1x32xf32>
    tpu.vector_store %arg6[%c0_37, %c0_38, %c3_39, %c32_40], %68 {strides = array<i32>} : memref<1x8x16x64xf32, #tpu.memory_space<vmem>>, vector<1x8x1x32xf32>,
    %69 = vector.extract_strided_slice %35 {offsets = [0, 128], sizes = [8, 32], strides = [1, 1]} : vector<8x512xf32> to vector<8x32xf32>
    %c0_41 = arith.constant 0 : index
    %c0_42 = arith.constant 0 : index
    %c4 = arith.constant 4 : index
    %c0_43 = arith.constant 0 : index
    %70 = vector.load %arg6[%c0_41, %c0_42, %c4, %c0_43] : memref<1x8x16x64xf32, #tpu.memory_space<vmem>>, vector<1x8x1x32xf32>
    %71 = vector.shape_cast %70 : vector<1x8x1x32xf32> to vector<8x32xf32>
    %72 = vector.shape_cast %69 : vector<8x32xf32> to vector<1x8x1x32xf32>
    tpu.vector_store %arg6[%c0_41, %c0_42, %c4, %c0_43], %72 {strides = array<i32>} : memref<1x8x16x64xf32, #tpu.memory_space<vmem>>, vector<1x8x1x32xf32>,
    %73 = vector.extract_strided_slice %36 {offsets = [0, 128], sizes = [8, 32], strides = [1, 1]} : vector<8x512xf32> to vector<8x32xf32>
    %c0_44 = arith.constant 0 : index
    %c0_45 = arith.constant 0 : index
    %c4_46 = arith.constant 4 : index
    %c32_47 = arith.constant 32 : index
    %74 = vector.load %arg6[%c0_44, %c0_45, %c4_46, %c32_47] : memref<1x8x16x64xf32, #tpu.memory_space<vmem>>, vector<1x8x1x32xf32>
    %75 = vector.shape_cast %74 : vector<1x8x1x32xf32> to vector<8x32xf32>
    %76 = vector.shape_cast %73 : vector<8x32xf32> to vector<1x8x1x32xf32>
    tpu.vector_store %arg6[%c0_44, %c0_45, %c4_46, %c32_47], %76 {strides = array<i32>} : memref<1x8x16x64xf32, #tpu.memory_space<vmem>>, vector<1x8x1x32xf32>,
    %77 = vector.extract_strided_slice %35 {offsets = [0, 160], sizes = [8, 32], strides = [1, 1]} : vector<8x512xf32> to vector<8x32xf32>
    %c0_48 = arith.constant 0 : index
    %c0_49 = arith.constant 0 : index
    %c5 = arith.constant 5 : index
    %c0_50 = arith.constant 0 : index
    %78 = vector.load %arg6[%c0_48, %c0_49, %c5, %c0_50] : memref<1x8x16x64xf32, #tpu.memory_space<vmem>>, vector<1x8x1x32xf32>
    %79 = vector.shape_cast %78 : vector<1x8x1x32xf32> to vector<8x32xf32>
    %80 = vector.shape_cast %77 : vector<8x32xf32> to vector<1x8x1x32xf32>
    tpu.vector_store %arg6[%c0_48, %c0_49, %c5, %c0_50], %80 {strides = array<i32>} : memref<1x8x16x64xf32, #tpu.memory_space<vmem>>, vector<1x8x1x32xf32>,
    %81 = vector.extract_strided_slice %36 {offsets = [0, 160], sizes = [8, 32], strides = [1, 1]} : vector<8x512xf32> to vector<8x32xf32>
    %c0_51 = arith.constant 0 : index
    %c0_52 = arith.constant 0 : index
    %c5_53 = arith.constant 5 : index
    %c32_54 = arith.constant 32 : index
    %82 = vector.load %arg6[%c0_51, %c0_52, %c5_53, %c32_54] : memref<1x8x16x64xf32, #tpu.memory_space<vmem>>, vector<1x8x1x32xf32>
    %83 = vector.shape_cast %82 : vector<1x8x1x32xf32> to vector<8x32xf32>
    %84 = vector.shape_cast %81 : vector<8x32xf32> to vector<1x8x1x32xf32>
    tpu.vector_store %arg6[%c0_51, %c0_52, %c5_53, %c32_54], %84 {strides = array<i32>} : memref<1x8x16x64xf32, #tpu.memory_space<vmem>>, vector<1x8x1x32xf32>,
    %85 = vector.extract_strided_slice %35 {offsets = [0, 192], sizes = [8, 32], strides = [1, 1]} : vector<8x512xf32> to vector<8x32xf32>
    %c0_55 = arith.constant 0 : index
    %c0_56 = arith.constant 0 : index
    %c6 = arith.constant 6 : index
    %c0_57 = arith.constant 0 : index
    %86 = vector.load %arg6[%c0_55, %c0_56, %c6, %c0_57] : memref<1x8x16x64xf32, #tpu.memory_space<vmem>>, vector<1x8x1x32xf32>
    %87 = vector.shape_cast %86 : vector<1x8x1x32xf32> to vector<8x32xf32>
    %88 = vector.shape_cast %85 : vector<8x32xf32> to vector<1x8x1x32xf32>
    tpu.vector_store %arg6[%c0_55, %c0_56, %c6, %c0_57], %88 {strides = array<i32>} : memref<1x8x16x64xf32, #tpu.memory_space<vmem>>, vector<1x8x1x32xf32>,
    %89 = vector.extract_strided_slice %36 {offsets = [0, 192], sizes = [8, 32], strides = [1, 1]} : vector<8x512xf32> to vector<8x32xf32>
    %c0_58 = arith.constant 0 : index
    %c0_59 = arith.constant 0 : index
    %c6_60 = arith.constant 6 : index
    %c32_61 = arith.constant 32 : index
    %90 = vector.load %arg6[%c0_58, %c0_59, %c6_60, %c32_61] : memref<1x8x16x64xf32, #tpu.memory_space<vmem>>, vector<1x8x1x32xf32>
    %91 = vector.shape_cast %90 : vector<1x8x1x32xf32> to vector<8x32xf32>
    %92 = vector.shape_cast %89 : vector<8x32xf32> to vector<1x8x1x32xf32>
    tpu.vector_store %arg6[%c0_58, %c0_59, %c6_60, %c32_61], %92 {strides = array<i32>} : memref<1x8x16x64xf32, #tpu.memory_space<vmem>>, vector<1x8x1x32xf32>,
    %93 = vector.extract_strided_slice %35 {offsets = [0, 224], sizes = [8, 32], strides = [1, 1]} : vector<8x512xf32> to vector<8x32xf32>
    %c0_62 = arith.constant 0 : index
    %c0_63 = arith.constant 0 : index
    %c7 = arith.constant 7 : index
    %c0_64 = arith.constant 0 : index
    %94 = vector.load %arg6[%c0_62, %c0_63, %c7, %c0_64] : memref<1x8x16x64xf32, #tpu.memory_space<vmem>>, vector<1x8x1x32xf32>
    %95 = vector.shape_cast %94 : vector<1x8x1x32xf32> to vector<8x32xf32>
    %96 = vector.shape_cast %93 : vector<8x32xf32> to vector<1x8x1x32xf32>
    tpu.vector_store %arg6[%c0_62, %c0_63, %c7, %c0_64], %96 {strides = array<i32>} : memref<1x8x16x64xf32, #tpu.memory_space<vmem>>, vector<1x8x1x32xf32>,
    %97 = vector.extract_strided_slice %36 {offsets = [0, 224], sizes = [8, 32], strides = [1, 1]} : vector<8x512xf32> to vector<8x32xf32>
    %c0_65 = arith.constant 0 : index
    %c0_66 = arith.constant 0 : index
    %c7_67 = arith.constant 7 : index
    %c32_68 = arith.constant 32 : index
    %98 = vector.load %arg6[%c0_65, %c0_66, %c7_67, %c32_68] : memref<1x8x16x64xf32, #tpu.memory_space<vmem>>, vector<1x8x1x32xf32>
    %99 = vector.shape_cast %98 : vector<1x8x1x32xf32> to vector<8x32xf32>
    %100 = vector.shape_cast %97 : vector<8x32xf32> to vector<1x8x1x32xf32>
    tpu.vector_store %arg6[%c0_65, %c0_66, %c7_67, %c32_68], %100 {strides = array<i32>} : memref<1x8x16x64xf32, #tpu.memory_space<vmem>>, vector<1x8x1x32xf32>,
    %101 = vector.extract_strided_slice %35 {offsets = [0, 256], sizes = [8, 32], strides = [1, 1]} : vector<8x512xf32> to vector<8x32xf32>
    %c0_69 = arith.constant 0 : index
    %c0_70 = arith.constant 0 : index
    %c8 = arith.constant 8 : index
    %c0_71 = arith.constant 0 : index
    %102 = vector.load %arg6[%c0_69, %c0_70, %c8, %c0_71] : memref<1x8x16x64xf32, #tpu.memory_space<vmem>>, vector<1x8x1x32xf32>
    %103 = vector.shape_cast %102 : vector<1x8x1x32xf32> to vector<8x32xf32>
    %104 = vector.shape_cast %101 : vector<8x32xf32> to vector<1x8x1x32xf32>
    tpu.vector_store %arg6[%c0_69, %c0_70, %c8, %c0_71], %104 {strides = array<i32>} : memref<1x8x16x64xf32, #tpu.memory_space<vmem>>, vector<1x8x1x32xf32>,
    %105 = vector.extract_strided_slice %36 {offsets = [0, 256], sizes = [8, 32], strides = [1, 1]} : vector<8x512xf32> to vector<8x32xf32>
    %c0_72 = arith.constant 0 : index
    %c0_73 = arith.constant 0 : index
    %c8_74 = arith.constant 8 : index
    %c32_75 = arith.constant 32 : index
    %106 = vector.load %arg6[%c0_72, %c0_73, %c8_74, %c32_75] : memref<1x8x16x64xf32, #tpu.memory_space<vmem>>, vector<1x8x1x32xf32>
    %107 = vector.shape_cast %106 : vector<1x8x1x32xf32> to vector<8x32xf32>
    %108 = vector.shape_cast %105 : vector<8x32xf32> to vector<1x8x1x32xf32>
    tpu.vector_store %arg6[%c0_72, %c0_73, %c8_74, %c32_75], %108 {strides = array<i32>} : memref<1x8x16x64xf32, #tpu.memory_space<vmem>>, vector<1x8x1x32xf32>,
    %109 = vector.extract_strided_slice %35 {offsets = [0, 288], sizes = [8, 32], strides = [1, 1]} : vector<8x512xf32> to vector<8x32xf32>
    %c0_76 = arith.constant 0 : index
    %c0_77 = arith.constant 0 : index
    %c9 = arith.constant 9 : index
    %c0_78 = arith.constant 0 : index
    %110 = vector.load %arg6[%c0_76, %c0_77, %c9, %c0_78] : memref<1x8x16x64xf32, #tpu.memory_space<vmem>>, vector<1x8x1x32xf32>
    %111 = vector.shape_cast %110 : vector<1x8x1x32xf32> to vector<8x32xf32>
    %112 = vector.shape_cast %109 : vector<8x32xf32> to vector<1x8x1x32xf32>
    tpu.vector_store %arg6[%c0_76, %c0_77, %c9, %c0_78], %112 {strides = array<i32>} : memref<1x8x16x64xf32, #tpu.memory_space<vmem>>, vector<1x8x1x32xf32>,
    %113 = vector.extract_strided_slice %36 {offsets = [0, 288], sizes = [8, 32], strides = [1, 1]} : vector<8x512xf32> to vector<8x32xf32>
    %c0_79 = arith.constant 0 : index
    %c0_80 = arith.constant 0 : index
    %c9_81 = arith.constant 9 : index
    %c32_82 = arith.constant 32 : index
    %114 = vector.load %arg6[%c0_79, %c0_80, %c9_81, %c32_82] : memref<1x8x16x64xf32, #tpu.memory_space<vmem>>, vector<1x8x1x32xf32>
    %115 = vector.shape_cast %114 : vector<1x8x1x32xf32> to vector<8x32xf32>
    %116 = vector.shape_cast %113 : vector<8x32xf32> to vector<1x8x1x32xf32>
    tpu.vector_store %arg6[%c0_79, %c0_80, %c9_81, %c32_82], %116 {strides = array<i32>} : memref<1x8x16x64xf32, #tpu.memory_space<vmem>>, vector<1x8x1x32xf32>,
    %117 = vector.extract_strided_slice %35 {offsets = [0, 320], sizes = [8, 32], strides = [1, 1]} : vector<8x512xf32> to vector<8x32xf32>
    %c0_83 = arith.constant 0 : index
    %c0_84 = arith.constant 0 : index
    %c10 = arith.constant 10 : index
    %c0_85 = arith.constant 0 : index
    %118 = vector.load %arg6[%c0_83, %c0_84, %c10, %c0_85] : memref<1x8x16x64xf32, #tpu.memory_space<vmem>>, vector<1x8x1x32xf32>
    %119 = vector.shape_cast %118 : vector<1x8x1x32xf32> to vector<8x32xf32>
    %120 = vector.shape_cast %117 : vector<8x32xf32> to vector<1x8x1x32xf32>
    tpu.vector_store %arg6[%c0_83, %c0_84, %c10, %c0_85], %120 {strides = array<i32>} : memref<1x8x16x64xf32, #tpu.memory_space<vmem>>, vector<1x8x1x32xf32>,
    %121 = vector.extract_strided_slice %36 {offsets = [0, 320], sizes = [8, 32], strides = [1, 1]} : vector<8x512xf32> to vector<8x32xf32>
    %c0_86 = arith.constant 0 : index
    %c0_87 = arith.constant 0 : index
    %c10_88 = arith.constant 10 : index
    %c32_89 = arith.constant 32 : index
    %122 = vector.load %arg6[%c0_86, %c0_87, %c10_88, %c32_89] : memref<1x8x16x64xf32, #tpu.memory_space<vmem>>, vector<1x8x1x32xf32>
    %123 = vector.shape_cast %122 : vector<1x8x1x32xf32> to vector<8x32xf32>
    %124 = vector.shape_cast %121 : vector<8x32xf32> to vector<1x8x1x32xf32>
    tpu.vector_store %arg6[%c0_86, %c0_87, %c10_88, %c32_89], %124 {strides = array<i32>} : memref<1x8x16x64xf32, #tpu.memory_space<vmem>>, vector<1x8x1x32xf32>,
    %125 = vector.extract_strided_slice %35 {offsets = [0, 352], sizes = [8, 32], strides = [1, 1]} : vector<8x512xf32> to vector<8x32xf32>
    %c0_90 = arith.constant 0 : index
    %c0_91 = arith.constant 0 : index
    %c11 = arith.constant 11 : index
    %c0_92 = arith.constant 0 : index
    %126 = vector.load %arg6[%c0_90, %c0_91, %c11, %c0_92] : memref<1x8x16x64xf32, #tpu.memory_space<vmem>>, vector<1x8x1x32xf32>
    %127 = vector.shape_cast %126 : vector<1x8x1x32xf32> to vector<8x32xf32>
    %128 = vector.shape_cast %125 : vector<8x32xf32> to vector<1x8x1x32xf32>
    tpu.vector_store %arg6[%c0_90, %c0_91, %c11, %c0_92], %128 {strides = array<i32>} : memref<1x8x16x64xf32, #tpu.memory_space<vmem>>, vector<1x8x1x32xf32>,
    %129 = vector.extract_strided_slice %36 {offsets = [0, 352], sizes = [8, 32], strides = [1, 1]} : vector<8x512xf32> to vector<8x32xf32>
    %c0_93 = arith.constant 0 : index
    %c0_94 = arith.constant 0 : index
    %c11_95 = arith.constant 11 : index
    %c32_96 = arith.constant 32 : index
    %130 = vector.load %arg6[%c0_93, %c0_94, %c11_95, %c32_96] : memref<1x8x16x64xf32, #tpu.memory_space<vmem>>, vector<1x8x1x32xf32>
    %131 = vector.shape_cast %130 : vector<1x8x1x32xf32> to vector<8x32xf32>
    %132 = vector.shape_cast %129 : vector<8x32xf32> to vector<1x8x1x32xf32>
    tpu.vector_store %arg6[%c0_93, %c0_94, %c11_95, %c32_96], %132 {strides = array<i32>} : memref<1x8x16x64xf32, #tpu.memory_space<vmem>>, vector<1x8x1x32xf32>,
    %133 = vector.extract_strided_slice %35 {offsets = [0, 384], sizes = [8, 32], strides = [1, 1]} : vector<8x512xf32> to vector<8x32xf32>
    %c0_97 = arith.constant 0 : index
    %c0_98 = arith.constant 0 : index
    %c12 = arith.constant 12 : index
    %c0_99 = arith.constant 0 : index
    %134 = vector.load %arg6[%c0_97, %c0_98, %c12, %c0_99] : memref<1x8x16x64xf32, #tpu.memory_space<vmem>>, vector<1x8x1x32xf32>
    %135 = vector.shape_cast %134 : vector<1x8x1x32xf32> to vector<8x32xf32>
    %136 = vector.shape_cast %133 : vector<8x32xf32> to vector<1x8x1x32xf32>
    tpu.vector_store %arg6[%c0_97, %c0_98, %c12, %c0_99], %136 {strides = array<i32>} : memref<1x8x16x64xf32, #tpu.memory_space<vmem>>, vector<1x8x1x32xf32>,
    %137 = vector.extract_strided_slice %36 {offsets = [0, 384], sizes = [8, 32], strides = [1, 1]} : vector<8x512xf32> to vector<8x32xf32>
    %c0_100 = arith.constant 0 : index
    %c0_101 = arith.constant 0 : index
    %c12_102 = arith.constant 12 : index
    %c32_103 = arith.constant 32 : index
    %138 = vector.load %arg6[%c0_100, %c0_101, %c12_102, %c32_103] : memref<1x8x16x64xf32, #tpu.memory_space<vmem>>, vector<1x8x1x32xf32>
    %139 = vector.shape_cast %138 : vector<1x8x1x32xf32> to vector<8x32xf32>
    %140 = vector.shape_cast %137 : vector<8x32xf32> to vector<1x8x1x32xf32>
    tpu.vector_store %arg6[%c0_100, %c0_101, %c12_102, %c32_103], %140 {strides = array<i32>} : memref<1x8x16x64xf32, #tpu.memory_space<vmem>>, vector<1x8x1x32xf32>,
    %141 = vector.extract_strided_slice %35 {offsets = [0, 416], sizes = [8, 32], strides = [1, 1]} : vector<8x512xf32> to vector<8x32xf32>
    %c0_104 = arith.constant 0 : index
    %c0_105 = arith.constant 0 : index
    %c13 = arith.constant 13 : index
    %c0_106 = arith.constant 0 : index
    %142 = vector.load %arg6[%c0_104, %c0_105, %c13, %c0_106] : memref<1x8x16x64xf32, #tpu.memory_space<vmem>>, vector<1x8x1x32xf32>
    %143 = vector.shape_cast %142 : vector<1x8x1x32xf32> to vector<8x32xf32>
    %144 = vector.shape_cast %141 : vector<8x32xf32> to vector<1x8x1x32xf32>
    tpu.vector_store %arg6[%c0_104, %c0_105, %c13, %c0_106], %144 {strides = array<i32>} : memref<1x8x16x64xf32, #tpu.memory_space<vmem>>, vector<1x8x1x32xf32>,
    %145 = vector.extract_strided_slice %36 {offsets = [0, 416], sizes = [8, 32], strides = [1, 1]} : vector<8x512xf32> to vector<8x32xf32>
    %c0_107 = arith.constant 0 : index
    %c0_108 = arith.constant 0 : index
    %c13_109 = arith.constant 13 : index
    %c32_110 = arith.constant 32 : index
    %146 = vector.load %arg6[%c0_107, %c0_108, %c13_109, %c32_110] : memref<1x8x16x64xf32, #tpu.memory_space<vmem>>, vector<1x8x1x32xf32>
    %147 = vector.shape_cast %146 : vector<1x8x1x32xf32> to vector<8x32xf32>
    %148 = vector.shape_cast %145 : vector<8x32xf32> to vector<1x8x1x32xf32>
    tpu.vector_store %arg6[%c0_107, %c0_108, %c13_109, %c32_110], %148 {strides = array<i32>} : memref<1x8x16x64xf32, #tpu.memory_space<vmem>>, vector<1x8x1x32xf32>,
    %149 = vector.extract_strided_slice %35 {offsets = [0, 448], sizes = [8, 32], strides = [1, 1]} : vector<8x512xf32> to vector<8x32xf32>
    %c0_111 = arith.constant 0 : index
    %c0_112 = arith.constant 0 : index
    %c14 = arith.constant 14 : index
    %c0_113 = arith.constant 0 : index
    %150 = vector.load %arg6[%c0_111, %c0_112, %c14, %c0_113] : memref<1x8x16x64xf32, #tpu.memory_space<vmem>>, vector<1x8x1x32xf32>
    %151 = vector.shape_cast %150 : vector<1x8x1x32xf32> to vector<8x32xf32>
    %152 = vector.shape_cast %149 : vector<8x32xf32> to vector<1x8x1x32xf32>
    tpu.vector_store %arg6[%c0_111, %c0_112, %c14, %c0_113], %152 {strides = array<i32>} : memref<1x8x16x64xf32, #tpu.memory_space<vmem>>, vector<1x8x1x32xf32>,
    %153 = vector.extract_strided_slice %36 {offsets = [0, 448], sizes = [8, 32], strides = [1, 1]} : vector<8x512xf32> to vector<8x32xf32>
    %c0_114 = arith.constant 0 : index
    %c0_115 = arith.constant 0 : index
    %c14_116 = arith.constant 14 : index
    %c32_117 = arith.constant 32 : index
    %154 = vector.load %arg6[%c0_114, %c0_115, %c14_116, %c32_117] : memref<1x8x16x64xf32, #tpu.memory_space<vmem>>, vector<1x8x1x32xf32>
    %155 = vector.shape_cast %154 : vector<1x8x1x32xf32> to vector<8x32xf32>
    %156 = vector.shape_cast %153 : vector<8x32xf32> to vector<1x8x1x32xf32>
    tpu.vector_store %arg6[%c0_114, %c0_115, %c14_116, %c32_117], %156 {strides = array<i32>} : memref<1x8x16x64xf32, #tpu.memory_space<vmem>>, vector<1x8x1x32xf32>,
    %157 = vector.extract_strided_slice %35 {offsets = [0, 480], sizes = [8, 32], strides = [1, 1]} : vector<8x512xf32> to vector<8x32xf32>
    %c0_118 = arith.constant 0 : index
    %c0_119 = arith.constant 0 : index
    %c15 = arith.constant 15 : index
    %c0_120 = arith.constant 0 : index
    %158 = vector.load %arg6[%c0_118, %c0_119, %c15, %c0_120] : memref<1x8x16x64xf32, #tpu.memory_space<vmem>>, vector<1x8x1x32xf32>
    %159 = vector.shape_cast %158 : vector<1x8x1x32xf32> to vector<8x32xf32>
    %160 = vector.shape_cast %157 : vector<8x32xf32> to vector<1x8x1x32xf32>
    tpu.vector_store %arg6[%c0_118, %c0_119, %c15, %c0_120], %160 {strides = array<i32>} : memref<1x8x16x64xf32, #tpu.memory_space<vmem>>, vector<1x8x1x32xf32>,
    %161 = vector.extract_strided_slice %36 {offsets = [0, 480], sizes = [8, 32], strides = [1, 1]} : vector<8x512xf32> to vector<8x32xf32>
    %c0_121 = arith.constant 0 : index
    %c0_122 = arith.constant 0 : index
    %c15_123 = arith.constant 15 : index
    %c32_124 = arith.constant 32 : index
    %162 = vector.load %arg6[%c0_121, %c0_122, %c15_123, %c32_124] : memref<1x8x16x64xf32, #tpu.memory_space<vmem>>, vector<1x8x1x32xf32>
    %163 = vector.shape_cast %162 : vector<1x8x1x32xf32> to vector<8x32xf32>
    %164 = vector.shape_cast %161 : vector<8x32xf32> to vector<1x8x1x32xf32>
    tpu.vector_store %arg6[%c0_121, %c0_122, %c15_123, %c32_124], %164 {strides = array<i32>} : memref<1x8x16x64xf32, #tpu.memory_space<vmem>>, vector<1x8x1x32xf32>,
    return
  }
  func.func @transform_0(%arg0: i32, %arg1: i32) -> (i32, i32, i32) {
    %c0_i32 = arith.constant 0 : i32
    %c0_i32_0 = arith.constant 0 : i32
    return %arg0, %c0_i32, %arg1 : i32, i32, i32
  }
  func.func @transform_1(%arg0: i32, %arg1: i32) -> (i32, i32) {
    %c0_i32 = arith.constant 0 : i32
    %c0_i32_0 = arith.constant 0 : i32
    %c0_i32_1 = arith.constant 0 : i32
    return %c0_i32, %c0_i32_0 : i32, i32
  }
  func.func @transform_2(%arg0: i32, %arg1: i32) -> (i32, i32) {
    %c0_i32 = arith.constant 0 : i32
    %c0_i32_0 = arith.constant 0 : i32
    %c0_i32_1 = arith.constant 0 : i32
    return %c0_i32, %c0_i32_0 : i32, i32
  }
  func.func @transform_3(%arg0: i32, %arg1: i32) -> (i32, i32) {
    %c0_i32 = arith.constant 0 : i32
    %c0_i32_0 = arith.constant 0 : i32
    %c0_i32_1 = arith.constant 0 : i32
    return %c0_i32, %c0_i32_0 : i32, i32
  }
  func.func @transform_4(%arg0: i32, %arg1: i32) -> (i32, i32, i32, i32) {
    %c0_i32 = arith.constant 0 : i32
    %c0_i32_0 = arith.constant 0 : i32
    %c0_i32_1 = arith.constant 0 : i32
    return %arg0, %c0_i32, %arg1, %c0_i32_0 : i32, i32, i32, i32
  }
}

</mosaic_0001>

<llo_original>
// kernel: tile.13
$region0: #{tile.13}
  #allocation0 [shape = 's32[1]{0}', space=sflag, size = 0x4, scoped, tag = 'scoped memory for tile.13']
  %s0 = inlined_call_operand.vmem [shape: f32[8], index: 0, kind: input, shape index: {}]
  %s1 = inlined_call_operand.vmem [shape: f32[4,8], index: 1, kind: output, shape index: {}]
  // Predicated region
  $region2: #{tile.13} parent=0 // pred_check
    _
  $region3: #{tile.13} parent=0 // pred_check_branch
    %3 = sbr.rel (0) target = $region5
  $region4: #{tile.13} parent=0 // pred_region
    _
  $region5: #{tile.13} parent=0 // pred_fallthru
    _
  %v4 = vld [vmem:[%s0] ss:$0 sm:$0xff]
  %5 = vst [vmem:[%s1] sm:$0xf] %v4

// kernel: tile.0
$region0: #{tile.0}
  %s0 = inlined_call_operand.vmem [shape: f32[4,8], index: 0, kind: input, shape index: {}]
  %s1 = inlined_call_operand.vmem [shape: f32[32,1], index: 1, kind: output, shape index: {}]
  $region1: #{tile.0} parent=0
    #allocation0 [shape = 'u8[4096]{0}', space=vmem, size = 0x1000, scoped, tag = 'scoped mem for input reshape']
    %s3 = sshllo.u32 0, 4
    %v4 = vld [vmem:[%s0] sm:%s3]
    %5 = vst [vmem:[#allocation0] sm:%s3] %v4
    %v6 = vld [vmem:[#allocation0] sm:$0xf]
    %vm7 = vcmask 7168
    %8 = vst.msk [vmem:[%s1] ss:$8 sm:$0xf] %vm7, %v6
    %v9 = vld [vmem:[#allocation0] sm:$0xf]
    %10 = vrot.lane.b32.xlu0 %v9, 127
    %v11 = vpop.permute.xlu0 %10
    %vm12 = vcmask 7168
    %s13 = scalar_lea.vmem %s1, 1
    %14 = vst.msk [vmem:[%s13] ss:$8 sm:$0xf] %vm12, %v11
    %v15 = vld [vmem:[#allocation0] sm:$0xf]
    %16 = vrot.lane.b32.xlu0 %v15, 126
    %v17 = vpop.permute.xlu0 %16
    %vm18 = vcmask 7168
    %s19 = scalar_lea.vmem %s1, 2
    %20 = vst.msk [vmem:[%s19] ss:$8 sm:$0xf] %vm18, %v17
    %v21 = vld [vmem:[#allocation0] sm:$0xf]
    %22 = vrot.lane.b32.xlu0 %v21, 125
    %v23 = vpop.permute.xlu0 %22
    %vm24 = vcmask 7168
    %s25 = scalar_lea.vmem %s1, 3
    %26 = vst.msk [vmem:[%s25] ss:$8 sm:$0xf] %vm24, %v23
    %v27 = vld [vmem:[#allocation0] sm:$0xf]
    %28 = vrot.lane.b32.xlu0 %v27, 124
    %v29 = vpop.permute.xlu0 %28
    %vm30 = vcmask 7168
    %s31 = scalar_lea.vmem %s1, 4
    %32 = vst.msk [vmem:[%s31] ss:$8 sm:$0xf] %vm30, %v29
    %v33 = vld [vmem:[#allocation0] sm:$0xf]
    %34 = vrot.lane.b32.xlu0 %v33, 123
    %v35 = vpop.permute.xlu0 %34
    %vm36 = vcmask 7168
    %s37 = scalar_lea.vmem %s1, 5
    %38 = vst.msk [vmem:[%s37] ss:$8 sm:$0xf] %vm36, %v35
    %v39 = vld [vmem:[#allocation0] sm:$0xf]
    %40 = vrot.lane.b32.xlu0 %v39, 122
    %v41 = vpop.permute.xlu0 %40
    %vm42 = vcmask 7168
    %s43 = scalar_lea.vmem %s1, 6
    %44 = vst.msk [vmem:[%s43] ss:$8 sm:$0xf] %vm42, %v41
    %v45 = vld [vmem:[#allocation0] sm:$0xf]
    %46 = vrot.lane.b32.xlu0 %v45, 121
    %v47 = vpop.permute.xlu0 %46
    %vm48 = vcmask 7168
    %s49 = scalar_lea.vmem %s1, 7
    %50 = vst.msk [vmem:[%s49] ss:$8 sm:$0xf] %vm48, %v47

// kernel: up_forward.2
$region0: #{up_forward.2}
  #allocation0 [shape = 'u32[]', space=smem, size = 0x4, offset = 0x4, fixed_abs, tag = 'smem constant byte address 0x4 - core index']
  #allocation1 [shape = 'u32[144,128]{1,0:T(1,128)}', space=vmem, size = 0x12000, scoped, tag = 'internal scratch']
  %s0 = inlined_call_operand.vmem [shape: f32[2,16,512], index: 0, kind: input, shape index: {}]
  %s1 = inlined_call_operand.vmem [shape: f32[32,16], index: 1, kind: input, shape index: {}]
  %s2 = inlined_call_operand.vmem [shape: f32[2,32,2], index: 2, kind: output, shape index: {}]
  %s3 = sld [smem:[#allocation0]]
  $region49: #{up_forward.2} parent=0
    _
  %s5 = ssub.s32 1, %s3
  %s6 = scalar_select 0, %s5, %s3
  loop: start=0, step=1, limit=4
  $region2: #{up_forward.2} parent=0 // loop_pre_header
    _
  $region3: #{up_forward.2} parent=0 // loop_header
    %s8 = sphi 0, %s12
    %p9 = scmp.ge.s32.totalorder %s8, 4
    %s15 = sphi 0, %s27
    %s16 = sphi 0, %s23
    %s17 = sphi 0, %s15
    %s18 = sphi 0, %s16
    %s19 = sphi 0, %s17
    %s20 = sphi 0, %s18
    %s32 = sphi 0, %s34
    %s35 = sphi 0, %s32
    %s36 = sphi 0, %s35
    %s52 = sphi 0, %s36
    %s56 = sphi 0, %s56
    %s58 = sphi 0, %s56
    %s59 = sphi 0, %s58
    %s73 = sphi 0, %s59
    %s79 = sphi 0, %s81
    %s82 = sphi 0, %s79
    %s83 = sphi 0, %s82
    %s99 = sphi 0, %s83
  $region4: #{up_forward.2} parent=0 // loop_header_branch
    %11 = sbr.rel (%p9) target = $region8
  $region5: #{up_forward.2} parent=0 // loop_body
    %s13 = ssub.s32 %s8, 1
    %s14 = ssub.s32 %s8, 2
    %s21 = sadd.s32 1, %s16
    %p22 = scmp.ge.s32.totalorder %s21, 1
    %s23 = scalar_select %p22, 0, %s21
    %s24 = sadd.s32 1, %s15
    %s25 = scalar_select %p22, %s24, %s15
    %p26 = scmp.ge.s32.totalorder %s25, 2
    %s27 = scalar_select %p26, 0, %s25
    %s28 = ssub.s32 %s15, %s27
    %s29 = ssub.s32 %s16, %s23
    %s30 = sor.u32 %s28, %s29
    %p31 = scmp.eq.s32.totalorder %s30, 0
    %s33 = sadd.s32 %s32, 1
    %s34 = scalar_select %p31, %s32, %s33
    %p37 = pneg %p31
    %p38 = scmp.eq.s32.totalorder %s8, 1
    %p39 = por %p37, %p38
    %p40 = scmp.ne.s32.totalorder %s32, %s35
    %p41 = scmp.eq.s32.totalorder %s8, 0
    %p42 = por %p40, %p41
    %p43 = scmp.ne.s32.totalorder %s32, %s35
    %p44 = scmp.eq.s32.totalorder %s13, 1
    %p45 = por %p43, %p44
    %p46 = scmp.ne.s32.totalorder %s35, %s36
    %p47 = scmp.eq.s32.totalorder %s13, 0
    %p48 = por %p46, %p47
    %p49 = scmp.ne.s32.totalorder %s35, %s36
    %p50 = scmp.eq.s32.totalorder %s14, 1
    %p51 = por %p49, %p50
    %p53 = scmp.ne.s32.totalorder %s36, %s52
    %p54 = scmp.eq.s32.totalorder %s14, 0
    %p55 = por %p53, %p54
    %s57 = sadd.s32 %s56, 1
    %p60 = scmp.eq.s32.totalorder %s8, 1
    %p61 = scmp.ne.s32.totalorder %s56, %s58
    %p62 = scmp.eq.s32.totalorder %s8, 0
    %p63 = por %p61, %p62
    %p64 = scmp.ne.s32.totalorder %s56, %s58
    %p65 = scmp.eq.s32.totalorder %s13, 1
    %p66 = por %p64, %p65
    %p67 = scmp.ne.s32.totalorder %s58, %s59
    %p68 = scmp.eq.s32.totalorder %s13, 0
    %p69 = por %p67, %p68
    %p70 = scmp.ne.s32.totalorder %s58, %s59
    %p71 = scmp.eq.s32.totalorder %s14, 1
    %p72 = por %p70, %p71
    %p74 = scmp.ne.s32.totalorder %s59, %s73
    %p75 = scmp.eq.s32.totalorder %s14, 0
    %p76 = por %p74, %p75
    %s77 = ssub.s32 %s15, %s27
    %p78 = scmp.eq.s32.totalorder %s77, 0
    %s80 = sadd.s32 %s79, 1
    %s81 = scalar_select %p78, %s79, %s80
    %p84 = pneg %p78
    %p85 = scmp.eq.s32.totalorder %s8, 1
    %p86 = por %p84, %p85
    %p87 = scmp.ne.s32.totalorder %s79, %s82
    %p88 = scmp.eq.s32.totalorder %s8, 0
    %p89 = por %p87, %p88
    %p90 = scmp.ne.s32.totalorder %s79, %s82
    %p91 = scmp.eq.s32.totalorder %s13, 1
    %p92 = por %p90, %p91
    %p93 = scmp.ne.s32.totalorder %s82, %s83
    %p94 = scmp.eq.s32.totalorder %s13, 0
    %p95 = por %p93, %p94
    %p96 = scmp.ne.s32.totalorder %s82, %s83
    %p97 = scmp.eq.s32.totalorder %s14, 1
    %p98 = por %p96, %p97
    %p100 = scmp.ne.s32.totalorder %s83, %s99
    %p101 = scmp.eq.s32.totalorder %s14, 0
    %p102 = por %p100, %p101
    %p103 = scmp.le.s32.totalorder 1, %s8
    %p104 = scmp.lt.s32.totalorder %s8, 3
    %p105 = pnand %p103, %p104
    %p106 = pneg %p105
    // Predicated region
    $region9: #{up_forward.2} parent=5 // pred_check
      _
    $region10: #{up_forward.2} parent=5 // pred_check_branch
      %108 = sbr.rel (%p105) target = $region12
    $region11: #{up_forward.2} parent=5 // pred_region
      %s109 = ssub.s32 %s8, 1
      // Predicated region
      $region13: #{up_forward.2} parent=11 // pred_check
        %p110 = pneg %p69
      $region14: #{up_forward.2} parent=11 // pred_check_branch
        %112 = sbr.rel (%p110) target = $region16
      $region15: #{up_forward.2} parent=11 // pred_region
        _
      $region16: #{up_forward.2} parent=11 // pred_fallthru
        _
    $region12: #{up_forward.2} parent=5 // pred_fallthru
      _
    %p113 = scmp.lt.s32.totalorder %s8, 2
    // Predicated region
    $region17: #{up_forward.2} parent=5 // pred_check
      %p114 = pneg %p113
    $region18: #{up_forward.2} parent=5 // pred_check_branch
      %116 = sbr.rel (%p114) target = $region20
    $region19: #{up_forward.2} parent=5 // pred_region
      // Predicated region
      $region21: #{up_forward.2} parent=19 // pred_check
        %p117 = pneg %p42
      $region22: #{up_forward.2} parent=19 // pred_check_branch
        %119 = sbr.rel (%p117) target = $region24
      $region23: #{up_forward.2} parent=19 // pred_region
        %s120 = smul.u32 4, %s16
        %p121 = scmp.lt.s32.totalorder %s15, 1
        %s122 = scalar_select %p121, %s15, 1
        %p123 = scmp.lt.s32.totalorder %s120, 3
        %s124 = scalar_select %p123, %s120, 3
        %s125 = smul.addr %s122, 8
        %s126 = sadd.s32 %s124, %s125
        %s127 = smul.addr %s126, 8
        %s128 = scalar_lea.vmem %s0, %s127
        %s129 = smul.u32 4, %s16
      $region24: #{up_forward.2} parent=19 // pred_fallthru
        _
    $region20: #{up_forward.2} parent=5 // pred_fallthru
      _
    %p130 = scmp.le.s32.totalorder 1, %s8
    %p131 = scmp.lt.s32.totalorder %s8, 3
    %p132 = pnand %p130, %p131
    %p133 = pneg %p132
    // Predicated region
    $region25: #{up_forward.2} parent=5 // pred_check
      _
    $region26: #{up_forward.2} parent=5 // pred_check_branch
      %135 = sbr.rel (%p132) target = $region28
    $region27: #{up_forward.2} parent=5 // pred_region
      %s136 = ssub.s32 %s8, 1
      %s137 = smul.u32 4, %s18
      %p138 = scmp.lt.s32.totalorder %s17, 1
      %s139 = scalar_select %p138, %s17, 1
      %p140 = scmp.lt.s32.totalorder %s137, 3
      %s141 = scalar_select %p140, %s137, 3
      %s142 = smul.addr %s139, 8
      %s143 = sadd.s32 %s141, %s142
      %s144 = smul.addr %s143, 8
      %s145 = scalar_lea.vmem %s0, %s144
      %p146 = pneg %p48
      %p147 = pneg %p45
      %p148 = pneg %p69
      %p149 = pneg %p66
      %p150 = pneg %p95
      %p151 = pneg %p92
      %p152 = scmp.lt.s32.totalorder %s17, 1
      %s153 = scalar_select %p152, %s17, 1
      %s154 = smul.addr %s153, 4
      %s155 = smul.addr %s154, 8
      %s156 = scalar_lea.vmem %s2, %s155
      %s157 = smul.u32 4, %s18
      %p158 = scmp.lt.s32.totalorder %s17, 1
      %s159 = scalar_select %p158, %s17, 1
      %p160 = scmp.lt.s32.totalorder %s157, 3
      %s161 = scalar_select %p160, %s157, 3
      %s162 = smul.addr %s159, 8
      %s163 = sadd.s32 %s161, %s162
      %s164 = smul.addr %s163, 8
      %s165 = scalar_lea.vmem %s0, %s164
      %s166 = smul.u32 4, %s18
      %p167 = scmp.lt.s32.totalorder %s17, 1
      %s168 = scalar_select %p167, %s17, 1
      %s169 = smul.addr %s168, 4
      %s170 = smul.addr %s169, 8
      %s171 = scalar_lea.vmem %s2, %s170
      %v172 = vld [vmem:[%s165] sm:$0xff]
      %v173 = vld [vmem:[%s165 + $0x8] sm:$0xff]
      %v174 = vld [vmem:[%s165 + $0x10] sm:$0xff]
      %v175 = vld [vmem:[%s165 + $0x18] sm:$0xff]
      %v176 = vld [vmem:[%s165 + $0x20] sm:$0xff]
      %v177 = vld [vmem:[%s165 + $0x28] sm:$0xff]
      %v178 = vld [vmem:[%s165 + $0x30] sm:$0xff]
      %v179 = vld [vmem:[%s165 + $0x38] sm:$0xff]
      %v180 = vld [vmem:[%s1] sm:$0xff]
      %v181 = vld [vmem:[%s1 + $0x8] sm:$0xff]
      %v182 = vld [vmem:[%s1 + $0x10] sm:$0xff]
      %v183 = vld [vmem:[%s1 + $0x18] sm:$0xff]
      %vm184 = vcmask 130048
      %v186 = vsel %vm184, %v180, 0
      %v189 = vsel %vm184, %v181, 0
      %v192 = vsel %vm184, %v182, 0
      %v195 = vsel %vm184, %v183, 0
      %197 = vmatprep.subr.mxu0 %v173
      %198 = vmatpush1.msra.mxu0 %v172
      %199 = vmatprep.subr.mxu0 %v177
      %200 = vmatpush1.msra.mxu0 %v176
      %201 = vmatprep.subr.mxu0 0.0
      %202 = vmatpush1.msra.mxu0 0.0
      %203 = vmatprep.subr.mxu0 0.0
      %204 = vmatpush1.msra.mxu0 0.0
      %205 = vmatprep.subr.mxu0 0.0
      %206 = vmatpush1.msra.mxu0 0.0
      %207 = vmatprep.subr.mxu0 0.0
      %208 = vmatpush1.msra.mxu0 0.0
      %209 = vmatprep.subr.mxu0 0.0
      %210 = vmatpush1.msra.mxu0 0.0
      %211 = vmatprep.subr.mxu0 0.0
      %212 = vmatpush1.msra.mxu0 0.0
      %213 = vmatprep.subr.mxu0 0.0
      %214 = vmatpush1.msra.mxu0 0.0
      %215 = vmatprep.subr.mxu0 0.0
      %216 = vmatpush1.msra.mxu0 0.0
      %217 = vmatprep.subr.mxu0 0.0
      %218 = vmatpush1.msra.mxu0 0.0
      %219 = vmatprep.subr.mxu0 0.0
      %220 = vmatpush1.msra.mxu0 0.0
      %221 = vmatprep.subr.mxu0 0.0
      %222 = vmatpush1.msra.mxu0 0.0
      %223 = vmatprep.subr.mxu0 0.0
      %224 = vmatpush1.msra.mxu0 0.0
      %225 = vmatprep.subr.mxu0 0.0
      %226 = vmatpush1.msra.mxu0 0.0
      %227 = vmatprep.subr.mxu0 0.0
      %228 = vmatpush1.msra.mxu0 0.0
      %229 = vmatprep.subr.mxu0 0.0
      %230 = vmatpush1.msra.mxu0 0.0
      %231 = vmatprep.subr.mxu0 0.0
      %232 = vmatpush1.msra.mxu0 0.0
      %233 = vmatprep.subr.mxu0 0.0
      %234 = vmatpush1.msra.mxu0 0.0
      %235 = vmatprep.subr.mxu0 0.0
      %236 = vmatpush1.msra.mxu0 0.0
      %237 = vmatprep.subr.mxu0 0.0
      %238 = vmatpush1.msra.mxu0 0.0
      %239 = vmatprep.subr.mxu0 0.0
      %240 = vmatpush1.msra.mxu0 0.0
      %241 = vmatprep.subr.mxu0 0.0
      %242 = vmatpush1.msra.mxu0 0.0
      %243 = vmatprep.subr.mxu0 0.0
      %244 = vmatpush1.msra.mxu0 0.0
      %245 = vmatprep.subr.mxu0 0.0
      %246 = vmatpush1.msra.mxu0 0.0
      %247 = vmatprep.subr.mxu0 0.0
      %248 = vmatpush1.msra.mxu0 0.0
      %249 = vmatprep.subr.mxu0 0.0
      %250 = vmatpush1.msra.mxu0 0.0
      %251 = vmatprep.subr.mxu0 0.0
      %252 = vmatpush1.msra.mxu0 0.0
      %253 = vmatprep.subr.mxu0 0.0
      %254 = vmatpush1.msra.mxu0 0.0
      %255 = vmatprep.subr.mxu0 0.0
      %256 = vmatpush1.msra.mxu0 0.0
      %257 = vmatprep.subr.mxu0 0.0
      %258 = vmatpush1.msra.mxu0 0.0
      %259 = vmatprep.subr.mxu0 0.0
      %260 = vmatpush1.msra.mxu0 0.0
      %261 = vmatprep.mubr.f32.mxu0 0.0
      %262 = vmatmul.mubr.f32.gmra.mrb[0].mxu0 %v186
      %v263 = vpop.f32.mrb[0].mxu0
      %v264 = vadd.f32 0.0, %v263
      %v265 = vpop.f32.mrb[0].mxu0
      %v266 = vadd.f32 0.0, %v265
      %267 = vmatprep.mubr.f32.mxu0 0.0
      %268 = vmatmul.mubr.f32.gmra.mrb[0].mxu0 %v189
      %v269 = vpop.f32.mrb[0].mxu0
      %v270 = vadd.f32 0.0, %v269
      %v271 = vpop.f32.mrb[0].mxu0
      %v272 = vadd.f32 0.0, %v271
      %273 = vmatprep.mubr.f32.mxu0 0.0
      %274 = vmatmul.mubr.f32.gmra.mrb[0].mxu0 %v192
      %v275 = vpop.f32.mrb[0].mxu0
      %v276 = vadd.f32 0.0, %v275
      %v277 = vpop.f32.mrb[0].mxu0
      %v278 = vadd.f32 0.0, %v277
      %279 = vmatprep.mubr.f32.mxu0 0.0
      %280 = vmatmul.mubr.f32.gmra.mrb[0].mxu0 %v195
      %v281 = vpop.f32.mrb[0].mxu0
      %v282 = vadd.f32 0.0, %v281
      %v283 = vpop.f32.mrb[0].mxu0
      %v284 = vadd.f32 0.0, %v283
      %285 = vdwg.mxu0
      %286 = vmatprep.subr.mxu0 %v175
      %287 = vmatpush1.msra.mxu0 %v174
      %288 = vmatprep.subr.mxu0 %v179
      %289 = vmatpush1.msra.mxu0 %v178
      %290 = vmatprep.subr.mxu0 0.0
      %291 = vmatpush1.msra.mxu0 0.0
      %292 = vmatprep.subr.mxu0 0.0
      %293 = vmatpush1.msra.mxu0 0.0
      %294 = vmatprep.subr.mxu0 0.0
      %295 = vmatpush1.msra.mxu0 0.0
      %296 = vmatprep.subr.mxu0 0.0
      %297 = vmatpush1.msra.mxu0 0.0
      %298 = vmatprep.subr.mxu0 0.0
      %299 = vmatpush1.msra.mxu0 0.0
      %300 = vmatprep.subr.mxu0 0.0
      %301 = vmatpush1.msra.mxu0 0.0
      %302 = vmatprep.subr.mxu0 0.0
      %303 = vmatpush1.msra.mxu0 0.0
      %304 = vmatprep.subr.mxu0 0.0
      %305 = vmatpush1.msra.mxu0 0.0
      %306 = vmatprep.subr.mxu0 0.0
      %307 = vmatpush1.msra.mxu0 0.0
      %308 = vmatprep.subr.mxu0 0.0
      %309 = vmatpush1.msra.mxu0 0.0
      %310 = vmatprep.subr.mxu0 0.0
      %311 = vmatpush1.msra.mxu0 0.0
      %312 = vmatprep.subr.mxu0 0.0
      %313 = vmatpush1.msra.mxu0 0.0
      %314 = vmatprep.subr.mxu0 0.0
      %315 = vmatpush1.msra.mxu0 0.0
      %316 = vmatprep.subr.mxu0 0.0
      %317 = vmatpush1.msra.mxu0 0.0
      %318 = vmatprep.subr.mxu0 0.0
      %319 = vmatpush1.msra.mxu0 0.0
      %320 = vmatprep.subr.mxu0 0.0
      %321 = vmatpush1.msra.mxu0 0.0
      %322 = vmatprep.subr.mxu0 0.0
      %323 = vmatpush1.msra.mxu0 0.0
      %324 = vmatprep.subr.mxu0 0.0
      %325 = vmatpush1.msra.mxu0 0.0
      %326 = vmatprep.subr.mxu0 0.0
      %327 = vmatpush1.msra.mxu0 0.0
      %328 = vmatprep.subr.mxu0 0.0
      %329 = vmatpush1.msra.mxu0 0.0
      %330 = vmatprep.subr.mxu0 0.0
      %331 = vmatpush1.msra.mxu0 0.0
      %332 = vmatprep.subr.mxu0 0.0
      %333 = vmatpush1.msra.mxu0 0.0
      %334 = vmatprep.subr.mxu0 0.0
      %335 = vmatpush1.msra.mxu0 0.0
      %336 = vmatprep.subr.mxu0 0.0
      %337 = vmatpush1.msra.mxu0 0.0
      %338 = vmatprep.subr.mxu0 0.0
      %339 = vmatpush1.msra.mxu0 0.0
      %340 = vmatprep.subr.mxu0 0.0
      %341 = vmatpush1.msra.mxu0 0.0
      %342 = vmatprep.subr.mxu0 0.0
      %343 = vmatpush1.msra.mxu0 0.0
      %344 = vmatprep.subr.mxu0 0.0
      %345 = vmatpush1.msra.mxu0 0.0
      %346 = vmatprep.subr.mxu0 0.0
      %347 = vmatpush1.msra.mxu0 0.0
      %348 = vmatprep.subr.mxu0 0.0
      %349 = vmatpush1.msra.mxu0 0.0
      %350 = vmatprep.mubr.f32.mxu0 0.0
      %351 = vmatmul.mubr.f32.gmra.mrb[0].mxu0 %v186
      %v352 = vpop.f32.mrb[0].mxu0
      %v353 = vadd.f32 0.0, %v352
      %v354 = vpop.f32.mrb[0].mxu0
      %v355 = vadd.f32 0.0, %v354
      %356 = vmatprep.mubr.f32.mxu0 0.0
      %357 = vmatmul.mubr.f32.gmra.mrb[0].mxu0 %v189
      %v358 = vpop.f32.mrb[0].mxu0
      %v359 = vadd.f32 0.0, %v358
      %v360 = vpop.f32.mrb[0].mxu0
      %v361 = vadd.f32 0.0, %v360
      %362 = vmatprep.mubr.f32.mxu0 0.0
      %363 = vmatmul.mubr.f32.gmra.mrb[0].mxu0 %v192
      %v364 = vpop.f32.mrb[0].mxu0
      %v365 = vadd.f32 0.0, %v364
      %v366 = vpop.f32.mrb[0].mxu0
      %v367 = vadd.f32 0.0, %v366
      %368 = vmatprep.mubr.f32.mxu0 0.0
      %369 = vmatmul.mubr.f32.gmra.mrb[0].mxu0 %v195
      %v370 = vpop.f32.mrb[0].mxu0
      %v371 = vadd.f32 0.0, %v370
      %v372 = vpop.f32.mrb[0].mxu0
      %v373 = vadd.f32 0.0, %v372
      %374 = vdwg.mxu0
      %v375 = vadd.f32 %v264, %v266
      %v376 = vadd.f32 %v375, %v353
      %v377 = vadd.f32 %v376, %v355
      %378 = vadd.xlane.f32.xlu0 %v377
      %v379 = vpop.xlane.xlu0 %378
      %v380 = vadd.f32 %v270, %v272
      %v381 = vadd.f32 %v380, %v359
      %v382 = vadd.f32 %v381, %v361
      %383 = vadd.xlane.f32.xlu0 %v382
      %v384 = vpop.xlane.xlu0 %383
      %v385 = vadd.f32 %v276, %v278
      %v386 = vadd.f32 %v385, %v365
      %v387 = vadd.f32 %v386, %v367
      %388 = vadd.xlane.f32.xlu0 %v387
      %v389 = vpop.xlane.xlu0 %388
      %v390 = vadd.f32 %v282, %v284
      %v391 = vadd.f32 %v390, %v371
      %v392 = vadd.f32 %v391, %v373
      %393 = vadd.xlane.f32.xlu0 %v392
      %v394 = vpop.xlane.xlu0 %393
      %v395 = vmul.f32 %v264, %v264
      %v396 = vmul.f32 %v266, %v266
      %v397 = vmul.f32 %v353, %v353
      %v398 = vmul.f32 %v355, %v355
      %v399 = vmul.f32 %v270, %v270
      %v400 = vmul.f32 %v272, %v272
      %v401 = vmul.f32 %v359, %v359
      %v402 = vmul.f32 %v361, %v361
      %v403 = vmul.f32 %v276, %v276
      %v404 = vmul.f32 %v278, %v278
      %v405 = vmul.f32 %v365, %v365
      %v406 = vmul.f32 %v367, %v367
      %v407 = vmul.f32 %v282, %v282
      %v408 = vmul.f32 %v284, %v284
      %v409 = vmul.f32 %v371, %v371
      %v410 = vmul.f32 %v373, %v373
      %v411 = vadd.f32 %v395, %v396
      %v412 = vadd.f32 %v411, %v397
      %v413 = vadd.f32 %v412, %v398
      %414 = vadd.xlane.f32.xlu0 %v413
      %v415 = vpop.xlane.xlu0 %414
      %v416 = vadd.f32 %v399, %v400
      %v417 = vadd.f32 %v416, %v401
      %v418 = vadd.f32 %v417, %v402
      %419 = vadd.xlane.f32.xlu0 %v418
      %v420 = vpop.xlane.xlu0 %419
      %v421 = vadd.f32 %v403, %v404
      %v422 = vadd.f32 %v421, %v405
      %v423 = vadd.f32 %v422, %v406
      %424 = vadd.xlane.f32.xlu0 %v423
      %v425 = vpop.xlane.xlu0 %424
      %v426 = vadd.f32 %v407, %v408
      %v427 = vadd.f32 %v426, %v409
      %v428 = vadd.f32 %v427, %v410
      %429 = vadd.xlane.f32.xlu0 %v428
      %v430 = vpop.xlane.xlu0 %429
      %vm431 = vcmask 7168
      %v432 = vsel %vm431, %v379, %v415
      %v433 = vsel %vm431, %v384, %v420
      %v434 = vsel %vm431, %v389, %v425
      %v435 = vsel %vm431, %v394, %v430
      %p436 = scmp.eq.s32.totalorder %s18, 0
      // Predicated region
      $region29: #{up_forward.2} parent=27 // pred_check
        %p437 = pneg %p436
      $region30: #{up_forward.2} parent=27 // pred_check_branch
        %439 = sbr.rel (%p437) target = $region32
      $region31: #{up_forward.2} parent=27 // pred_region
        %vm440 = vcmask 15360
        %441 = vst.msk [vmem:[%s171] sm:$0xff] %vm440, %v432
        %442 = vst.msk [vmem:[%s171 + $0x8] sm:$0xff] %vm440, %v433
        %443 = vst.msk [vmem:[%s171 + $0x10] sm:$0xff] %vm440, %v434
        %444 = vst.msk [vmem:[%s171 + $0x18] sm:$0xff] %vm440, %v435
      $region32: #{up_forward.2} parent=27 // pred_fallthru
        _
      %p445 = scmp.gt.s32.totalorder %s18, 0
      // Predicated region
      $region33: #{up_forward.2} parent=27 // pred_check
        %p446 = pneg %p445
      $region34: #{up_forward.2} parent=27 // pred_check_branch
        %448 = sbr.rel (%p446) target = $region36
      $region35: #{up_forward.2} parent=27 // pred_region
        %v449 = vld [vmem:[%s171] sm:$0xff]
        %v450 = vld [vmem:[%s171 + $0x8] sm:$0xff]
        %v451 = vld [vmem:[%s171 + $0x10] sm:$0xff]
        %v452 = vld [vmem:[%s171 + $0x18] sm:$0xff]
        %v453 = vadd.f32 %v449, %v432
        %v454 = vadd.f32 %v450, %v433
        %v455 = vadd.f32 %v451, %v434
        %v456 = vadd.f32 %v452, %v435
        %vm457 = vcmask 15360
        %458 = vst.msk [vmem:[%s171] sm:$0xff] %vm457, %v453
        %459 = vst.msk [vmem:[%s171 + $0x8] sm:$0xff] %vm457, %v454
        %460 = vst.msk [vmem:[%s171 + $0x10] sm:$0xff] %vm457, %v455
        %461 = vst.msk [vmem:[%s171 + $0x18] sm:$0xff] %vm457, %v456
      $region36: #{up_forward.2} parent=27 // pred_fallthru
        _
      %p462 = scmp.lt.s32.totalorder %s17, 1
      %s463 = scalar_select %p462, %s17, 1
      %s464 = smul.addr %s463, 4
      %s465 = smul.addr %s464, 8
      %s466 = scalar_lea.vmem %s2, %s465
      // Predicated region
      $region37: #{up_forward.2} parent=27 // pred_check
        %p467 = pneg %p92
      $region38: #{up_forward.2} parent=27 // pred_check_branch
        %469 = sbr.rel (%p467) target = $region40
      $region39: #{up_forward.2} parent=27 // pred_region
        _
      $region40: #{up_forward.2} parent=27 // pred_fallthru
        _
    $region28: #{up_forward.2} parent=5 // pred_fallthru
      _
    %p470 = scmp.le.s32.totalorder 2, %s8
    // Predicated region
    $region41: #{up_forward.2} parent=5 // pred_check
      %p471 = pneg %p470
    $region42: #{up_forward.2} parent=5 // pred_check_branch
      %473 = sbr.rel (%p471) target = $region44
    $region43: #{up_forward.2} parent=5 // pred_region
      %s474 = ssub.s32 %s8, 2
      // Predicated region
      $region45: #{up_forward.2} parent=43 // pred_check
        %p475 = pneg %p98
      $region46: #{up_forward.2} parent=43 // pred_check_branch
        %477 = sbr.rel (%p475) target = $region48
      $region47: #{up_forward.2} parent=43 // pred_region
        %p478 = scmp.lt.s32.totalorder %s19, 1
        %s479 = scalar_select %p478, %s19, 1
        %s480 = smul.addr %s479, 4
        %s481 = smul.addr %s480, 8
        %s482 = scalar_lea.vmem %s2, %s481
      $region48: #{up_forward.2} parent=43 // pred_fallthru
        _
    $region44: #{up_forward.2} parent=5 // pred_fallthru
      _
  $region6: #{up_forward.2} parent=0 // loop_footer
    %s12 = sadd.s32 1, %s8
  $region7: #{up_forward.2} parent=0 // loop_footer_branch
    %7 = sbr.rel target = $region3
  $region8: #{up_forward.2} parent=0 // loop_exit
    _

// kernel: up_forward.3
$region0: #{up_forward.3}
  #allocation0 [shape = 'u32[]', space=smem, size = 0x4, offset = 0x4, fixed_abs, tag = 'smem constant byte address 0x4 - core index']
  #allocation1 [shape = 'u32[144,128]{1,0:T(1,128)}', space=vmem, size = 0x12000, scoped, tag = 'internal scratch']
  %s0 = inlined_call_operand.vmem [shape: f32[2,16,512], index: 0, kind: input, shape index: {}]
  %s1 = inlined_call_operand.vmem [shape: f32[32,16], index: 1, kind: input, shape index: {}]
  %s2 = inlined_call_operand.vmem [shape: f32[32,1], index: 2, kind: input, shape index: {}]
  %s3 = inlined_call_operand.vmem [shape: f32[32,1], index: 3, kind: input, shape index: {}]
  %s4 = inlined_call_operand.vmem [shape: f32[2,8,16,64], index: 4, kind: output, shape index: {}]
  %s5 = sld [smem:[#allocation0]]
  $region49: #{up_forward.3} parent=0
    _
  %s7 = ssub.s32 1, %s5
  %s8 = scalar_select 0, %s7, %s5
  loop: start=0, step=1, limit=4
  $region2: #{up_forward.3} parent=0 // loop_pre_header
    _
  $region3: #{up_forward.3} parent=0 // loop_header
    %s10 = sphi 0, %s14
    %p11 = scmp.ge.s32.totalorder %s10, 4
    %s17 = sphi 0, %s29
    %s18 = sphi 0, %s25
    %s19 = sphi 0, %s17
    %s20 = sphi 0, %s18
    %s21 = sphi 0, %s19
    %s22 = sphi 0, %s20
    %s34 = sphi 0, %s36
    %s37 = sphi 0, %s34
    %s38 = sphi 0, %s37
    %s54 = sphi 0, %s38
    %s58 = sphi 0, %s58
    %s60 = sphi 0, %s58
    %s61 = sphi 0, %s60
    %s75 = sphi 0, %s61
    %s79 = sphi 0, %s79
    %s81 = sphi 0, %s79
    %s82 = sphi 0, %s81
    %s96 = sphi 0, %s82
    %s100 = sphi 0, %s100
    %s102 = sphi 0, %s100
    %s103 = sphi 0, %s102
    %s117 = sphi 0, %s103
    %s125 = sphi 0, %s127
    %s128 = sphi 0, %s125
    %s129 = sphi 0, %s128
    %s145 = sphi 0, %s129
  $region4: #{up_forward.3} parent=0 // loop_header_branch
    %13 = sbr.rel (%p11) target = $region8
  $region5: #{up_forward.3} parent=0 // loop_body
    %s15 = ssub.s32 %s10, 1
    %s16 = ssub.s32 %s10, 2
    %s23 = sadd.s32 1, %s18
    %p24 = scmp.ge.s32.totalorder %s23, 1
    %s25 = scalar_select %p24, 0, %s23
    %s26 = sadd.s32 1, %s17
    %s27 = scalar_select %p24, %s26, %s17
    %p28 = scmp.ge.s32.totalorder %s27, 2
    %s29 = scalar_select %p28, 0, %s27
    %s30 = ssub.s32 %s17, %s29
    %s31 = ssub.s32 %s18, %s25
    %s32 = sor.u32 %s30, %s31
    %p33 = scmp.eq.s32.totalorder %s32, 0
    %s35 = sadd.s32 %s34, 1
    %s36 = scalar_select %p33, %s34, %s35
    %p39 = pneg %p33
    %p40 = scmp.eq.s32.totalorder %s10, 1
    %p41 = por %p39, %p40
    %p42 = scmp.ne.s32.totalorder %s34, %s37
    %p43 = scmp.eq.s32.totalorder %s10, 0
    %p44 = por %p42, %p43
    %p45 = scmp.ne.s32.totalorder %s34, %s37
    %p46 = scmp.eq.s32.totalorder %s15, 1
    %p47 = por %p45, %p46
    %p48 = scmp.ne.s32.totalorder %s37, %s38
    %p49 = scmp.eq.s32.totalorder %s15, 0
    %p50 = por %p48, %p49
    %p51 = scmp.ne.s32.totalorder %s37, %s38
    %p52 = scmp.eq.s32.totalorder %s16, 1
    %p53 = por %p51, %p52
    %p55 = scmp.ne.s32.totalorder %s38, %s54
    %p56 = scmp.eq.s32.totalorder %s16, 0
    %p57 = por %p55, %p56
    %s59 = sadd.s32 %s58, 1
    %p62 = scmp.eq.s32.totalorder %s10, 1
    %p63 = scmp.ne.s32.totalorder %s58, %s60
    %p64 = scmp.eq.s32.totalorder %s10, 0
    %p65 = por %p63, %p64
    %p66 = scmp.ne.s32.totalorder %s58, %s60
    %p67 = scmp.eq.s32.totalorder %s15, 1
    %p68 = por %p66, %p67
    %p69 = scmp.ne.s32.totalorder %s60, %s61
    %p70 = scmp.eq.s32.totalorder %s15, 0
    %p71 = por %p69, %p70
    %p72 = scmp.ne.s32.totalorder %s60, %s61
    %p73 = scmp.eq.s32.totalorder %s16, 1
    %p74 = por %p72, %p73
    %p76 = scmp.ne.s32.totalorder %s61, %s75
    %p77 = scmp.eq.s32.totalorder %s16, 0
    %p78 = por %p76, %p77
    %s80 = sadd.s32 %s79, 1
    %p83 = scmp.eq.s32.totalorder %s10, 1
    %p84 = scmp.ne.s32.totalorder %s79, %s81
    %p85 = scmp.eq.s32.totalorder %s10, 0
    %p86 = por %p84, %p85
    %p87 = scmp.ne.s32.totalorder %s79, %s81
    %p88 = scmp.eq.s32.totalorder %s15, 1
    %p89 = por %p87, %p88
    %p90 = scmp.ne.s32.totalorder %s81, %s82
    %p91 = scmp.eq.s32.totalorder %s15, 0
    %p92 = por %p90, %p91
    %p93 = scmp.ne.s32.totalorder %s81, %s82
    %p94 = scmp.eq.s32.totalorder %s16, 1
    %p95 = por %p93, %p94
    %p97 = scmp.ne.s32.totalorder %s82, %s96
    %p98 = scmp.eq.s32.totalorder %s16, 0
    %p99 = por %p97, %p98
    %s101 = sadd.s32 %s100, 1
    %p104 = scmp.eq.s32.totalorder %s10, 1
    %p105 = scmp.ne.s32.totalorder %s100, %s102
    %p106 = scmp.eq.s32.totalorder %s10, 0
    %p107 = por %p105, %p106
    %p108 = scmp.ne.s32.totalorder %s100, %s102
    %p109 = scmp.eq.s32.totalorder %s15, 1
    %p110 = por %p108, %p109
    %p111 = scmp.ne.s32.totalorder %s102, %s103
    %p112 = scmp.eq.s32.totalorder %s15, 0
    %p113 = por %p111, %p112
    %p114 = scmp.ne.s32.totalorder %s102, %s103
    %p115 = scmp.eq.s32.totalorder %s16, 1
    %p116 = por %p114, %p115
    %p118 = scmp.ne.s32.totalorder %s103, %s117
    %p119 = scmp.eq.s32.totalorder %s16, 0
    %p120 = por %p118, %p119
    %s121 = ssub.s32 %s17, %s29
    %s122 = ssub.s32 %s18, %s25
    %s123 = sor.u32 %s121, %s122
    %p124 = scmp.eq.s32.totalorder %s123, 0
    %s126 = sadd.s32 %s125, 1
    %s127 = scalar_select %p124, %s125, %s126
    %p130 = pneg %p124
    %p131 = scmp.eq.s32.totalorder %s10, 1
    %p132 = por %p130, %p131
    %p133 = scmp.ne.s32.totalorder %s125, %s128
    %p134 = scmp.eq.s32.totalorder %s10, 0
    %p135 = por %p133, %p134
    %p136 = scmp.ne.s32.totalorder %s125, %s128
    %p137 = scmp.eq.s32.totalorder %s15, 1
    %p138 = por %p136, %p137
    %p139 = scmp.ne.s32.totalorder %s128, %s129
    %p140 = scmp.eq.s32.totalorder %s15, 0
    %p141 = por %p139, %p140
    %p142 = scmp.ne.s32.totalorder %s128, %s129
    %p143 = scmp.eq.s32.totalorder %s16, 1
    %p144 = por %p142, %p143
    %p146 = scmp.ne.s32.totalorder %s129, %s145
    %p147 = scmp.eq.s32.totalorder %s16, 0
    %p148 = por %p146, %p147
    %p149 = scmp.le.s32.totalorder 1, %s10
    %p150 = scmp.lt.s32.totalorder %s10, 3
    %p151 = pnand %p149, %p150
    %p152 = pneg %p151
    // Predicated region
    $region9: #{up_forward.3} parent=5 // pred_check
      _
    $region10: #{up_forward.3} parent=5 // pred_check_branch
      %154 = sbr.rel (%p151) target = $region12
    $region11: #{up_forward.3} parent=5 // pred_region
      %s155 = ssub.s32 %s10, 1
      // Predicated region
      $region13: #{up_forward.3} parent=11 // pred_check
        %p156 = pneg %p71
      $region14: #{up_forward.3} parent=11 // pred_check_branch
        %158 = sbr.rel (%p156) target = $region16
      $region15: #{up_forward.3} parent=11 // pred_region
        _
      $region16: #{up_forward.3} parent=11 // pred_fallthru
        _
      // Predicated region
      $region17: #{up_forward.3} parent=11 // pred_check
        %p159 = pneg %p92
      $region18: #{up_forward.3} parent=11 // pred_check_branch
        %161 = sbr.rel (%p159) target = $region20
      $region19: #{up_forward.3} parent=11 // pred_region
        _
      $region20: #{up_forward.3} parent=11 // pred_fallthru
        _
      // Predicated region
      $region21: #{up_forward.3} parent=11 // pred_check
        %p162 = pneg %p113
      $region22: #{up_forward.3} parent=11 // pred_check_branch
        %164 = sbr.rel (%p162) target = $region24
      $region23: #{up_forward.3} parent=11 // pred_region
        _
      $region24: #{up_forward.3} parent=11 // pred_fallthru
        _
    $region12: #{up_forward.3} parent=5 // pred_fallthru
      _
    %p165 = scmp.lt.s32.totalorder %s10, 2
    // Predicated region
    $region25: #{up_forward.3} parent=5 // pred_check
      %p166 = pneg %p165
    $region26: #{up_forward.3} parent=5 // pred_check_branch
      %168 = sbr.rel (%p166) target = $region28
    $region27: #{up_forward.3} parent=5 // pred_region
      // Predicated region
      $region29: #{up_forward.3} parent=27 // pred_check
        %p169 = pneg %p44
      $region30: #{up_forward.3} parent=27 // pred_check_branch
        %171 = sbr.rel (%p169) target = $region32
      $region31: #{up_forward.3} parent=27 // pred_region
        %s172 = smul.u32 4, %s18
        %p173 = scmp.lt.s32.totalorder %s17, 1
        %s174 = scalar_select %p173, %s17, 1
        %p175 = scmp.lt.s32.totalorder %s172, 3
        %s176 = scalar_select %p175, %s172, 3
        %s177 = smul.addr %s174, 8
        %s178 = sadd.s32 %s176, %s177
        %s179 = smul.addr %s178, 8
        %s180 = scalar_lea.vmem %s0, %s179
        %s181 = smul.u32 4, %s18
      $region32: #{up_forward.3} parent=27 // pred_fallthru
        _
    $region28: #{up_forward.3} parent=5 // pred_fallthru
      _
    %p182 = scmp.le.s32.totalorder 1, %s10
    %p183 = scmp.lt.s32.totalorder %s10, 3
    %p184 = pnand %p182, %p183
    %p185 = pneg %p184
    // Predicated region
    $region33: #{up_forward.3} parent=5 // pred_check
      _
    $region34: #{up_forward.3} parent=5 // pred_check_branch
      %187 = sbr.rel (%p184) target = $region36
    $region35: #{up_forward.3} parent=5 // pred_region
      %s188 = ssub.s32 %s10, 1
      %s189 = smul.u32 4, %s20
      %p190 = scmp.lt.s32.totalorder %s19, 1
      %s191 = scalar_select %p190, %s19, 1
      %p192 = scmp.lt.s32.totalorder %s189, 3
      %s193 = scalar_select %p192, %s189, 3
      %s194 = smul.addr %s191, 8
      %s195 = sadd.s32 %s193, %s194
      %s196 = smul.addr %s195, 8
      %s197 = scalar_lea.vmem %s0, %s196
      %p198 = pneg %p50
      %p199 = pneg %p47
      %p200 = pneg %p71
      %p201 = pneg %p68
      %p202 = pneg %p92
      %p203 = pneg %p89
      %p204 = pneg %p113
      %p205 = pneg %p110
      %p206 = pneg %p141
      %p207 = pneg %p138
      %s208 = smul.u32 2, %s20
      %p209 = scmp.lt.s32.totalorder %s19, 1
      %s210 = scalar_select %p209, %s19, 1
      %p211 = scmp.lt.s32.totalorder %s208, 1
      %s212 = scalar_select %p211, %s208, 1
      %s213 = smul.addr %s210, 16
      %s214 = sadd.s32 %s212, %s213
      %s215 = smul.addr %s214, 8
      %s216 = scalar_lea.vmem %s4, %s215
      %s217 = smul.u32 4, %s20
      %p218 = scmp.lt.s32.totalorder %s19, 1
      %s219 = scalar_select %p218, %s19, 1
      %p220 = scmp.lt.s32.totalorder %s217, 3
      %s221 = scalar_select %p220, %s217, 3
      %s222 = smul.addr %s219, 8
      %s223 = sadd.s32 %s221, %s222
      %s224 = smul.addr %s223, 8
      %s225 = scalar_lea.vmem %s0, %s224
      %s226 = smul.u32 4, %s20
      %s227 = smul.u32 2, %s20
      %p228 = scmp.lt.s32.totalorder %s19, 1
      %s229 = scalar_select %p228, %s19, 1
      %p230 = scmp.lt.s32.totalorder %s227, 1
      %s231 = scalar_select %p230, %s227, 1
      %s232 = smul.addr %s229, 16
      %s233 = sadd.s32 %s231, %s232
      %s234 = smul.addr %s233, 8
      %s235 = scalar_lea.vmem %s4, %s234
      %s236 = smul.u32 2, %s20
      %v237 = vld [vmem:[%s225] sm:$0xff]
      %v238 = vld [vmem:[%s225 + $0x8] sm:$0xff]
      %v239 = vld [vmem:[%s225 + $0x10] sm:$0xff]
      %v240 = vld [vmem:[%s225 + $0x18] sm:$0xff]
      %v241 = vld [vmem:[%s225 + $0x20] sm:$0xff]
      %v242 = vld [vmem:[%s225 + $0x28] sm:$0xff]
      %v243 = vld [vmem:[%s225 + $0x30] sm:$0xff]
      %v244 = vld [vmem:[%s225 + $0x38] sm:$0xff]
      %v245 = vld [vmem:[%s1] sm:$0xff]
      %v246 = vld [vmem:[%s1 + $0x8] sm:$0xff]
      %v247 = vld [vmem:[%s1 + $0x10] sm:$0xff]
      %v248 = vld [vmem:[%s1 + $0x18] sm:$0xff]
      %vm249 = vcmask 130048
      %v251 = vsel %vm249, %v245, 0
      %v254 = vsel %vm249, %v246, 0
      %v257 = vsel %vm249, %v247, 0
      %v260 = vsel %vm249, %v248, 0
      %262 = vmatprep.subr.mxu0 %v238
      %263 = vmatpush1.msra.mxu0 %v237
      %264 = vmatprep.subr.mxu0 %v242
      %265 = vmatpush1.msra.mxu0 %v241
      %266 = vmatprep.subr.mxu0 0.0
      %267 = vmatpush1.msra.mxu0 0.0
      %268 = vmatprep.subr.mxu0 0.0
      %269 = vmatpush1.msra.mxu0 0.0
      %270 = vmatprep.subr.mxu0 0.0
      %271 = vmatpush1.msra.mxu0 0.0
      %272 = vmatprep.subr.mxu0 0.0
      %273 = vmatpush1.msra.mxu0 0.0
      %274 = vmatprep.subr.mxu0 0.0
      %275 = vmatpush1.msra.mxu0 0.0
      %276 = vmatprep.subr.mxu0 0.0
      %277 = vmatpush1.msra.mxu0 0.0
      %278 = vmatprep.subr.mxu0 0.0
      %279 = vmatpush1.msra.mxu0 0.0
      %280 = vmatprep.subr.mxu0 0.0
      %281 = vmatpush1.msra.mxu0 0.0
      %282 = vmatprep.subr.mxu0 0.0
      %283 = vmatpush1.msra.mxu0 0.0
      %284 = vmatprep.subr.mxu0 0.0
      %285 = vmatpush1.msra.mxu0 0.0
      %286 = vmatprep.subr.mxu0 0.0
      %287 = vmatpush1.msra.mxu0 0.0
      %288 = vmatprep.subr.mxu0 0.0
      %289 = vmatpush1.msra.mxu0 0.0
      %290 = vmatprep.subr.mxu0 0.0
      %291 = vmatpush1.msra.mxu0 0.0
      %292 = vmatprep.subr.mxu0 0.0
      %293 = vmatpush1.msra.mxu0 0.0
      %294 = vmatprep.subr.mxu0 0.0
      %295 = vmatpush1.msra.mxu0 0.0
      %296 = vmatprep.subr.mxu0 0.0
      %297 = vmatpush1.msra.mxu0 0.0
      %298 = vmatprep.subr.mxu0 0.0
      %299 = vmatpush1.msra.mxu0 0.0
      %300 = vmatprep.subr.mxu0 0.0
      %301 = vmatpush1.msra.mxu0 0.0
      %302 = vmatprep.subr.mxu0 0.0
      %303 = vmatpush1.msra.mxu0 0.0
      %304 = vmatprep.subr.mxu0 0.0
      %305 = vmatpush1.msra.mxu0 0.0
      %306 = vmatprep.subr.mxu0 0.0
      %307 = vmatpush1.msra.mxu0 0.0
      %308 = vmatprep.subr.mxu0 0.0
      %309 = vmatpush1.msra.mxu0 0.0
      %310 = vmatprep.subr.mxu0 0.0
      %311 = vmatpush1.msra.mxu0 0.0
      %312 = vmatprep.subr.mxu0 0.0
      %313 = vmatpush1.msra.mxu0 0.0
      %314 = vmatprep.subr.mxu0 0.0
      %315 = vmatpush1.msra.mxu0 0.0
      %316 = vmatprep.subr.mxu0 0.0
      %317 = vmatpush1.msra.mxu0 0.0
      %318 = vmatprep.subr.mxu0 0.0
      %319 = vmatpush1.msra.mxu0 0.0
      %320 = vmatprep.subr.mxu0 0.0
      %321 = vmatpush1.msra.mxu0 0.0
      %322 = vmatprep.subr.mxu0 0.0
      %323 = vmatpush1.msra.mxu0 0.0
      %324 = vmatprep.subr.mxu0 0.0
      %325 = vmatpush1.msra.mxu0 0.0
      %326 = vmatprep.mubr.f32.mxu0 0.0
      %327 = vmatmul.mubr.f32.gmra.mrb[0].mxu0 %v251
      %v328 = vpop.f32.mrb[0].mxu0
      %v329 = vadd.f32 0.0, %v328
      %v330 = vpop.f32.mrb[0].mxu0
      %v331 = vadd.f32 0.0, %v330
      %332 = vmatprep.mubr.f32.mxu0 0.0
      %333 = vmatmul.mubr.f32.gmra.mrb[0].mxu0 %v254
      %v334 = vpop.f32.mrb[0].mxu0
      %v335 = vadd.f32 0.0, %v334
      %v336 = vpop.f32.mrb[0].mxu0
      %v337 = vadd.f32 0.0, %v336
      %338 = vmatprep.mubr.f32.mxu0 0.0
      %339 = vmatmul.mubr.f32.gmra.mrb[0].mxu0 %v257
      %v340 = vpop.f32.mrb[0].mxu0
      %v341 = vadd.f32 0.0, %v340
      %v342 = vpop.f32.mrb[0].mxu0
      %v343 = vadd.f32 0.0, %v342
      %344 = vmatprep.mubr.f32.mxu0 0.0
      %345 = vmatmul.mubr.f32.gmra.mrb[0].mxu0 %v260
      %v346 = vpop.f32.mrb[0].mxu0
      %v347 = vadd.f32 0.0, %v346
      %v348 = vpop.f32.mrb[0].mxu0
      %v349 = vadd.f32 0.0, %v348
      %350 = vdwg.mxu0
      %351 = vmatprep.subr.mxu0 %v240
      %352 = vmatpush1.msra.mxu0 %v239
      %353 = vmatprep.subr.mxu0 %v244
      %354 = vmatpush1.msra.mxu0 %v243
      %355 = vmatprep.subr.mxu0 0.0
      %356 = vmatpush1.msra.mxu0 0.0
      %357 = vmatprep.subr.mxu0 0.0
      %358 = vmatpush1.msra.mxu0 0.0
      %359 = vmatprep.subr.mxu0 0.0
      %360 = vmatpush1.msra.mxu0 0.0
      %361 = vmatprep.subr.mxu0 0.0
      %362 = vmatpush1.msra.mxu0 0.0
      %363 = vmatprep.subr.mxu0 0.0
      %364 = vmatpush1.msra.mxu0 0.0
      %365 = vmatprep.subr.mxu0 0.0
      %366 = vmatpush1.msra.mxu0 0.0
      %367 = vmatprep.subr.mxu0 0.0
      %368 = vmatpush1.msra.mxu0 0.0
      %369 = vmatprep.subr.mxu0 0.0
      %370 = vmatpush1.msra.mxu0 0.0
      %371 = vmatprep.subr.mxu0 0.0
      %372 = vmatpush1.msra.mxu0 0.0
      %373 = vmatprep.subr.mxu0 0.0
      %374 = vmatpush1.msra.mxu0 0.0
      %375 = vmatprep.subr.mxu0 0.0
      %376 = vmatpush1.msra.mxu0 0.0
      %377 = vmatprep.subr.mxu0 0.0
      %378 = vmatpush1.msra.mxu0 0.0
      %379 = vmatprep.subr.mxu0 0.0
      %380 = vmatpush1.msra.mxu0 0.0
      %381 = vmatprep.subr.mxu0 0.0
      %382 = vmatpush1.msra.mxu0 0.0
      %383 = vmatprep.subr.mxu0 0.0
      %384 = vmatpush1.msra.mxu0 0.0
      %385 = vmatprep.subr.mxu0 0.0
      %386 = vmatpush1.msra.mxu0 0.0
      %387 = vmatprep.subr.mxu0 0.0
      %388 = vmatpush1.msra.mxu0 0.0
      %389 = vmatprep.subr.mxu0 0.0
      %390 = vmatpush1.msra.mxu0 0.0
      %391 = vmatprep.subr.mxu0 0.0
      %392 = vmatpush1.msra.mxu0 0.0
      %393 = vmatprep.subr.mxu0 0.0
      %394 = vmatpush1.msra.mxu0 0.0
      %395 = vmatprep.subr.mxu0 0.0
      %396 = vmatpush1.msra.mxu0 0.0
      %397 = vmatprep.subr.mxu0 0.0
      %398 = vmatpush1.msra.mxu0 0.0
      %399 = vmatprep.subr.mxu0 0.0
      %400 = vmatpush1.msra.mxu0 0.0
      %401 = vmatprep.subr.mxu0 0.0
      %402 = vmatpush1.msra.mxu0 0.0
      %403 = vmatprep.subr.mxu0 0.0
      %404 = vmatpush1.msra.mxu0 0.0
      %405 = vmatprep.subr.mxu0 0.0
      %406 = vmatpush1.msra.mxu0 0.0
      %407 = vmatprep.subr.mxu0 0.0
      %408 = vmatpush1.msra.mxu0 0.0
      %409 = vmatprep.subr.mxu0 0.0
      %410 = vmatpush1.msra.mxu0 0.0
      %411 = vmatprep.subr.mxu0 0.0
      %412 = vmatpush1.msra.mxu0 0.0
      %413 = vmatprep.subr.mxu0 0.0
      %414 = vmatpush1.msra.mxu0 0.0
      %415 = vmatprep.mubr.f32.mxu0 0.0
      %416 = vmatmul.mubr.f32.gmra.mrb[0].mxu0 %v251
      %v417 = vpop.f32.mrb[0].mxu0
      %v418 = vadd.f32 0.0, %v417
      %v419 = vpop.f32.mrb[0].mxu0
      %v420 = vadd.f32 0.0, %v419
      %421 = vmatprep.mubr.f32.mxu0 0.0
      %422 = vmatmul.mubr.f32.gmra.mrb[0].mxu0 %v254
      %v423 = vpop.f32.mrb[0].mxu0
      %v424 = vadd.f32 0.0, %v423
      %v425 = vpop.f32.mrb[0].mxu0
      %v426 = vadd.f32 0.0, %v425
      %427 = vmatprep.mubr.f32.mxu0 0.0
      %428 = vmatmul.mubr.f32.gmra.mrb[0].mxu0 %v257
      %v429 = vpop.f32.mrb[0].mxu0
      %v430 = vadd.f32 0.0, %v429
      %v431 = vpop.f32.mrb[0].mxu0
      %v432 = vadd.f32 0.0, %v431
      %433 = vmatprep.mubr.f32.mxu0 0.0
      %434 = vmatmul.mubr.f32.gmra.mrb[0].mxu0 %v260
      %v435 = vpop.f32.mrb[0].mxu0
      %v436 = vadd.f32 0.0, %v435
      %v437 = vpop.f32.mrb[0].mxu0
      %v438 = vadd.f32 0.0, %v437
      %439 = vdwg.mxu0
      %v440 = vld [vmem:[%s2] sm:$0xff]
      %v441 = vld [vmem:[%s2 + $0x8] sm:$0xff]
      %v442 = vld [vmem:[%s2 + $0x10] sm:$0xff]
      %v443 = vld [vmem:[%s2 + $0x18] sm:$0xff]
      %445 = vset.pattern.permute.xlu0 0
      %446 = vperm.xlu0 %445, %v440
      %v447 = vpop.permute.xlu0 %446
      %450 = vset.pattern.permute.xlu0 0
      %451 = vperm.xlu0 %450, %v441
      %v452 = vpop.permute.xlu0 %451
      %455 = vset.pattern.permute.xlu0 0
      %456 = vperm.xlu0 %455, %v442
      %v457 = vpop.permute.xlu0 %456
      %460 = vset.pattern.permute.xlu0 0
      %461 = vperm.xlu0 %460, %v443
      %v462 = vpop.permute.xlu0 %461
      %v464 = vmul.f32 %v329, %v447
      %v465 = vmul.f32 %v331, %v447
      %v466 = vmul.f32 %v418, %v447
      %v467 = vmul.f32 %v420, %v447
      %v468 = vmul.f32 %v335, %v452
      %v469 = vmul.f32 %v337, %v452
      %v470 = vmul.f32 %v424, %v452
      %v471 = vmul.f32 %v426, %v452
      %v472 = vmul.f32 %v341, %v457
      %v473 = vmul.f32 %v343, %v457
      %v474 = vmul.f32 %v430, %v457
      %v475 = vmul.f32 %v432, %v457
      %v476 = vmul.f32 %v347, %v462
      %v477 = vmul.f32 %v349, %v462
      %v478 = vmul.f32 %v436, %v462
      %v479 = vmul.f32 %v438, %v462
      %v480 = vld [vmem:[%s3] sm:$0xff]
      %v481 = vld [vmem:[%s3 + $0x8] sm:$0xff]
      %v482 = vld [vmem:[%s3 + $0x10] sm:$0xff]
      %v483 = vld [vmem:[%s3 + $0x18] sm:$0xff]
      %485 = vset.pattern.permute.xlu0 0
      %486 = vperm.xlu0 %485, %v480
      %v487 = vpop.permute.xlu0 %486
      %490 = vset.pattern.permute.xlu0 0
      %491 = vperm.xlu0 %490, %v481
      %v492 = vpop.permute.xlu0 %491
      %495 = vset.pattern.permute.xlu0 0
      %496 = vperm.xlu0 %495, %v482
      %v497 = vpop.permute.xlu0 %496
      %500 = vset.pattern.permute.xlu0 0
      %501 = vperm.xlu0 %500, %v483
      %v502 = vpop.permute.xlu0 %501
      %v504 = vadd.f32 %v464, %v487
      %v505 = vadd.f32 %v465, %v487
      %v506 = vadd.f32 %v466, %v487
      %v507 = vadd.f32 %v467, %v487
      %v508 = vadd.f32 %v468, %v492
      %v509 = vadd.f32 %v469, %v492
      %v510 = vadd.f32 %v470, %v492
      %v511 = vadd.f32 %v471, %v492
      %v512 = vadd.f32 %v472, %v497
      %v513 = vadd.f32 %v473, %v497
      %v514 = vadd.f32 %v474, %v497
      %v515 = vadd.f32 %v475, %v497
      %v516 = vadd.f32 %v476, %v502
      %v517 = vadd.f32 %v477, %v502
      %v518 = vadd.f32 %v478, %v502
      %v519 = vadd.f32 %v479, %v502
      %v520 = vmax.f32 %v504, 0.0
      %v521 = vmax.f32 %v505, 0.0
      %v522 = vmax.f32 %v506, 0.0
      %v523 = vmax.f32 %v507, 0.0
      %v524 = vmax.f32 %v508, 0.0
      %v525 = vmax.f32 %v509, 0.0
      %v526 = vmax.f32 %v510, 0.0
      %v527 = vmax.f32 %v511, 0.0
      %v528 = vmax.f32 %v512, 0.0
      %v529 = vmax.f32 %v513, 0.0
      %v530 = vmax.f32 %v514, 0.0
      %v531 = vmax.f32 %v515, 0.0
      %v532 = vmax.f32 %v516, 0.0
      %v533 = vmax.f32 %v517, 0.0
      %v534 = vmax.f32 %v518, 0.0
      %v535 = vmax.f32 %v519, 0.0
      %v536 = vlaneseq
      %v537 = vand.u32 %v536, 127
      %v538 = vadd.s32 %v537, 128
      %v539 = vadd.s32 %v537, 256
      %v540 = vadd.s32 %v537, 384
      %vm541 = vcmp.lt.s32.totalorder %v537, 0
      %v542 = vsub.s32 0, %v537
      %v543 = vsel %vm541, %v542, %v537
      %v544 = vshrl.u32 %v543, 1
      %v545 = vand.u32 %v543, 1
      %v546 = vsub.s32 0, %v545
      %v547 = vsel %vm541, %v546, %v545
      %vm548 = vcmp.lt.s32.totalorder %v538, 0
      %v549 = vsub.s32 0, %v538
      %v550 = vsel %vm548, %v549, %v538
      %v551 = vshrl.u32 %v550, 1
      %v552 = vand.u32 %v550, 1
      %v553 = vsub.s32 0, %v552
      %v554 = vsel %vm548, %v553, %v552
      %vm555 = vcmp.lt.s32.totalorder %v539, 0
      %v556 = vsub.s32 0, %v539
      %v557 = vsel %vm555, %v556, %v539
      %v558 = vshrl.u32 %v557, 1
      %v559 = vand.u32 %v557, 1
      %v560 = vsub.s32 0, %v559
      %v561 = vsel %vm555, %v560, %v559
      %vm562 = vcmp.lt.s32.totalorder %v540, 0
      %v563 = vsub.s32 0, %v540
      %v564 = vsel %vm562, %v563, %v540
      %v565 = vshrl.u32 %v564, 1
      %v566 = vand.u32 %v564, 1
      %v567 = vsub.s32 0, %v566
      %v568 = vsel %vm562, %v567, %v566
      %vm569 = vcmp.ne.s32.totalorder %v547, 0
      %vm570 = vcmp.ne.s32.totalorder %v554, 0
      %vm571 = vcmp.ne.s32.totalorder %v561, 0
      %vm572 = vcmp.ne.s32.totalorder %v568, 0
      %vm573 = vcmp.lt.s32.totalorder %v547, 0
      %vm574 = vcmp.lt.s32.totalorder %v554, 0
      %vm575 = vcmp.lt.s32.totalorder %v561, 0
      %vm576 = vcmp.lt.s32.totalorder %v568, 0
      %vm577 = vmand %vm573, %vm569
      %vm578 = vmand %vm574, %vm570
      %vm579 = vmand %vm575, %vm571
      %vm580 = vmand %vm576, %vm572
      %v581 = vadd.s32 %v547, 2
      %v582 = vadd.s32 %v554, 2
      %v583 = vadd.s32 %v561, 2
      %v584 = vadd.s32 %v568, 2
      %v585 = vsel %vm577, %v581, %v547
      %v586 = vsel %vm578, %v582, %v554
      %v587 = vsel %vm579, %v583, %v561
      %v588 = vsel %vm580, %v584, %v568
      %vm589 = vcmp.eq.s32.totalorder %v585, 0
      %vm590 = vcmp.eq.s32.totalorder %v586, 0
      %vm591 = vcmp.eq.s32.totalorder %v587, 0
      %vm592 = vcmp.eq.s32.totalorder %v588, 0
      %v593 = vsel %vm589, %v520, %v524
      %v594 = vsel %vm590, %v521, %v525
      %v595 = vsel %vm591, %v522, %v526
      %v596 = vsel %vm592, %v523, %v527
      %v597 = vsel %vm589, %v528, %v532
      %v598 = vsel %vm590, %v529, %v533
      %v599 = vsel %vm591, %v530, %v534
      %v600 = vsel %vm592, %v531, %v535
      %v602 = vcombine.high %v593, %v593
      %v604 = vunpack.c.l.s4 1966171168
      %v605 = vunpack.c.0.s8 %v604
      %v606 = vlaneseq
      %v607 = vshrl.u32 %v606, 7
      %v608 = vsub.s32 %v605, %v607
      %v609 = vrot.slane %v593, %v608
      %v611 = vunpack.c.l.s4 1966171168
      %v612 = vunpack.c.0.s8 %v611
      %v613 = vlaneseq
      %v614 = vshrl.u32 %v613, 7
      %v615 = vsub.s32 %v612, %v614
      %v616 = vrot.slane %v602, %v615
      %v617 = vcombine.high %v609, %v609
      %v618 = vcombine.high %v616, %v616
      %v620 = vunpack.c.l.s4 1966171168
      %v621 = vunpack.c.0.s8 %v620
      %v622 = vlaneseq
      %v623 = vshrl.u32 %v622, 7
      %v624 = vsub.s32 %v621, %v623
      %v625 = vrot.slane %v609, %v624
      %v627 = vunpack.c.l.s4 1966171168
      %v628 = vunpack.c.0.s8 %v627
      %v629 = vlaneseq
      %v630 = vshrl.u32 %v629, 7
      %v631 = vsub.s32 %v628, %v630
      %v632 = vrot.slane %v616, %v631
      %v634 = vunpack.c.l.s4 1966171168
      %v635 = vunpack.c.0.s8 %v634
      %v636 = vlaneseq
      %v637 = vshrl.u32 %v636, 7
      %v638 = vsub.s32 %v635, %v637
      %v639 = vrot.slane %v617, %v638
      %v641 = vunpack.c.l.s4 1966171168
      %v642 = vunpack.c.0.s8 %v641
      %v643 = vlaneseq
      %v644 = vshrl.u32 %v643, 7
      %v645 = vsub.s32 %v642, %v644
      %v646 = vrot.slane %v618, %v645
      %v647 = vcombine.high %v625, %v625
      %v648 = vcombine.high %v632, %v632
      %v649 = vcombine.high %v639, %v639
      %v650 = vcombine.high %v646, %v646
      %vm659 = vcmask 253952
      %660 = vst.msk [vmem:[%s235] sm:$0x1] %vm659, %v625
      %661 = vst.msk [vmem:[%s235 + $0x10] sm:$0x1] %vm659, %v639
      %662 = vst.msk [vmem:[%s235 + $0x20] sm:$0x1] %vm659, %v647
      %663 = vst.msk [vmem:[%s235 + $0x30] sm:$0x1] %vm659, %v649
      %664 = vst.msk [vmem:[%s235 + $0x40] sm:$0x1] %vm659, %v632
      %665 = vst.msk [vmem:[%s235 + $0x50] sm:$0x1] %vm659, %v646
      %666 = vst.msk [vmem:[%s235 + $0x60] sm:$0x1] %vm659, %v648
      %667 = vst.msk [vmem:[%s235 + $0x70] sm:$0x1] %vm659, %v650
      %v669 = vcombine.high %v597, %v597
      %v671 = vunpack.c.l.s4 1966171168
      %v672 = vunpack.c.0.s8 %v671
      %v673 = vlaneseq
      %v674 = vshrl.u32 %v673, 7
      %v675 = vsub.s32 %v672, %v674
      %v676 = vrot.slane %v597, %v675
      %v678 = vunpack.c.l.s4 1966171168
      %v679 = vunpack.c.0.s8 %v678
      %v680 = vlaneseq
      %v681 = vshrl.u32 %v680, 7
      %v682 = vsub.s32 %v679, %v681
      %v683 = vrot.slane %v669, %v682
      %v684 = vcombine.high %v676, %v676
      %v685 = vcombine.high %v683, %v683
      %v687 = vunpack.c.l.s4 1966171168
      %v688 = vunpack.c.0.s8 %v687
      %v689 = vlaneseq
      %v690 = vshrl.u32 %v689, 7
      %v691 = vsub.s32 %v688, %v690
      %v692 = vrot.slane %v676, %v691
      %v694 = vunpack.c.l.s4 1966171168
      %v695 = vunpack.c.0.s8 %v694
      %v696 = vlaneseq
      %v697 = vshrl.u32 %v696, 7
      %v698 = vsub.s32 %v695, %v697
      %v699 = vrot.slane %v683, %v698
      %v701 = vunpack.c.l.s4 1966171168
      %v702 = vunpack.c.0.s8 %v701
      %v703 = vlaneseq
      %v704 = vshrl.u32 %v703, 7
      %v705 = vsub.s32 %v702, %v704
      %v706 = vrot.slane %v684, %v705
      %v708 = vunpack.c.l.s4 1966171168
      %v709 = vunpack.c.0.s8 %v708
      %v710 = vlaneseq
      %v711 = vshrl.u32 %v710, 7
      %v712 = vsub.s32 %v709, %v711
      %v713 = vrot.slane %v685, %v712
      %v714 = vcombine.high %v692, %v692
      %v715 = vcombine.high %v699, %v699
      %v716 = vcombine.high %v706, %v706
      %v717 = vcombine.high %v713, %v713
      %v718 = vlaneseq
      %v719 = vshrl.u32 %v718, 7
      %v720 = vsub.s32 0, %v719
      %v721 = vrot.slane %v692, %v720
      %v722 = vlaneseq
      %v723 = vshrl.u32 %v722, 7
      %v724 = vsub.s32 0, %v723
      %v725 = vrot.slane %v706, %v724
      %v726 = vlaneseq
      %v727 = vshrl.u32 %v726, 7
      %v728 = vsub.s32 0, %v727
      %v729 = vrot.slane %v714, %v728
      %v730 = vlaneseq
      %v731 = vshrl.u32 %v730, 7
      %v732 = vsub.s32 0, %v731
      %v733 = vrot.slane %v716, %v732
      %v734 = vlaneseq
      %v735 = vshrl.u32 %v734, 7
      %v736 = vsub.s32 0, %v735
      %v737 = vrot.slane %v699, %v736
      %v738 = vlaneseq
      %v739 = vshrl.u32 %v738, 7
      %v740 = vsub.s32 0, %v739
      %v741 = vrot.slane %v713, %v740
      %v742 = vlaneseq
      %v743 = vshrl.u32 %v742, 7
      %v744 = vsub.s32 0, %v743
      %v745 = vrot.slane %v715, %v744
      %v746 = vlaneseq
      %v747 = vshrl.u32 %v746, 7
      %v748 = vsub.s32 0, %v747
      %v749 = vrot.slane %v717, %v748
      %750 = vrot.lane.b32.xlu0 %v721, 32
      %v751 = vpop.permute.xlu0 %750
      %752 = vrot.lane.b32.xlu0 %v725, 32
      %v753 = vpop.permute.xlu0 %752
      %754 = vrot.lane.b32.xlu0 %v729, 32
      %v755 = vpop.permute.xlu0 %754
      %756 = vrot.lane.b32.xlu0 %v733, 32
      %v757 = vpop.permute.xlu0 %756
      %758 = vrot.lane.b32.xlu0 %v737, 32
      %v759 = vpop.permute.xlu0 %758
      %760 = vrot.lane.b32.xlu0 %v741, 32
      %v761 = vpop.permute.xlu0 %760
      %762 = vrot.lane.b32.xlu0 %v745, 32
      %v763 = vpop.permute.xlu0 %762
      %764 = vrot.lane.b32.xlu0 %v749, 32
      %v765 = vpop.permute.xlu0 %764
      %vm774 = vcmask 516352
      %775 = vst.msk [vmem:[%s235] sm:$0x1] %vm774, %v751
      %776 = vst.msk [vmem:[%s235 + $0x10] sm:$0x1] %vm774, %v753
      %777 = vst.msk [vmem:[%s235 + $0x20] sm:$0x1] %vm774, %v755
      %778 = vst.msk [vmem:[%s235 + $0x30] sm:$0x1] %vm774, %v757
      %779 = vst.msk [vmem:[%s235 + $0x40] sm:$0x1] %vm774, %v759
      %780 = vst.msk [vmem:[%s235 + $0x50] sm:$0x1] %vm774, %v761
      %781 = vst.msk [vmem:[%s235 + $0x60] sm:$0x1] %vm774, %v763
      %782 = vst.msk [vmem:[%s235 + $0x70] sm:$0x1] %vm774, %v765
      %v783 = vlaneseq
      %v784 = vshrl.u32 %v783, 7
      %v785 = vsub.s32 0, %v784
      %v786 = vrot.slane %v625, %v785
      %v787 = vlaneseq
      %v788 = vshrl.u32 %v787, 7
      %v789 = vsub.s32 0, %v788
      %v790 = vrot.slane %v639, %v789
      %v791 = vlaneseq
      %v792 = vshrl.u32 %v791, 7
      %v793 = vsub.s32 0, %v792
      %v794 = vrot.slane %v647, %v793
      %v795 = vlaneseq
      %v796 = vshrl.u32 %v795, 7
      %v797 = vsub.s32 0, %v796
      %v798 = vrot.slane %v649, %v797
      %v799 = vlaneseq
      %v800 = vshrl.u32 %v799, 7
      %v801 = vsub.s32 0, %v800
      %v802 = vrot.slane %v632, %v801
      %v803 = vlaneseq
      %v804 = vshrl.u32 %v803, 7
      %v805 = vsub.s32 0, %v804
      %v806 = vrot.slane %v646, %v805
      %v807 = vlaneseq
      %v808 = vshrl.u32 %v807, 7
      %v809 = vsub.s32 0, %v808
      %v810 = vrot.slane %v648, %v809
      %v811 = vlaneseq
      %v812 = vshrl.u32 %v811, 7
      %v813 = vsub.s32 0, %v812
      %v814 = vrot.slane %v650, %v813
      %815 = vrot.lane.b32.xlu0 %v786, 96
      %v816 = vpop.permute.xlu0 %815
      %817 = vrot.lane.b32.xlu0 %v790, 96
      %v818 = vpop.permute.xlu0 %817
      %819 = vrot.lane.b32.xlu0 %v794, 96
      %v820 = vpop.permute.xlu0 %819
      %821 = vrot.lane.b32.xlu0 %v798, 96
      %v822 = vpop.permute.xlu0 %821
      %823 = vrot.lane.b32.xlu0 %v802, 96
      %v824 = vpop.permute.xlu0 %823
      %825 = vrot.lane.b32.xlu0 %v806, 96
      %v826 = vpop.permute.xlu0 %825
      %827 = vrot.lane.b32.xlu0 %v810, 96
      %v828 = vpop.permute.xlu0 %827
      %829 = vrot.lane.b32.xlu0 %v814, 96
      %v830 = vpop.permute.xlu0 %829
      %839 = vst.msk [vmem:[%s235 + $0x1] sm:$0x1] %vm659, %v816
      %840 = vst.msk [vmem:[%s235 + $0x11] sm:$0x1] %vm659, %v818
      %841 = vst.msk [vmem:[%s235 + $0x21] sm:$0x1] %vm659, %v820
      %842 = vst.msk [vmem:[%s235 + $0x31] sm:$0x1] %vm659, %v822
      %843 = vst.msk [vmem:[%s235 + $0x41] sm:$0x1] %vm659, %v824
      %844 = vst.msk [vmem:[%s235 + $0x51] sm:$0x1] %vm659, %v826
      %845 = vst.msk [vmem:[%s235 + $0x61] sm:$0x1] %vm659, %v828
      %846 = vst.msk [vmem:[%s235 + $0x71] sm:$0x1] %vm659, %v830
      %855 = vst.msk [vmem:[%s235 + $0x1] sm:$0x1] %vm774, %v692
      %856 = vst.msk [vmem:[%s235 + $0x11] sm:$0x1] %vm774, %v706
      %857 = vst.msk [vmem:[%s235 + $0x21] sm:$0x1] %vm774, %v714
      %858 = vst.msk [vmem:[%s235 + $0x31] sm:$0x1] %vm774, %v716
      %859 = vst.msk [vmem:[%s235 + $0x41] sm:$0x1] %vm774, %v699
      %860 = vst.msk [vmem:[%s235 + $0x51] sm:$0x1] %vm774, %v713
      %861 = vst.msk [vmem:[%s235 + $0x61] sm:$0x1] %vm774, %v715
      %862 = vst.msk [vmem:[%s235 + $0x71] sm:$0x1] %vm774, %v717
      %863 = vrot.lane.b32.xlu0 %v786, 64
      %v864 = vpop.permute.xlu0 %863
      %865 = vrot.lane.b32.xlu0 %v790, 64
      %v866 = vpop.permute.xlu0 %865
      %867 = vrot.lane.b32.xlu0 %v794, 64
      %v868 = vpop.permute.xlu0 %867
      %869 = vrot.lane.b32.xlu0 %v798, 64
      %v870 = vpop.permute.xlu0 %869
      %871 = vrot.lane.b32.xlu0 %v802, 64
      %v872 = vpop.permute.xlu0 %871
      %873 = vrot.lane.b32.xlu0 %v806, 64
      %v874 = vpop.permute.xlu0 %873
      %875 = vrot.lane.b32.xlu0 %v810, 64
      %v876 = vpop.permute.xlu0 %875
      %877 = vrot.lane.b32.xlu0 %v814, 64
      %v878 = vpop.permute.xlu0 %877
      %887 = vst.msk [vmem:[%s235 + $0x2] sm:$0x1] %vm659, %v864
      %888 = vst.msk [vmem:[%s235 + $0x12] sm:$0x1] %vm659, %v866
      %889 = vst.msk [vmem:[%s235 + $0x22] sm:$0x1] %vm659, %v868
      %890 = vst.msk [vmem:[%s235 + $0x32] sm:$0x1] %vm659, %v870
      %891 = vst.msk [vmem:[%s235 + $0x42] sm:$0x1] %vm659, %v872
      %892 = vst.msk [vmem:[%s235 + $0x52] sm:$0x1] %vm659, %v874
      %893 = vst.msk [vmem:[%s235 + $0x62] sm:$0x1] %vm659, %v876
      %894 = vst.msk [vmem:[%s235 + $0x72] sm:$0x1] %vm659, %v878
      %895 = vrot.lane.b32.xlu0 %v721, 96
      %v896 = vpop.permute.xlu0 %895
      %897 = vrot.lane.b32.xlu0 %v725, 96
      %v898 = vpop.permute.xlu0 %897
      %899 = vrot.lane.b32.xlu0 %v729, 96
      %v900 = vpop.permute.xlu0 %899
      %901 = vrot.lane.b32.xlu0 %v733, 96
      %v902 = vpop.permute.xlu0 %901
      %903 = vrot.lane.b32.xlu0 %v737, 96
      %v904 = vpop.permute.xlu0 %903
      %905 = vrot.lane.b32.xlu0 %v741, 96
      %v906 = vpop.permute.xlu0 %905
      %907 = vrot.lane.b32.xlu0 %v745, 96
      %v908 = vpop.permute.xlu0 %907
      %909 = vrot.lane.b32.xlu0 %v749, 96
      %v910 = vpop.permute.xlu0 %909
      %919 = vst.msk [vmem:[%s235 + $0x2] sm:$0x1] %vm774, %v896
      %920 = vst.msk [vmem:[%s235 + $0x12] sm:$0x1] %vm774, %v898
      %921 = vst.msk [vmem:[%s235 + $0x22] sm:$0x1] %vm774, %v900
      %922 = vst.msk [vmem:[%s235 + $0x32] sm:$0x1] %vm774, %v902
      %923 = vst.msk [vmem:[%s235 + $0x42] sm:$0x1] %vm774, %v904
      %924 = vst.msk [vmem:[%s235 + $0x52] sm:$0x1] %vm774, %v906
      %925 = vst.msk [vmem:[%s235 + $0x62] sm:$0x1] %vm774, %v908
      %926 = vst.msk [vmem:[%s235 + $0x72] sm:$0x1] %vm774, %v910
      %927 = vrot.lane.b32.xlu0 %v786, 32
      %v928 = vpop.permute.xlu0 %927
      %929 = vrot.lane.b32.xlu0 %v790, 32
      %v930 = vpop.permute.xlu0 %929
      %931 = vrot.lane.b32.xlu0 %v794, 32
      %v932 = vpop.permute.xlu0 %931
      %933 = vrot.lane.b32.xlu0 %v798, 32
      %v934 = vpop.permute.xlu0 %933
      %935 = vrot.lane.b32.xlu0 %v802, 32
      %v936 = vpop.permute.xlu0 %935
      %937 = vrot.lane.b32.xlu0 %v806, 32
      %v938 = vpop.permute.xlu0 %937
      %939 = vrot.lane.b32.xlu0 %v810, 32
      %v940 = vpop.permute.xlu0 %939
      %941 = vrot.lane.b32.xlu0 %v814, 32
      %v942 = vpop.permute.xlu0 %941
      %951 = vst.msk [vmem:[%s235 + $0x3] sm:$0x1] %vm659, %v928
      %952 = vst.msk [vmem:[%s235 + $0x13] sm:$0x1] %vm659, %v930
      %953 = vst.msk [vmem:[%s235 + $0x23] sm:$0x1] %vm659, %v932
      %954 = vst.msk [vmem:[%s235 + $0x33] sm:$0x1] %vm659, %v934
      %955 = vst.msk [vmem:[%s235 + $0x43] sm:$0x1] %vm659, %v936
      %956 = vst.msk [vmem:[%s235 + $0x53] sm:$0x1] %vm659, %v938
      %957 = vst.msk [vmem:[%s235 + $0x63] sm:$0x1] %vm659, %v940
      %958 = vst.msk [vmem:[%s235 + $0x73] sm:$0x1] %vm659, %v942
      %959 = vrot.lane.b32.xlu0 %v721, 64
      %v960 = vpop.permute.xlu0 %959
      %961 = vrot.lane.b32.xlu0 %v725, 64
      %v962 = vpop.permute.xlu0 %961
      %963 = vrot.lane.b32.xlu0 %v729, 64
      %v964 = vpop.permute.xlu0 %963
      %965 = vrot.lane.b32.xlu0 %v733, 64
      %v966 = vpop.permute.xlu0 %965
      %967 = vrot.lane.b32.xlu0 %v737, 64
      %v968 = vpop.permute.xlu0 %967
      %969 = vrot.lane.b32.xlu0 %v741, 64
      %v970 = vpop.permute.xlu0 %969
      %971 = vrot.lane.b32.xlu0 %v745, 64
      %v972 = vpop.permute.xlu0 %971
      %973 = vrot.lane.b32.xlu0 %v749, 64
      %v974 = vpop.permute.xlu0 %973
      %983 = vst.msk [vmem:[%s235 + $0x3] sm:$0x1] %vm774, %v960
      %984 = vst.msk [vmem:[%s235 + $0x13] sm:$0x1] %vm774, %v962
      %985 = vst.msk [vmem:[%s235 + $0x23] sm:$0x1] %vm774, %v964
      %986 = vst.msk [vmem:[%s235 + $0x33] sm:$0x1] %vm774, %v966
      %987 = vst.msk [vmem:[%s235 + $0x43] sm:$0x1] %vm774, %v968
      %988 = vst.msk [vmem:[%s235 + $0x53] sm:$0x1] %vm774, %v970
      %989 = vst.msk [vmem:[%s235 + $0x63] sm:$0x1] %vm774, %v972
      %990 = vst.msk [vmem:[%s235 + $0x73] sm:$0x1] %vm774, %v974
      %v992 = vcombine.high %v594, %v594
      %v994 = vunpack.c.l.s4 1966171168
      %v995 = vunpack.c.0.s8 %v994
      %v996 = vlaneseq
      %v997 = vshrl.u32 %v996, 7
      %v998 = vsub.s32 %v995, %v997
      %v999 = vrot.slane %v594, %v998
      %v1001 = vunpack.c.l.s4 1966171168
      %v1002 = vunpack.c.0.s8 %v1001
      %v1003 = vlaneseq
      %v1004 = vshrl.u32 %v1003, 7
      %v1005 = vsub.s32 %v1002, %v1004
      %v1006 = vrot.slane %v992, %v1005
      %v1007 = vcombine.high %v999, %v999
      %v1008 = vcombine.high %v1006, %v1006
      %v1010 = vunpack.c.l.s4 1966171168
      %v1011 = vunpack.c.0.s8 %v1010
      %v1012 = vlaneseq
      %v1013 = vshrl.u32 %v1012, 7
      %v1014 = vsub.s32 %v1011, %v1013
      %v1015 = vrot.slane %v999, %v1014
      %v1017 = vunpack.c.l.s4 1966171168
      %v1018 = vunpack.c.0.s8 %v1017
      %v1019 = vlaneseq
      %v1020 = vshrl.u32 %v1019, 7
      %v1021 = vsub.s32 %v1018, %v1020
      %v1022 = vrot.slane %v1006, %v1021
      %v1024 = vunpack.c.l.s4 1966171168
      %v1025 = vunpack.c.0.s8 %v1024
      %v1026 = vlaneseq
      %v1027 = vshrl.u32 %v1026, 7
      %v1028 = vsub.s32 %v1025, %v1027
      %v1029 = vrot.slane %v1007, %v1028
      %v1031 = vunpack.c.l.s4 1966171168
      %v1032 = vunpack.c.0.s8 %v1031
      %v1033 = vlaneseq
      %v1034 = vshrl.u32 %v1033, 7
      %v1035 = vsub.s32 %v1032, %v1034
      %v1036 = vrot.slane %v1008, %v1035
      %v1037 = vcombine.high %v1015, %v1015
      %v1038 = vcombine.high %v1022, %v1022
      %v1039 = vcombine.high %v1029, %v1029
      %v1040 = vcombine.high %v1036, %v1036
      %1049 = vst.msk [vmem:[%s235 + $0x4] sm:$0x1] %vm659, %v1015
      %1050 = vst.msk [vmem:[%s235 + $0x14] sm:$0x1] %vm659, %v1029
      %1051 = vst.msk [vmem:[%s235 + $0x24] sm:$0x1] %vm659, %v1037
      %1052 = vst.msk [vmem:[%s235 + $0x34] sm:$0x1] %vm659, %v1039
      %1053 = vst.msk [vmem:[%s235 + $0x44] sm:$0x1] %vm659, %v1022
      %1054 = vst.msk [vmem:[%s235 + $0x54] sm:$0x1] %vm659, %v1036
      %1055 = vst.msk [vmem:[%s235 + $0x64] sm:$0x1] %vm659, %v1038
      %1056 = vst.msk [vmem:[%s235 + $0x74] sm:$0x1] %vm659, %v1040
      %v1058 = vcombine.high %v598, %v598
      %v1060 = vunpack.c.l.s4 1966171168
      %v1061 = vunpack.c.0.s8 %v1060
      %v1062 = vlaneseq
      %v1063 = vshrl.u32 %v1062, 7
      %v1064 = vsub.s32 %v1061, %v1063
      %v1065 = vrot.slane %v598, %v1064
      %v1067 = vunpack.c.l.s4 1966171168
      %v1068 = vunpack.c.0.s8 %v1067
      %v1069 = vlaneseq
      %v1070 = vshrl.u32 %v1069, 7
      %v1071 = vsub.s32 %v1068, %v1070
      %v1072 = vrot.slane %v1058, %v1071
      %v1073 = vcombine.high %v1065, %v1065
      %v1074 = vcombine.high %v1072, %v1072
      %v1076 = vunpack.c.l.s4 1966171168
      %v1077 = vunpack.c.0.s8 %v1076
      %v1078 = vlaneseq
      %v1079 = vshrl.u32 %v1078, 7
      %v1080 = vsub.s32 %v1077, %v1079
      %v1081 = vrot.slane %v1065, %v1080
      %v1083 = vunpack.c.l.s4 1966171168
      %v1084 = vunpack.c.0.s8 %v1083
      %v1085 = vlaneseq
      %v1086 = vshrl.u32 %v1085, 7
      %v1087 = vsub.s32 %v1084, %v1086
      %v1088 = vrot.slane %v1072, %v1087
      %v1090 = vunpack.c.l.s4 1966171168
      %v1091 = vunpack.c.0.s8 %v1090
      %v1092 = vlaneseq
      %v1093 = vshrl.u32 %v1092, 7
      %v1094 = vsub.s32 %v1091, %v1093
      %v1095 = vrot.slane %v1073, %v1094
      %v1097 = vunpack.c.l.s4 1966171168
      %v1098 = vunpack.c.0.s8 %v1097
      %v1099 = vlaneseq
      %v1100 = vshrl.u32 %v1099, 7
      %v1101 = vsub.s32 %v1098, %v1100
      %v1102 = vrot.slane %v1074, %v1101
      %v1103 = vcombine.high %v1081, %v1081
      %v1104 = vcombine.high %v1088, %v1088
      %v1105 = vcombine.high %v1095, %v1095
      %v1106 = vcombine.high %v1102, %v1102
      %v1107 = vlaneseq
      %v1108 = vshrl.u32 %v1107, 7
      %v1109 = vsub.s32 0, %v1108
      %v1110 = vrot.slane %v1081, %v1109
      %v1111 = vlaneseq
      %v1112 = vshrl.u32 %v1111, 7
      %v1113 = vsub.s32 0, %v1112
      %v1114 = vrot.slane %v1095, %v1113
      %v1115 = vlaneseq
      %v1116 = vshrl.u32 %v1115, 7
      %v1117 = vsub.s32 0, %v1116
      %v1118 = vrot.slane %v1103, %v1117
      %v1119 = vlaneseq
      %v1120 = vshrl.u32 %v1119, 7
      %v1121 = vsub.s32 0, %v1120
      %v1122 = vrot.slane %v1105, %v1121
      %v1123 = vlaneseq
      %v1124 = vshrl.u32 %v1123, 7
      %v1125 = vsub.s32 0, %v1124
      %v1126 = vrot.slane %v1088, %v1125
      %v1127 = vlaneseq
      %v1128 = vshrl.u32 %v1127, 7
      %v1129 = vsub.s32 0, %v1128
      %v1130 = vrot.slane %v1102, %v1129
      %v1131 = vlaneseq
      %v1132 = vshrl.u32 %v1131, 7
      %v1133 = vsub.s32 0, %v1132
      %v1134 = vrot.slane %v1104, %v1133
      %v1135 = vlaneseq
      %v1136 = vshrl.u32 %v1135, 7
      %v1137 = vsub.s32 0, %v1136
      %v1138 = vrot.slane %v1106, %v1137
      %1139 = vrot.lane.b32.xlu0 %v1110, 32
      %v1140 = vpop.permute.xlu0 %1139
      %1141 = vrot.lane.b32.xlu0 %v1114, 32
      %v1142 = vpop.permute.xlu0 %1141
      %1143 = vrot.lane.b32.xlu0 %v1118, 32
      %v1144 = vpop.permute.xlu0 %1143
      %1145 = vrot.lane.b32.xlu0 %v1122, 32
      %v1146 = vpop.permute.xlu0 %1145
      %1147 = vrot.lane.b32.xlu0 %v1126, 32
      %v1148 = vpop.permute.xlu0 %1147
      %1149 = vrot.lane.b32.xlu0 %v1130, 32
      %v1150 = vpop.permute.xlu0 %1149
      %1151 = vrot.lane.b32.xlu0 %v1134, 32
      %v1152 = vpop.permute.xlu0 %1151
      %1153 = vrot.lane.b32.xlu0 %v1138, 32
      %v1154 = vpop.permute.xlu0 %1153
      %1163 = vst.msk [vmem:[%s235 + $0x4] sm:$0x1] %vm774, %v1140
      %1164 = vst.msk [vmem:[%s235 + $0x14] sm:$0x1] %vm774, %v1142
      %1165 = vst.msk [vmem:[%s235 + $0x24] sm:$0x1] %vm774, %v1144
      %1166 = vst.msk [vmem:[%s235 + $0x34] sm:$0x1] %vm774, %v1146
      %1167 = vst.msk [vmem:[%s235 + $0x44] sm:$0x1] %vm774, %v1148
      %1168 = vst.msk [vmem:[%s235 + $0x54] sm:$0x1] %vm774, %v1150
      %1169 = vst.msk [vmem:[%s235 + $0x64] sm:$0x1] %vm774, %v1152
      %1170 = vst.msk [vmem:[%s235 + $0x74] sm:$0x1] %vm774, %v1154
      %v1171 = vlaneseq
      %v1172 = vshrl.u32 %v1171, 7
      %v1173 = vsub.s32 0, %v1172
      %v1174 = vrot.slane %v1015, %v1173
      %v1175 = vlaneseq
      %v1176 = vshrl.u32 %v1175, 7
      %v1177 = vsub.s32 0, %v1176
      %v1178 = vrot.slane %v1029, %v1177
      %v1179 = vlaneseq
      %v1180 = vshrl.u32 %v1179, 7
      %v1181 = vsub.s32 0, %v1180
      %v1182 = vrot.slane %v1037, %v1181
      %v1183 = vlaneseq
      %v1184 = vshrl.u32 %v1183, 7
      %v1185 = vsub.s32 0, %v1184
      %v1186 = vrot.slane %v1039, %v1185
      %v1187 = vlaneseq
      %v1188 = vshrl.u32 %v1187, 7
      %v1189 = vsub.s32 0, %v1188
      %v1190 = vrot.slane %v1022, %v1189
      %v1191 = vlaneseq
      %v1192 = vshrl.u32 %v1191, 7
      %v1193 = vsub.s32 0, %v1192
      %v1194 = vrot.slane %v1036, %v1193
      %v1195 = vlaneseq
      %v1196 = vshrl.u32 %v1195, 7
      %v1197 = vsub.s32 0, %v1196
      %v1198 = vrot.slane %v1038, %v1197
      %v1199 = vlaneseq
      %v1200 = vshrl.u32 %v1199, 7
      %v1201 = vsub.s32 0, %v1200
      %v1202 = vrot.slane %v1040, %v1201
      %1203 = vrot.lane.b32.xlu0 %v1174, 96
      %v1204 = vpop.permute.xlu0 %1203
      %1205 = vrot.lane.b32.xlu0 %v1178, 96
      %v1206 = vpop.permute.xlu0 %1205
      %1207 = vrot.lane.b32.xlu0 %v1182, 96
      %v1208 = vpop.permute.xlu0 %1207
      %1209 = vrot.lane.b32.xlu0 %v1186, 96
      %v1210 = vpop.permute.xlu0 %1209
      %1211 = vrot.lane.b32.xlu0 %v1190, 96
      %v1212 = vpop.permute.xlu0 %1211
      %1213 = vrot.lane.b32.xlu0 %v1194, 96
      %v1214 = vpop.permute.xlu0 %1213
      %1215 = vrot.lane.b32.xlu0 %v1198, 96
      %v1216 = vpop.permute.xlu0 %1215
      %1217 = vrot.lane.b32.xlu0 %v1202, 96
      %v1218 = vpop.permute.xlu0 %1217
      %1227 = vst.msk [vmem:[%s235 + $0x5] sm:$0x1] %vm659, %v1204
      %1228 = vst.msk [vmem:[%s235 + $0x15] sm:$0x1] %vm659, %v1206
      %1229 = vst.msk [vmem:[%s235 + $0x25] sm:$0x1] %vm659, %v1208
      %1230 = vst.msk [vmem:[%s235 + $0x35] sm:$0x1] %vm659, %v1210
      %1231 = vst.msk [vmem:[%s235 + $0x45] sm:$0x1] %vm659, %v1212
      %1232 = vst.msk [vmem:[%s235 + $0x55] sm:$0x1] %vm659, %v1214
      %1233 = vst.msk [vmem:[%s235 + $0x65] sm:$0x1] %vm659, %v1216
      %1234 = vst.msk [vmem:[%s235 + $0x75] sm:$0x1] %vm659, %v1218
      %1243 = vst.msk [vmem:[%s235 + $0x5] sm:$0x1] %vm774, %v1081
      %1244 = vst.msk [vmem:[%s235 + $0x15] sm:$0x1] %vm774, %v1095
      %1245 = vst.msk [vmem:[%s235 + $0x25] sm:$0x1] %vm774, %v1103
      %1246 = vst.msk [vmem:[%s235 + $0x35] sm:$0x1] %vm774, %v1105
      %1247 = vst.msk [vmem:[%s235 + $0x45] sm:$0x1] %vm774, %v1088
      %1248 = vst.msk [vmem:[%s235 + $0x55] sm:$0x1] %vm774, %v1102
      %1249 = vst.msk [vmem:[%s235 + $0x65] sm:$0x1] %vm774, %v1104
      %1250 = vst.msk [vmem:[%s235 + $0x75] sm:$0x1] %vm774, %v1106
      %1251 = vrot.lane.b32.xlu0 %v1174, 64
      %v1252 = vpop.permute.xlu0 %1251
      %1253 = vrot.lane.b32.xlu0 %v1178, 64
      %v1254 = vpop.permute.xlu0 %1253
      %1255 = vrot.lane.b32.xlu0 %v1182, 64
      %v1256 = vpop.permute.xlu0 %1255
      %1257 = vrot.lane.b32.xlu0 %v1186, 64
      %v1258 = vpop.permute.xlu0 %1257
      %1259 = vrot.lane.b32.xlu0 %v1190, 64
      %v1260 = vpop.permute.xlu0 %1259
      %1261 = vrot.lane.b32.xlu0 %v1194, 64
      %v1262 = vpop.permute.xlu0 %1261
      %1263 = vrot.lane.b32.xlu0 %v1198, 64
      %v1264 = vpop.permute.xlu0 %1263
      %1265 = vrot.lane.b32.xlu0 %v1202, 64
      %v1266 = vpop.permute.xlu0 %1265
      %1275 = vst.msk [vmem:[%s235 + $0x6] sm:$0x1] %vm659, %v1252
      %1276 = vst.msk [vmem:[%s235 + $0x16] sm:$0x1] %vm659, %v1254
      %1277 = vst.msk [vmem:[%s235 + $0x26] sm:$0x1] %vm659, %v1256
      %1278 = vst.msk [vmem:[%s235 + $0x36] sm:$0x1] %vm659, %v1258
      %1279 = vst.msk [vmem:[%s235 + $0x46] sm:$0x1] %vm659, %v1260
      %1280 = vst.msk [vmem:[%s235 + $0x56] sm:$0x1] %vm659, %v1262
      %1281 = vst.msk [vmem:[%s235 + $0x66] sm:$0x1] %vm659, %v1264
      %1282 = vst.msk [vmem:[%s235 + $0x76] sm:$0x1] %vm659, %v1266
      %1283 = vrot.lane.b32.xlu0 %v1110, 96
      %v1284 = vpop.permute.xlu0 %1283
      %1285 = vrot.lane.b32.xlu0 %v1114, 96
      %v1286 = vpop.permute.xlu0 %1285
      %1287 = vrot.lane.b32.xlu0 %v1118, 96
      %v1288 = vpop.permute.xlu0 %1287
      %1289 = vrot.lane.b32.xlu0 %v1122, 96
      %v1290 = vpop.permute.xlu0 %1289
      %1291 = vrot.lane.b32.xlu0 %v1126, 96
      %v1292 = vpop.permute.xlu0 %1291
      %1293 = vrot.lane.b32.xlu0 %v1130, 96
      %v1294 = vpop.permute.xlu0 %1293
      %1295 = vrot.lane.b32.xlu0 %v1134, 96
      %v1296 = vpop.permute.xlu0 %1295
      %1297 = vrot.lane.b32.xlu0 %v1138, 96
      %v1298 = vpop.permute.xlu0 %1297
      %1307 = vst.msk [vmem:[%s235 + $0x6] sm:$0x1] %vm774, %v1284
      %1308 = vst.msk [vmem:[%s235 + $0x16] sm:$0x1] %vm774, %v1286
      %1309 = vst.msk [vmem:[%s235 + $0x26] sm:$0x1] %vm774, %v1288
      %1310 = vst.msk [vmem:[%s235 + $0x36] sm:$0x1] %vm774, %v1290
      %1311 = vst.msk [vmem:[%s235 + $0x46] sm:$0x1] %vm774, %v1292
      %1312 = vst.msk [vmem:[%s235 + $0x56] sm:$0x1] %vm774, %v1294
      %1313 = vst.msk [vmem:[%s235 + $0x66] sm:$0x1] %vm774, %v1296
      %1314 = vst.msk [vmem:[%s235 + $0x76] sm:$0x1] %vm774, %v1298
      %1315 = vrot.lane.b32.xlu0 %v1174, 32
      %v1316 = vpop.permute.xlu0 %1315
      %1317 = vrot.lane.b32.xlu0 %v1178, 32
      %v1318 = vpop.permute.xlu0 %1317
      %1319 = vrot.lane.b32.xlu0 %v1182, 32
      %v1320 = vpop.permute.xlu0 %1319
      %1321 = vrot.lane.b32.xlu0 %v1186, 32
      %v1322 = vpop.permute.xlu0 %1321
      %1323 = vrot.lane.b32.xlu0 %v1190, 32
      %v1324 = vpop.permute.xlu0 %1323
      %1325 = vrot.lane.b32.xlu0 %v1194, 32
      %v1326 = vpop.permute.xlu0 %1325
      %1327 = vrot.lane.b32.xlu0 %v1198, 32
      %v1328 = vpop.permute.xlu0 %1327
      %1329 = vrot.lane.b32.xlu0 %v1202, 32
      %v1330 = vpop.permute.xlu0 %1329
      %1339 = vst.msk [vmem:[%s235 + $0x7] sm:$0x1] %vm659, %v1316
      %1340 = vst.msk [vmem:[%s235 + $0x17] sm:$0x1] %vm659, %v1318
      %1341 = vst.msk [vmem:[%s235 + $0x27] sm:$0x1] %vm659, %v1320
      %1342 = vst.msk [vmem:[%s235 + $0x37] sm:$0x1] %vm659, %v1322
      %1343 = vst.msk [vmem:[%s235 + $0x47] sm:$0x1] %vm659, %v1324
      %1344 = vst.msk [vmem:[%s235 + $0x57] sm:$0x1] %vm659, %v1326
      %1345 = vst.msk [vmem:[%s235 + $0x67] sm:$0x1] %vm659, %v1328
      %1346 = vst.msk [vmem:[%s235 + $0x77] sm:$0x1] %vm659, %v1330
      %1347 = vrot.lane.b32.xlu0 %v1110, 64
      %v1348 = vpop.permute.xlu0 %1347
      %1349 = vrot.lane.b32.xlu0 %v1114, 64
      %v1350 = vpop.permute.xlu0 %1349
      %1351 = vrot.lane.b32.xlu0 %v1118, 64
      %v1352 = vpop.permute.xlu0 %1351
      %1353 = vrot.lane.b32.xlu0 %v1122, 64
      %v1354 = vpop.permute.xlu0 %1353
      %1355 = vrot.lane.b32.xlu0 %v1126, 64
      %v1356 = vpop.permute.xlu0 %1355
      %1357 = vrot.lane.b32.xlu0 %v1130, 64
      %v1358 = vpop.permute.xlu0 %1357
      %1359 = vrot.lane.b32.xlu0 %v1134, 64
      %v1360 = vpop.permute.xlu0 %1359
      %1361 = vrot.lane.b32.xlu0 %v1138, 64
      %v1362 = vpop.permute.xlu0 %1361
      %1371 = vst.msk [vmem:[%s235 + $0x7] sm:$0x1] %vm774, %v1348
      %1372 = vst.msk [vmem:[%s235 + $0x17] sm:$0x1] %vm774, %v1350
      %1373 = vst.msk [vmem:[%s235 + $0x27] sm:$0x1] %vm774, %v1352
      %1374 = vst.msk [vmem:[%s235 + $0x37] sm:$0x1] %vm774, %v1354
      %1375 = vst.msk [vmem:[%s235 + $0x47] sm:$0x1] %vm774, %v1356
      %1376 = vst.msk [vmem:[%s235 + $0x57] sm:$0x1] %vm774, %v1358
      %1377 = vst.msk [vmem:[%s235 + $0x67] sm:$0x1] %vm774, %v1360
      %1378 = vst.msk [vmem:[%s235 + $0x77] sm:$0x1] %vm774, %v1362
      %v1380 = vcombine.high %v595, %v595
      %v1382 = vunpack.c.l.s4 1966171168
      %v1383 = vunpack.c.0.s8 %v1382
      %v1384 = vlaneseq
      %v1385 = vshrl.u32 %v1384, 7
      %v1386 = vsub.s32 %v1383, %v1385
      %v1387 = vrot.slane %v595, %v1386
      %v1389 = vunpack.c.l.s4 1966171168
      %v1390 = vunpack.c.0.s8 %v1389
      %v1391 = vlaneseq
      %v1392 = vshrl.u32 %v1391, 7
      %v1393 = vsub.s32 %v1390, %v1392
      %v1394 = vrot.slane %v1380, %v1393
      %v1395 = vcombine.high %v1387, %v1387
      %v1396 = vcombine.high %v1394, %v1394
      %v1398 = vunpack.c.l.s4 1966171168
      %v1399 = vunpack.c.0.s8 %v1398
      %v1400 = vlaneseq
      %v1401 = vshrl.u32 %v1400, 7
      %v1402 = vsub.s32 %v1399, %v1401
      %v1403 = vrot.slane %v1387, %v1402
      %v1405 = vunpack.c.l.s4 1966171168
      %v1406 = vunpack.c.0.s8 %v1405
      %v1407 = vlaneseq
      %v1408 = vshrl.u32 %v1407, 7
      %v1409 = vsub.s32 %v1406, %v1408
      %v1410 = vrot.slane %v1394, %v1409
      %v1412 = vunpack.c.l.s4 1966171168
      %v1413 = vunpack.c.0.s8 %v1412
      %v1414 = vlaneseq
      %v1415 = vshrl.u32 %v1414, 7
      %v1416 = vsub.s32 %v1413, %v1415
      %v1417 = vrot.slane %v1395, %v1416
      %v1419 = vunpack.c.l.s4 1966171168
      %v1420 = vunpack.c.0.s8 %v1419
      %v1421 = vlaneseq
      %v1422 = vshrl.u32 %v1421, 7
      %v1423 = vsub.s32 %v1420, %v1422
      %v1424 = vrot.slane %v1396, %v1423
      %v1425 = vcombine.high %v1403, %v1403
      %v1426 = vcombine.high %v1410, %v1410
      %v1427 = vcombine.high %v1417, %v1417
      %v1428 = vcombine.high %v1424, %v1424
      %1437 = vst.msk [vmem:[%s235 + $0x8] sm:$0x1] %vm659, %v1403
      %1438 = vst.msk [vmem:[%s235 + $0x18] sm:$0x1] %vm659, %v1417
      %1439 = vst.msk [vmem:[%s235 + $0x28] sm:$0x1] %vm659, %v1425
      %1440 = vst.msk [vmem:[%s235 + $0x38] sm:$0x1] %vm659, %v1427
      %1441 = vst.msk [vmem:[%s235 + $0x48] sm:$0x1] %vm659, %v1410
      %1442 = vst.msk [vmem:[%s235 + $0x58] sm:$0x1] %vm659, %v1424
      %1443 = vst.msk [vmem:[%s235 + $0x68] sm:$0x1] %vm659, %v1426
      %1444 = vst.msk [vmem:[%s235 + $0x78] sm:$0x1] %vm659, %v1428
      %v1446 = vcombine.high %v599, %v599
      %v1448 = vunpack.c.l.s4 1966171168
      %v1449 = vunpack.c.0.s8 %v1448
      %v1450 = vlaneseq
      %v1451 = vshrl.u32 %v1450, 7
      %v1452 = vsub.s32 %v1449, %v1451
      %v1453 = vrot.slane %v599, %v1452
      %v1455 = vunpack.c.l.s4 1966171168
      %v1456 = vunpack.c.0.s8 %v1455
      %v1457 = vlaneseq
      %v1458 = vshrl.u32 %v1457, 7
      %v1459 = vsub.s32 %v1456, %v1458
      %v1460 = vrot.slane %v1446, %v1459
      %v1461 = vcombine.high %v1453, %v1453
      %v1462 = vcombine.high %v1460, %v1460
      %v1464 = vunpack.c.l.s4 1966171168
      %v1465 = vunpack.c.0.s8 %v1464
      %v1466 = vlaneseq
      %v1467 = vshrl.u32 %v1466, 7
      %v1468 = vsub.s32 %v1465, %v1467
      %v1469 = vrot.slane %v1453, %v1468
      %v1471 = vunpack.c.l.s4 1966171168
      %v1472 = vunpack.c.0.s8 %v1471
      %v1473 = vlaneseq
      %v1474 = vshrl.u32 %v1473, 7
      %v1475 = vsub.s32 %v1472, %v1474
      %v1476 = vrot.slane %v1460, %v1475
      %v1478 = vunpack.c.l.s4 1966171168
      %v1479 = vunpack.c.0.s8 %v1478
      %v1480 = vlaneseq
      %v1481 = vshrl.u32 %v1480, 7
      %v1482 = vsub.s32 %v1479, %v1481
      %v1483 = vrot.slane %v1461, %v1482
      %v1485 = vunpack.c.l.s4 1966171168
      %v1486 = vunpack.c.0.s8 %v1485
      %v1487 = vlaneseq
      %v1488 = vshrl.u32 %v1487, 7
      %v1489 = vsub.s32 %v1486, %v1488
      %v1490 = vrot.slane %v1462, %v1489
      %v1491 = vcombine.high %v1469, %v1469
      %v1492 = vcombine.high %v1476, %v1476
      %v1493 = vcombine.high %v1483, %v1483
      %v1494 = vcombine.high %v1490, %v1490
      %v1495 = vlaneseq
      %v1496 = vshrl.u32 %v1495, 7
      %v1497 = vsub.s32 0, %v1496
      %v1498 = vrot.slane %v1469, %v1497
      %v1499 = vlaneseq
      %v1500 = vshrl.u32 %v1499, 7
      %v1501 = vsub.s32 0, %v1500
      %v1502 = vrot.slane %v1483, %v1501
      %v1503 = vlaneseq
      %v1504 = vshrl.u32 %v1503, 7
      %v1505 = vsub.s32 0, %v1504
      %v1506 = vrot.slane %v1491, %v1505
      %v1507 = vlaneseq
      %v1508 = vshrl.u32 %v1507, 7
      %v1509 = vsub.s32 0, %v1508
      %v1510 = vrot.slane %v1493, %v1509
      %v1511 = vlaneseq
      %v1512 = vshrl.u32 %v1511, 7
      %v1513 = vsub.s32 0, %v1512
      %v1514 = vrot.slane %v1476, %v1513
      %v1515 = vlaneseq
      %v1516 = vshrl.u32 %v1515, 7
      %v1517 = vsub.s32 0, %v1516
      %v1518 = vrot.slane %v1490, %v1517
      %v1519 = vlaneseq
      %v1520 = vshrl.u32 %v1519, 7
      %v1521 = vsub.s32 0, %v1520
      %v1522 = vrot.slane %v1492, %v1521
      %v1523 = vlaneseq
      %v1524 = vshrl.u32 %v1523, 7
      %v1525 = vsub.s32 0, %v1524
      %v1526 = vrot.slane %v1494, %v1525
      %1527 = vrot.lane.b32.xlu0 %v1498, 32
      %v1528 = vpop.permute.xlu0 %1527
      %1529 = vrot.lane.b32.xlu0 %v1502, 32
      %v1530 = vpop.permute.xlu0 %1529
      %1531 = vrot.lane.b32.xlu0 %v1506, 32
      %v1532 = vpop.permute.xlu0 %1531
      %1533 = vrot.lane.b32.xlu0 %v1510, 32
      %v1534 = vpop.permute.xlu0 %1533
      %1535 = vrot.lane.b32.xlu0 %v1514, 32
      %v1536 = vpop.permute.xlu0 %1535
      %1537 = vrot.lane.b32.xlu0 %v1518, 32
      %v1538 = vpop.permute.xlu0 %1537
      %1539 = vrot.lane.b32.xlu0 %v1522, 32
      %v1540 = vpop.permute.xlu0 %1539
      %1541 = vrot.lane.b32.xlu0 %v1526, 32
      %v1542 = vpop.permute.xlu0 %1541
      %1551 = vst.msk [vmem:[%s235 + $0x8] sm:$0x1] %vm774, %v1528
      %1552 = vst.msk [vmem:[%s235 + $0x18] sm:$0x1] %vm774, %v1530
      %1553 = vst.msk [vmem:[%s235 + $0x28] sm:$0x1] %vm774, %v1532
      %1554 = vst.msk [vmem:[%s235 + $0x38] sm:$0x1] %vm774, %v1534
      %1555 = vst.msk [vmem:[%s235 + $0x48] sm:$0x1] %vm774, %v1536
      %1556 = vst.msk [vmem:[%s235 + $0x58] sm:$0x1] %vm774, %v1538
      %1557 = vst.msk [vmem:[%s235 + $0x68] sm:$0x1] %vm774, %v1540
      %1558 = vst.msk [vmem:[%s235 + $0x78] sm:$0x1] %vm774, %v1542
      %v1559 = vlaneseq
      %v1560 = vshrl.u32 %v1559, 7
      %v1561 = vsub.s32 0, %v1560
      %v1562 = vrot.slane %v1403, %v1561
      %v1563 = vlaneseq
      %v1564 = vshrl.u32 %v1563, 7
      %v1565 = vsub.s32 0, %v1564
      %v1566 = vrot.slane %v1417, %v1565
      %v1567 = vlaneseq
      %v1568 = vshrl.u32 %v1567, 7
      %v1569 = vsub.s32 0, %v1568
      %v1570 = vrot.slane %v1425, %v1569
      %v1571 = vlaneseq
      %v1572 = vshrl.u32 %v1571, 7
      %v1573 = vsub.s32 0, %v1572
      %v1574 = vrot.slane %v1427, %v1573
      %v1575 = vlaneseq
      %v1576 = vshrl.u32 %v1575, 7
      %v1577 = vsub.s32 0, %v1576
      %v1578 = vrot.slane %v1410, %v1577
      %v1579 = vlaneseq
      %v1580 = vshrl.u32 %v1579, 7
      %v1581 = vsub.s32 0, %v1580
      %v1582 = vrot.slane %v1424, %v1581
      %v1583 = vlaneseq
      %v1584 = vshrl.u32 %v1583, 7
      %v1585 = vsub.s32 0, %v1584
      %v1586 = vrot.slane %v1426, %v1585
      %v1587 = vlaneseq
      %v1588 = vshrl.u32 %v1587, 7
      %v1589 = vsub.s32 0, %v1588
      %v1590 = vrot.slane %v1428, %v1589
      %1591 = vrot.lane.b32.xlu0 %v1562, 96
      %v1592 = vpop.permute.xlu0 %1591
      %1593 = vrot.lane.b32.xlu0 %v1566, 96
      %v1594 = vpop.permute.xlu0 %1593
      %1595 = vrot.lane.b32.xlu0 %v1570, 96
      %v1596 = vpop.permute.xlu0 %1595
      %1597 = vrot.lane.b32.xlu0 %v1574, 96
      %v1598 = vpop.permute.xlu0 %1597
      %1599 = vrot.lane.b32.xlu0 %v1578, 96
      %v1600 = vpop.permute.xlu0 %1599
      %1601 = vrot.lane.b32.xlu0 %v1582, 96
      %v1602 = vpop.permute.xlu0 %1601
      %1603 = vrot.lane.b32.xlu0 %v1586, 96
      %v1604 = vpop.permute.xlu0 %1603
      %1605 = vrot.lane.b32.xlu0 %v1590, 96
      %v1606 = vpop.permute.xlu0 %1605
      %1615 = vst.msk [vmem:[%s235 + $0x9] sm:$0x1] %vm659, %v1592
      %1616 = vst.msk [vmem:[%s235 + $0x19] sm:$0x1] %vm659, %v1594
      %1617 = vst.msk [vmem:[%s235 + $0x29] sm:$0x1] %vm659, %v1596
      %1618 = vst.msk [vmem:[%s235 + $0x39] sm:$0x1] %vm659, %v1598
      %1619 = vst.msk [vmem:[%s235 + $0x49] sm:$0x1] %vm659, %v1600
      %1620 = vst.msk [vmem:[%s235 + $0x59] sm:$0x1] %vm659, %v1602
      %1621 = vst.msk [vmem:[%s235 + $0x69] sm:$0x1] %vm659, %v1604
      %1622 = vst.msk [vmem:[%s235 + $0x79] sm:$0x1] %vm659, %v1606
      %1631 = vst.msk [vmem:[%s235 + $0x9] sm:$0x1] %vm774, %v1469
      %1632 = vst.msk [vmem:[%s235 + $0x19] sm:$0x1] %vm774, %v1483
      %1633 = vst.msk [vmem:[%s235 + $0x29] sm:$0x1] %vm774, %v1491
      %1634 = vst.msk [vmem:[%s235 + $0x39] sm:$0x1] %vm774, %v1493
      %1635 = vst.msk [vmem:[%s235 + $0x49] sm:$0x1] %vm774, %v1476
      %1636 = vst.msk [vmem:[%s235 + $0x59] sm:$0x1] %vm774, %v1490
      %1637 = vst.msk [vmem:[%s235 + $0x69] sm:$0x1] %vm774, %v1492
      %1638 = vst.msk [vmem:[%s235 + $0x79] sm:$0x1] %vm774, %v1494
      %1639 = vrot.lane.b32.xlu0 %v1562, 64
      %v1640 = vpop.permute.xlu0 %1639
      %1641 = vrot.lane.b32.xlu0 %v1566, 64
      %v1642 = vpop.permute.xlu0 %1641
      %1643 = vrot.lane.b32.xlu0 %v1570, 64
      %v1644 = vpop.permute.xlu0 %1643
      %1645 = vrot.lane.b32.xlu0 %v1574, 64
      %v1646 = vpop.permute.xlu0 %1645
      %1647 = vrot.lane.b32.xlu0 %v1578, 64
      %v1648 = vpop.permute.xlu0 %1647
      %1649 = vrot.lane.b32.xlu0 %v1582, 64
      %v1650 = vpop.permute.xlu0 %1649
      %1651 = vrot.lane.b32.xlu0 %v1586, 64
      %v1652 = vpop.permute.xlu0 %1651
      %1653 = vrot.lane.b32.xlu0 %v1590, 64
      %v1654 = vpop.permute.xlu0 %1653
      %1663 = vst.msk [vmem:[%s235 + $0xa] sm:$0x1] %vm659, %v1640
      %1664 = vst.msk [vmem:[%s235 + $0x1a] sm:$0x1] %vm659, %v1642
      %1665 = vst.msk [vmem:[%s235 + $0x2a] sm:$0x1] %vm659, %v1644
      %1666 = vst.msk [vmem:[%s235 + $0x3a] sm:$0x1] %vm659, %v1646
      %1667 = vst.msk [vmem:[%s235 + $0x4a] sm:$0x1] %vm659, %v1648
      %1668 = vst.msk [vmem:[%s235 + $0x5a] sm:$0x1] %vm659, %v1650
      %1669 = vst.msk [vmem:[%s235 + $0x6a] sm:$0x1] %vm659, %v1652
      %1670 = vst.msk [vmem:[%s235 + $0x7a] sm:$0x1] %vm659, %v1654
      %1671 = vrot.lane.b32.xlu0 %v1498, 96
      %v1672 = vpop.permute.xlu0 %1671
      %1673 = vrot.lane.b32.xlu0 %v1502, 96
      %v1674 = vpop.permute.xlu0 %1673
      %1675 = vrot.lane.b32.xlu0 %v1506, 96
      %v1676 = vpop.permute.xlu0 %1675
      %1677 = vrot.lane.b32.xlu0 %v1510, 96
      %v1678 = vpop.permute.xlu0 %1677
      %1679 = vrot.lane.b32.xlu0 %v1514, 96
      %v1680 = vpop.permute.xlu0 %1679
      %1681 = vrot.lane.b32.xlu0 %v1518, 96
      %v1682 = vpop.permute.xlu0 %1681
      %1683 = vrot.lane.b32.xlu0 %v1522, 96
      %v1684 = vpop.permute.xlu0 %1683
      %1685 = vrot.lane.b32.xlu0 %v1526, 96
      %v1686 = vpop.permute.xlu0 %1685
      %1695 = vst.msk [vmem:[%s235 + $0xa] sm:$0x1] %vm774, %v1672
      %1696 = vst.msk [vmem:[%s235 + $0x1a] sm:$0x1] %vm774, %v1674
      %1697 = vst.msk [vmem:[%s235 + $0x2a] sm:$0x1] %vm774, %v1676
      %1698 = vst.msk [vmem:[%s235 + $0x3a] sm:$0x1] %vm774, %v1678
      %1699 = vst.msk [vmem:[%s235 + $0x4a] sm:$0x1] %vm774, %v1680
      %1700 = vst.msk [vmem:[%s235 + $0x5a] sm:$0x1] %vm774, %v1682
      %1701 = vst.msk [vmem:[%s235 + $0x6a] sm:$0x1] %vm774, %v1684
      %1702 = vst.msk [vmem:[%s235 + $0x7a] sm:$0x1] %vm774, %v1686
      %1703 = vrot.lane.b32.xlu0 %v1562, 32
      %v1704 = vpop.permute.xlu0 %1703
      %1705 = vrot.lane.b32.xlu0 %v1566, 32
      %v1706 = vpop.permute.xlu0 %1705
      %1707 = vrot.lane.b32.xlu0 %v1570, 32
      %v1708 = vpop.permute.xlu0 %1707
      %1709 = vrot.lane.b32.xlu0 %v1574, 32
      %v1710 = vpop.permute.xlu0 %1709
      %1711 = vrot.lane.b32.xlu0 %v1578, 32
      %v1712 = vpop.permute.xlu0 %1711
      %1713 = vrot.lane.b32.xlu0 %v1582, 32
      %v1714 = vpop.permute.xlu0 %1713
      %1715 = vrot.lane.b32.xlu0 %v1586, 32
      %v1716 = vpop.permute.xlu0 %1715
      %1717 = vrot.lane.b32.xlu0 %v1590, 32
      %v1718 = vpop.permute.xlu0 %1717
      %1727 = vst.msk [vmem:[%s235 + $0xb] sm:$0x1] %vm659, %v1704
      %1728 = vst.msk [vmem:[%s235 + $0x1b] sm:$0x1] %vm659, %v1706
      %1729 = vst.msk [vmem:[%s235 + $0x2b] sm:$0x1] %vm659, %v1708
      %1730 = vst.msk [vmem:[%s235 + $0x3b] sm:$0x1] %vm659, %v1710
      %1731 = vst.msk [vmem:[%s235 + $0x4b] sm:$0x1] %vm659, %v1712
      %1732 = vst.msk [vmem:[%s235 + $0x5b] sm:$0x1] %vm659, %v1714
      %1733 = vst.msk [vmem:[%s235 + $0x6b] sm:$0x1] %vm659, %v1716
      %1734 = vst.msk [vmem:[%s235 + $0x7b] sm:$0x1] %vm659, %v1718
      %1735 = vrot.lane.b32.xlu0 %v1498, 64
      %v1736 = vpop.permute.xlu0 %1735
      %1737 = vrot.lane.b32.xlu0 %v1502, 64
      %v1738 = vpop.permute.xlu0 %1737
      %1739 = vrot.lane.b32.xlu0 %v1506, 64
      %v1740 = vpop.permute.xlu0 %1739
      %1741 = vrot.lane.b32.xlu0 %v1510, 64
      %v1742 = vpop.permute.xlu0 %1741
      %1743 = vrot.lane.b32.xlu0 %v1514, 64
      %v1744 = vpop.permute.xlu0 %1743
      %1745 = vrot.lane.b32.xlu0 %v1518, 64
      %v1746 = vpop.permute.xlu0 %1745
      %1747 = vrot.lane.b32.xlu0 %v1522, 64
      %v1748 = vpop.permute.xlu0 %1747
      %1749 = vrot.lane.b32.xlu0 %v1526, 64
      %v1750 = vpop.permute.xlu0 %1749
      %1759 = vst.msk [vmem:[%s235 + $0xb] sm:$0x1] %vm774, %v1736
      %1760 = vst.msk [vmem:[%s235 + $0x1b] sm:$0x1] %vm774, %v1738
      %1761 = vst.msk [vmem:[%s235 + $0x2b] sm:$0x1] %vm774, %v1740
      %1762 = vst.msk [vmem:[%s235 + $0x3b] sm:$0x1] %vm774, %v1742
      %1763 = vst.msk [vmem:[%s235 + $0x4b] sm:$0x1] %vm774, %v1744
      %1764 = vst.msk [vmem:[%s235 + $0x5b] sm:$0x1] %vm774, %v1746
      %1765 = vst.msk [vmem:[%s235 + $0x6b] sm:$0x1] %vm774, %v1748
      %1766 = vst.msk [vmem:[%s235 + $0x7b] sm:$0x1] %vm774, %v1750
      %v1768 = vcombine.high %v596, %v596
      %v1770 = vunpack.c.l.s4 1966171168
      %v1771 = vunpack.c.0.s8 %v1770
      %v1772 = vlaneseq
      %v1773 = vshrl.u32 %v1772, 7
      %v1774 = vsub.s32 %v1771, %v1773
      %v1775 = vrot.slane %v596, %v1774
      %v1777 = vunpack.c.l.s4 1966171168
      %v1778 = vunpack.c.0.s8 %v1777
      %v1779 = vlaneseq
      %v1780 = vshrl.u32 %v1779, 7
      %v1781 = vsub.s32 %v1778, %v1780
      %v1782 = vrot.slane %v1768, %v1781
      %v1783 = vcombine.high %v1775, %v1775
      %v1784 = vcombine.high %v1782, %v1782
      %v1786 = vunpack.c.l.s4 1966171168
      %v1787 = vunpack.c.0.s8 %v1786
      %v1788 = vlaneseq
      %v1789 = vshrl.u32 %v1788, 7
      %v1790 = vsub.s32 %v1787, %v1789
      %v1791 = vrot.slane %v1775, %v1790
      %v1793 = vunpack.c.l.s4 1966171168
      %v1794 = vunpack.c.0.s8 %v1793
      %v1795 = vlaneseq
      %v1796 = vshrl.u32 %v1795, 7
      %v1797 = vsub.s32 %v1794, %v1796
      %v1798 = vrot.slane %v1782, %v1797
      %v1800 = vunpack.c.l.s4 1966171168
      %v1801 = vunpack.c.0.s8 %v1800
      %v1802 = vlaneseq
      %v1803 = vshrl.u32 %v1802, 7
      %v1804 = vsub.s32 %v1801, %v1803
      %v1805 = vrot.slane %v1783, %v1804
      %v1807 = vunpack.c.l.s4 1966171168
      %v1808 = vunpack.c.0.s8 %v1807
      %v1809 = vlaneseq
      %v1810 = vshrl.u32 %v1809, 7
      %v1811 = vsub.s32 %v1808, %v1810
      %v1812 = vrot.slane %v1784, %v1811
      %v1813 = vcombine.high %v1791, %v1791
      %v1814 = vcombine.high %v1798, %v1798
      %v1815 = vcombine.high %v1805, %v1805
      %v1816 = vcombine.high %v1812, %v1812
      %1825 = vst.msk [vmem:[%s235 + $0xc] sm:$0x1] %vm659, %v1791
      %1826 = vst.msk [vmem:[%s235 + $0x1c] sm:$0x1] %vm659, %v1805
      %1827 = vst.msk [vmem:[%s235 + $0x2c] sm:$0x1] %vm659, %v1813
      %1828 = vst.msk [vmem:[%s235 + $0x3c] sm:$0x1] %vm659, %v1815
      %1829 = vst.msk [vmem:[%s235 + $0x4c] sm:$0x1] %vm659, %v1798
      %1830 = vst.msk [vmem:[%s235 + $0x5c] sm:$0x1] %vm659, %v1812
      %1831 = vst.msk [vmem:[%s235 + $0x6c] sm:$0x1] %vm659, %v1814
      %1832 = vst.msk [vmem:[%s235 + $0x7c] sm:$0x1] %vm659, %v1816
      %v1834 = vcombine.high %v600, %v600
      %v1836 = vunpack.c.l.s4 1966171168
      %v1837 = vunpack.c.0.s8 %v1836
      %v1838 = vlaneseq
      %v1839 = vshrl.u32 %v1838, 7
      %v1840 = vsub.s32 %v1837, %v1839
      %v1841 = vrot.slane %v600, %v1840
      %v1843 = vunpack.c.l.s4 1966171168
      %v1844 = vunpack.c.0.s8 %v1843
      %v1845 = vlaneseq
      %v1846 = vshrl.u32 %v1845, 7
      %v1847 = vsub.s32 %v1844, %v1846
      %v1848 = vrot.slane %v1834, %v1847
      %v1849 = vcombine.high %v1841, %v1841
      %v1850 = vcombine.high %v1848, %v1848
      %v1852 = vunpack.c.l.s4 1966171168
      %v1853 = vunpack.c.0.s8 %v1852
      %v1854 = vlaneseq
      %v1855 = vshrl.u32 %v1854, 7
      %v1856 = vsub.s32 %v1853, %v1855
      %v1857 = vrot.slane %v1841, %v1856
      %v1859 = vunpack.c.l.s4 1966171168
      %v1860 = vunpack.c.0.s8 %v1859
      %v1861 = vlaneseq
      %v1862 = vshrl.u32 %v1861, 7
      %v1863 = vsub.s32 %v1860, %v1862
      %v1864 = vrot.slane %v1848, %v1863
      %v1866 = vunpack.c.l.s4 1966171168
      %v1867 = vunpack.c.0.s8 %v1866
      %v1868 = vlaneseq
      %v1869 = vshrl.u32 %v1868, 7
      %v1870 = vsub.s32 %v1867, %v1869
      %v1871 = vrot.slane %v1849, %v1870
      %v1873 = vunpack.c.l.s4 1966171168
      %v1874 = vunpack.c.0.s8 %v1873
      %v1875 = vlaneseq
      %v1876 = vshrl.u32 %v1875, 7
      %v1877 = vsub.s32 %v1874, %v1876
      %v1878 = vrot.slane %v1850, %v1877
      %v1879 = vcombine.high %v1857, %v1857
      %v1880 = vcombine.high %v1864, %v1864
      %v1881 = vcombine.high %v1871, %v1871
      %v1882 = vcombine.high %v1878, %v1878
      %v1883 = vlaneseq
      %v1884 = vshrl.u32 %v1883, 7
      %v1885 = vsub.s32 0, %v1884
      %v1886 = vrot.slane %v1857, %v1885
      %v1887 = vlaneseq
      %v1888 = vshrl.u32 %v1887, 7
      %v1889 = vsub.s32 0, %v1888
      %v1890 = vrot.slane %v1871, %v1889
      %v1891 = vlaneseq
      %v1892 = vshrl.u32 %v1891, 7
      %v1893 = vsub.s32 0, %v1892
      %v1894 = vrot.slane %v1879, %v1893
      %v1895 = vlaneseq
      %v1896 = vshrl.u32 %v1895, 7
      %v1897 = vsub.s32 0, %v1896
      %v1898 = vrot.slane %v1881, %v1897
      %v1899 = vlaneseq
      %v1900 = vshrl.u32 %v1899, 7
      %v1901 = vsub.s32 0, %v1900
      %v1902 = vrot.slane %v1864, %v1901
      %v1903 = vlaneseq
      %v1904 = vshrl.u32 %v1903, 7
      %v1905 = vsub.s32 0, %v1904
      %v1906 = vrot.slane %v1878, %v1905
      %v1907 = vlaneseq
      %v1908 = vshrl.u32 %v1907, 7
      %v1909 = vsub.s32 0, %v1908
      %v1910 = vrot.slane %v1880, %v1909
      %v1911 = vlaneseq
      %v1912 = vshrl.u32 %v1911, 7
      %v1913 = vsub.s32 0, %v1912
      %v1914 = vrot.slane %v1882, %v1913
      %1915 = vrot.lane.b32.xlu0 %v1886, 32
      %v1916 = vpop.permute.xlu0 %1915
      %1917 = vrot.lane.b32.xlu0 %v1890, 32
      %v1918 = vpop.permute.xlu0 %1917
      %1919 = vrot.lane.b32.xlu0 %v1894, 32
      %v1920 = vpop.permute.xlu0 %1919
      %1921 = vrot.lane.b32.xlu0 %v1898, 32
      %v1922 = vpop.permute.xlu0 %1921
      %1923 = vrot.lane.b32.xlu0 %v1902, 32
      %v1924 = vpop.permute.xlu0 %1923
      %1925 = vrot.lane.b32.xlu0 %v1906, 32
      %v1926 = vpop.permute.xlu0 %1925
      %1927 = vrot.lane.b32.xlu0 %v1910, 32
      %v1928 = vpop.permute.xlu0 %1927
      %1929 = vrot.lane.b32.xlu0 %v1914, 32
      %v1930 = vpop.permute.xlu0 %1929
      %1939 = vst.msk [vmem:[%s235 + $0xc] sm:$0x1] %vm774, %v1916
      %1940 = vst.msk [vmem:[%s235 + $0x1c] sm:$0x1] %vm774, %v1918
      %1941 = vst.msk [vmem:[%s235 + $0x2c] sm:$0x1] %vm774, %v1920
      %1942 = vst.msk [vmem:[%s235 + $0x3c] sm:$0x1] %vm774, %v1922
      %1943 = vst.msk [vmem:[%s235 + $0x4c] sm:$0x1] %vm774, %v1924
      %1944 = vst.msk [vmem:[%s235 + $0x5c] sm:$0x1] %vm774, %v1926
      %1945 = vst.msk [vmem:[%s235 + $0x6c] sm:$0x1] %vm774, %v1928
      %1946 = vst.msk [vmem:[%s235 + $0x7c] sm:$0x1] %vm774, %v1930
      %v1947 = vlaneseq
      %v1948 = vshrl.u32 %v1947, 7
      %v1949 = vsub.s32 0, %v1948
      %v1950 = vrot.slane %v1791, %v1949
      %v1951 = vlaneseq
      %v1952 = vshrl.u32 %v1951, 7
      %v1953 = vsub.s32 0, %v1952
      %v1954 = vrot.slane %v1805, %v1953
      %v1955 = vlaneseq
      %v1956 = vshrl.u32 %v1955, 7
      %v1957 = vsub.s32 0, %v1956
      %v1958 = vrot.slane %v1813, %v1957
      %v1959 = vlaneseq
      %v1960 = vshrl.u32 %v1959, 7
      %v1961 = vsub.s32 0, %v1960
      %v1962 = vrot.slane %v1815, %v1961
      %v1963 = vlaneseq
      %v1964 = vshrl.u32 %v1963, 7
      %v1965 = vsub.s32 0, %v1964
      %v1966 = vrot.slane %v1798, %v1965
      %v1967 = vlaneseq
      %v1968 = vshrl.u32 %v1967, 7
      %v1969 = vsub.s32 0, %v1968
      %v1970 = vrot.slane %v1812, %v1969
      %v1971 = vlaneseq
      %v1972 = vshrl.u32 %v1971, 7
      %v1973 = vsub.s32 0, %v1972
      %v1974 = vrot.slane %v1814, %v1973
      %v1975 = vlaneseq
      %v1976 = vshrl.u32 %v1975, 7
      %v1977 = vsub.s32 0, %v1976
      %v1978 = vrot.slane %v1816, %v1977
      %1979 = vrot.lane.b32.xlu0 %v1950, 96
      %v1980 = vpop.permute.xlu0 %1979
      %1981 = vrot.lane.b32.xlu0 %v1954, 96
      %v1982 = vpop.permute.xlu0 %1981
      %1983 = vrot.lane.b32.xlu0 %v1958, 96
      %v1984 = vpop.permute.xlu0 %1983
      %1985 = vrot.lane.b32.xlu0 %v1962, 96
      %v1986 = vpop.permute.xlu0 %1985
      %1987 = vrot.lane.b32.xlu0 %v1966, 96
      %v1988 = vpop.permute.xlu0 %1987
      %1989 = vrot.lane.b32.xlu0 %v1970, 96
      %v1990 = vpop.permute.xlu0 %1989
      %1991 = vrot.lane.b32.xlu0 %v1974, 96
      %v1992 = vpop.permute.xlu0 %1991
      %1993 = vrot.lane.b32.xlu0 %v1978, 96
      %v1994 = vpop.permute.xlu0 %1993
      %2003 = vst.msk [vmem:[%s235 + $0xd] sm:$0x1] %vm659, %v1980
      %2004 = vst.msk [vmem:[%s235 + $0x1d] sm:$0x1] %vm659, %v1982
      %2005 = vst.msk [vmem:[%s235 + $0x2d] sm:$0x1] %vm659, %v1984
      %2006 = vst.msk [vmem:[%s235 + $0x3d] sm:$0x1] %vm659, %v1986
      %2007 = vst.msk [vmem:[%s235 + $0x4d] sm:$0x1] %vm659, %v1988
      %2008 = vst.msk [vmem:[%s235 + $0x5d] sm:$0x1] %vm659, %v1990
      %2009 = vst.msk [vmem:[%s235 + $0x6d] sm:$0x1] %vm659, %v1992
      %2010 = vst.msk [vmem:[%s235 + $0x7d] sm:$0x1] %vm659, %v1994
      %2019 = vst.msk [vmem:[%s235 + $0xd] sm:$0x1] %vm774, %v1857
      %2020 = vst.msk [vmem:[%s235 + $0x1d] sm:$0x1] %vm774, %v1871
      %2021 = vst.msk [vmem:[%s235 + $0x2d] sm:$0x1] %vm774, %v1879
      %2022 = vst.msk [vmem:[%s235 + $0x3d] sm:$0x1] %vm774, %v1881
      %2023 = vst.msk [vmem:[%s235 + $0x4d] sm:$0x1] %vm774, %v1864
      %2024 = vst.msk [vmem:[%s235 + $0x5d] sm:$0x1] %vm774, %v1878
      %2025 = vst.msk [vmem:[%s235 + $0x6d] sm:$0x1] %vm774, %v1880
      %2026 = vst.msk [vmem:[%s235 + $0x7d] sm:$0x1] %vm774, %v1882
      %2027 = vrot.lane.b32.xlu0 %v1950, 64
      %v2028 = vpop.permute.xlu0 %2027
      %2029 = vrot.lane.b32.xlu0 %v1954, 64
      %v2030 = vpop.permute.xlu0 %2029
      %2031 = vrot.lane.b32.xlu0 %v1958, 64
      %v2032 = vpop.permute.xlu0 %2031
      %2033 = vrot.lane.b32.xlu0 %v1962, 64
      %v2034 = vpop.permute.xlu0 %2033
      %2035 = vrot.lane.b32.xlu0 %v1966, 64
      %v2036 = vpop.permute.xlu0 %2035
      %2037 = vrot.lane.b32.xlu0 %v1970, 64
      %v2038 = vpop.permute.xlu0 %2037
      %2039 = vrot.lane.b32.xlu0 %v1974, 64
      %v2040 = vpop.permute.xlu0 %2039
      %2041 = vrot.lane.b32.xlu0 %v1978, 64
      %v2042 = vpop.permute.xlu0 %2041
      %2051 = vst.msk [vmem:[%s235 + $0xe] sm:$0x1] %vm659, %v2028
      %2052 = vst.msk [vmem:[%s235 + $0x1e] sm:$0x1] %vm659, %v2030
      %2053 = vst.msk [vmem:[%s235 + $0x2e] sm:$0x1] %vm659, %v2032
      %2054 = vst.msk [vmem:[%s235 + $0x3e] sm:$0x1] %vm659, %v2034
      %2055 = vst.msk [vmem:[%s235 + $0x4e] sm:$0x1] %vm659, %v2036
      %2056 = vst.msk [vmem:[%s235 + $0x5e] sm:$0x1] %vm659, %v2038
      %2057 = vst.msk [vmem:[%s235 + $0x6e] sm:$0x1] %vm659, %v2040
      %2058 = vst.msk [vmem:[%s235 + $0x7e] sm:$0x1] %vm659, %v2042
      %2059 = vrot.lane.b32.xlu0 %v1886, 96
      %v2060 = vpop.permute.xlu0 %2059
      %2061 = vrot.lane.b32.xlu0 %v1890, 96
      %v2062 = vpop.permute.xlu0 %2061
      %2063 = vrot.lane.b32.xlu0 %v1894, 96
      %v2064 = vpop.permute.xlu0 %2063
      %2065 = vrot.lane.b32.xlu0 %v1898, 96
      %v2066 = vpop.permute.xlu0 %2065
      %2067 = vrot.lane.b32.xlu0 %v1902, 96
      %v2068 = vpop.permute.xlu0 %2067
      %2069 = vrot.lane.b32.xlu0 %v1906, 96
      %v2070 = vpop.permute.xlu0 %2069
      %2071 = vrot.lane.b32.xlu0 %v1910, 96
      %v2072 = vpop.permute.xlu0 %2071
      %2073 = vrot.lane.b32.xlu0 %v1914, 96
      %v2074 = vpop.permute.xlu0 %2073
      %2083 = vst.msk [vmem:[%s235 + $0xe] sm:$0x1] %vm774, %v2060
      %2084 = vst.msk [vmem:[%s235 + $0x1e] sm:$0x1] %vm774, %v2062
      %2085 = vst.msk [vmem:[%s235 + $0x2e] sm:$0x1] %vm774, %v2064
      %2086 = vst.msk [vmem:[%s235 + $0x3e] sm:$0x1] %vm774, %v2066
      %2087 = vst.msk [vmem:[%s235 + $0x4e] sm:$0x1] %vm774, %v2068
      %2088 = vst.msk [vmem:[%s235 + $0x5e] sm:$0x1] %vm774, %v2070
      %2089 = vst.msk [vmem:[%s235 + $0x6e] sm:$0x1] %vm774, %v2072
      %2090 = vst.msk [vmem:[%s235 + $0x7e] sm:$0x1] %vm774, %v2074
      %2091 = vrot.lane.b32.xlu0 %v1950, 32
      %v2092 = vpop.permute.xlu0 %2091
      %2093 = vrot.lane.b32.xlu0 %v1954, 32
      %v2094 = vpop.permute.xlu0 %2093
      %2095 = vrot.lane.b32.xlu0 %v1958, 32
      %v2096 = vpop.permute.xlu0 %2095
      %2097 = vrot.lane.b32.xlu0 %v1962, 32
      %v2098 = vpop.permute.xlu0 %2097
      %2099 = vrot.lane.b32.xlu0 %v1966, 32
      %v2100 = vpop.permute.xlu0 %2099
      %2101 = vrot.lane.b32.xlu0 %v1970, 32
      %v2102 = vpop.permute.xlu0 %2101
      %2103 = vrot.lane.b32.xlu0 %v1974, 32
      %v2104 = vpop.permute.xlu0 %2103
      %2105 = vrot.lane.b32.xlu0 %v1978, 32
      %v2106 = vpop.permute.xlu0 %2105
      %2115 = vst.msk [vmem:[%s235 + $0xf] sm:$0x1] %vm659, %v2092
      %2116 = vst.msk [vmem:[%s235 + $0x1f] sm:$0x1] %vm659, %v2094
      %2117 = vst.msk [vmem:[%s235 + $0x2f] sm:$0x1] %vm659, %v2096
      %2118 = vst.msk [vmem:[%s235 + $0x3f] sm:$0x1] %vm659, %v2098
      %2119 = vst.msk [vmem:[%s235 + $0x4f] sm:$0x1] %vm659, %v2100
      %2120 = vst.msk [vmem:[%s235 + $0x5f] sm:$0x1] %vm659, %v2102
      %2121 = vst.msk [vmem:[%s235 + $0x6f] sm:$0x1] %vm659, %v2104
      %2122 = vst.msk [vmem:[%s235 + $0x7f] sm:$0x1] %vm659, %v2106
      %2123 = vrot.lane.b32.xlu0 %v1886, 64
      %v2124 = vpop.permute.xlu0 %2123
      %2125 = vrot.lane.b32.xlu0 %v1890, 64
      %v2126 = vpop.permute.xlu0 %2125
      %2127 = vrot.lane.b32.xlu0 %v1894, 64
      %v2128 = vpop.permute.xlu0 %2127
      %2129 = vrot.lane.b32.xlu0 %v1898, 64
      %v2130 = vpop.permute.xlu0 %2129
      %2131 = vrot.lane.b32.xlu0 %v1902, 64
      %v2132 = vpop.permute.xlu0 %2131
      %2133 = vrot.lane.b32.xlu0 %v1906, 64
      %v2134 = vpop.permute.xlu0 %2133
      %2135 = vrot.lane.b32.xlu0 %v1910, 64
      %v2136 = vpop.permute.xlu0 %2135
      %2137 = vrot.lane.b32.xlu0 %v1914, 64
      %v2138 = vpop.permute.xlu0 %2137
      %2147 = vst.msk [vmem:[%s235 + $0xf] sm:$0x1] %vm774, %v2124
      %2148 = vst.msk [vmem:[%s235 + $0x1f] sm:$0x1] %vm774, %v2126
      %2149 = vst.msk [vmem:[%s235 + $0x2f] sm:$0x1] %vm774, %v2128
      %2150 = vst.msk [vmem:[%s235 + $0x3f] sm:$0x1] %vm774, %v2130
      %2151 = vst.msk [vmem:[%s235 + $0x4f] sm:$0x1] %vm774, %v2132
      %2152 = vst.msk [vmem:[%s235 + $0x5f] sm:$0x1] %vm774, %v2134
      %2153 = vst.msk [vmem:[%s235 + $0x6f] sm:$0x1] %vm774, %v2136
      %2154 = vst.msk [vmem:[%s235 + $0x7f] sm:$0x1] %vm774, %v2138
      %s2155 = smul.u32 2, %s20
      %p2156 = scmp.lt.s32.totalorder %s19, 1
      %s2157 = scalar_select %p2156, %s19, 1
      %p2158 = scmp.lt.s32.totalorder %s2155, 1
      %s2159 = scalar_select %p2158, %s2155, 1
      %s2160 = smul.addr %s2157, 16
      %s2161 = sadd.s32 %s2159, %s2160
      %s2162 = smul.addr %s2161, 8
      %s2163 = scalar_lea.vmem %s4, %s2162
      // Predicated region
      $region37: #{up_forward.3} parent=35 // pred_check
        %p2164 = pneg %p138
      $region38: #{up_forward.3} parent=35 // pred_check_branch
        %2166 = sbr.rel (%p2164) target = $region40
      $region39: #{up_forward.3} parent=35 // pred_region
        %s2167 = smul.u32 2, %s20
      $region40: #{up_forward.3} parent=35 // pred_fallthru
        _
    $region36: #{up_forward.3} parent=5 // pred_fallthru
      _
    %p2168 = scmp.le.s32.totalorder 2, %s10
    // Predicated region
    $region41: #{up_forward.3} parent=5 // pred_check
      %p2169 = pneg %p2168
    $region42: #{up_forward.3} parent=5 // pred_check_branch
      %2171 = sbr.rel (%p2169) target = $region44
    $region43: #{up_forward.3} parent=5 // pred_region
      %s2172 = ssub.s32 %s10, 2
      // Predicated region
      $region45: #{up_forward.3} parent=43 // pred_check
        %p2173 = pneg %p144
      $region46: #{up_forward.3} parent=43 // pred_check_branch
        %2175 = sbr.rel (%p2173) target = $region48
      $region47: #{up_forward.3} parent=43 // pred_region
        %s2176 = smul.u32 2, %s22
        %p2177 = scmp.lt.s32.totalorder %s21, 1
        %s2178 = scalar_select %p2177, %s21, 1
        %p2179 = scmp.lt.s32.totalorder %s2176, 1
        %s2180 = scalar_select %p2179, %s2176, 1
        %s2181 = smul.addr %s2178, 16
        %s2182 = sadd.s32 %s2180, %s2181
        %s2183 = smul.addr %s2182, 8
        %s2184 = scalar_lea.vmem %s4, %s2183
      $region48: #{up_forward.3} parent=43 // pred_fallthru
        _
    $region44: #{up_forward.3} parent=5 // pred_fallthru
      _
  $region6: #{up_forward.3} parent=0 // loop_footer
    %s14 = sadd.s32 1, %s10
  $region7: #{up_forward.3} parent=0 // loop_footer_branch
    %9 = sbr.rel target = $region3
  $region8: #{up_forward.3} parent=0 // loop_exit
    _

</llo_original>
